<compile_context>
chip_gen: v5e
topology: v5e:2x2
jax: 0.10.0
libtpu: 0.0.40
codegen_flags: <defaults>
</compile_context>

<pallas_src>
import functools

import jax
import jax.numpy as jnp
from jax.experimental import pallas as pl
from jax.experimental.pallas import tpu as pltpu

LANE = 128


def _round_up(v, m):
    return (v + m - 1) // m * m


def get_same_padding(kernel_size, dilation):
    keff = kernel_size + (kernel_size - 1) * (dilation - 1)
    return (keff - 1) // 2


# ---------------------------------------------------------------------------
# Pallas kernel: fused implicit-im2col conv + bias (+ ReLU) for one image and
# one 128-wide tile of output channels.
# ---------------------------------------------------------------------------
def _fused_conv_kernel(x_ref, w_ref, b_ref, o_ref, *,
                       ksize, stride, dilation, out_h, out_w, apply_relu):
    # x_ref : stride==1 -> (Hp, Wp, Cin_p)             float32
    #         stride==2 -> (Hp//2, 2, Wp//2, 2*Cin_p)  float32 (phase-packed)
    # w_ref : (k, k, Cin_p, TCO)                       bfloat16
    # b_ref : (1, TCO)                                 float32
    # o_ref : (out_h*out_w, TCO)                       float32
    cin = w_ref.shape[2]
    tco = o_ref.shape[-1]
    m = out_h * out_w
    acc = jnp.zeros((m, tco), jnp.float32)
    for kh in range(ksize):
        for kw in range(ksize):
            if stride == 1:
                h0 = kh * dilation
                w0 = kw * dilation
                tap = x_ref[pl.ds(h0, out_h), pl.ds(w0, out_w), :]
            else:  # stride == 2 (dilation == 1), phase-packed layout
                tap = x_ref[pl.ds(kh // 2, out_h),
                            pl.ds(kh % 2, 1),
                            pl.ds(kw // 2, out_w),
                            pl.ds((kw % 2) * cin, cin)]
            tap = tap.astype(jnp.bfloat16).reshape(m, cin)
            acc = acc + jnp.dot(tap, w_ref[kh, kw],
                                preferred_element_type=jnp.float32)
    acc = acc + b_ref[...]
    if apply_relu:
        acc = jnp.maximum(acc, 0.0)
    o_ref[...] = acc.astype(o_ref.dtype)


# ---------------------------------------------------------------------------
# Wrapper: one pallas_call per conv layer (no im2col materialization).
# ---------------------------------------------------------------------------
def conv2d_pallas(x, w, b, *, stride=1, pad=0, dilation=1, relu=False,
                  tile_cout=LANE):
    """x: (N, H, W, Cin_p) f32 with Cin_p % 128 == 0 (lane-padded channels).
       w: (k, k, Cin_p, Cout_p) bf16 with Cout_p % 128 == 0.
       b: (1, Cout_p) f32.
       Returns (N, Ho, Wo, Cout_p) f32."""
    N, H, W, cin_p = x.shape
    k = w.shape[0]
    cout_p = w.shape[3]
    assert w.shape[1] == k and w.shape[2] == cin_p
    assert cin_p % LANE == 0 and cout_p % LANE == 0
    keff = dilation * (k - 1) + 1
    Ho = (H + 2 * pad - keff) // stride + 1
    Wo = (W + 2 * pad - keff) // stride + 1

    if stride == 1:
        Hp = H + 2 * pad
        Wp = W + 2 * pad
        xin = jnp.pad(x, ((0, 0), (pad, pad), (pad, pad), (0, 0)))
        in_block = (None, Hp, Wp, cin_p)
    elif stride == 2:
        assert dilation == 1, "strided conv with dilation is not used here"
        Hn = _round_up((Ho - 1) * stride + keff, stride)
        Wn = _round_up((Wo - 1) * stride + keff, stride)
        pb, pr = Hn - H - pad, Wn - W - pad
        assert pb >= 0 and pr >= 0
        xin = jnp.pad(x, ((0, 0), (pad, pb), (pad, pr), (0, 0)))
        # Row-major-compatible (free) phase-packing reshape: the kernel then
        # only needs unit-stride slices for the stride-2 taps.
        xin = xin.reshape(N, Hn // 2, 2, Wn // 2, 2 * cin_p)
        in_block = (None, Hn // 2, 2, Wn // 2, 2 * cin_p)
    else:
        raise NotImplementedError("stride must be 1 or 2")

    tco = min(tile_cout, cout_p)
    assert cout_p % tco == 0 and tco % LANE == 0
    n_co = cout_p // tco
    grid = (N, n_co)

    n_xdims = len(in_block)
    x_map = lambda n, j: (n,) + (0,) * (n_xdims - 1)

    kern = functools.partial(
        _fused_conv_kernel, ksize=k, stride=stride, dilation=dilation,
        out_h=Ho, out_w=Wo, apply_relu=relu)

    flops = 2 * N * Ho * Wo * k * k * cin_p * cout_p
    bytes_accessed = (xin.size * 4 * n_co + w.size * 2 * N + b.size * 4 * N
                      + N * Ho * Wo * cout_p * 4)

    # TODO(synk): for very large spatial extents, add an H-tile grid axis with
    # halo rows via manual make_async_copy double-buffering (current design
    # keeps one image's padded block resident per grid step).
    out = pl.pallas_call(
        kern,
        out_shape=jax.ShapeDtypeStruct((N, Ho * Wo, cout_p), jnp.float32),
        grid=grid,
        in_specs=[
            pl.BlockSpec(in_block, x_map),
            pl.BlockSpec((k, k, cin_p, tco), lambda n, j: (0, 0, 0, j)),
            pl.BlockSpec((1, tco), lambda n, j: (0, j)),
        ],
        out_specs=pl.BlockSpec((None, Ho * Wo, tco), lambda n, j: (n, 0, j)),
        compiler_params=pltpu.CompilerParams(
            dimension_semantics=("parallel", "parallel"),
            vmem_limit_bytes=48 * 1024 * 1024),
        cost_estimate=pl.CostEstimate(
            flops=flops, transcendentals=0, bytes_accessed=bytes_accessed),
    )(xin, w, b)
    return out.reshape(N, Ho, Wo, cout_p)


# ---------------------------------------------------------------------------
# Parameter prep: PyTorch OIHW -> lane-padded (KH, KW, Cin_p, Cout_p) bf16.
# ---------------------------------------------------------------------------
def _prep_conv_params(w_oihw, b, cin_p):
    cout, cin, kh, kw = w_oihw.shape
    cout_p = _round_up(cout, LANE)
    wt = jnp.transpose(w_oihw, (2, 3, 1, 0))                 # (KH, KW, Cin, Cout)
    wt = jnp.pad(wt, ((0, 0), (0, 0), (0, cin_p - cin), (0, cout_p - cout)))
    bt = jnp.pad(b, (0, cout_p - cout)).reshape(1, cout_p)
    return wt.astype(jnp.bfloat16), bt.astype(jnp.float32), cout_p


# ---------------------------------------------------------------------------
# UnetDownBlock forward.
# ---------------------------------------------------------------------------
def unet_down_block_forward(x_nchw, params, *, kernel_size=3, dilation=1):
    pad_bn = get_same_padding(kernel_size, dilation)
    cin = x_nchw.shape[1]
    cout = params["w1"].shape[0]
    cin_p = _round_up(cin, LANE)

    x = jnp.transpose(x_nchw, (0, 2, 3, 1)).astype(jnp.float32)   # NCHW -> NHWC
    x = jnp.pad(x, ((0, 0), (0, 0), (0, 0), (0, cin_p - cin)))    # lane-pad C

    wd, bd, cin_pp = _prep_conv_params(params["w_down"], params["b_down"], cin_p)
    w1, b1, cout_p = _prep_conv_params(params["w1"], params["b1"], cin_pp)
    w2, b2, _ = _prep_conv_params(params["w2"], params["b2"], cout_p)

    # down: 3x3 / stride 2 / pad 1, no activation
    x = conv2d_pallas(x, wd, bd, stride=2, pad=1, dilation=1, relu=False)
    # TODO(synk): optionally fuse conv1+conv2 into a single pallas_call (keep
    # conv1's output in VMEM scratch with a 1-pixel halo) to save one HBM
    # round trip of the intermediate activation.
    x = conv2d_pallas(x, w1, b1, stride=1, pad=pad_bn, dilation=dilation, relu=True)
    x = conv2d_pallas(x, w2, b2, stride=1, pad=pad_bn, dilation=dilation, relu=True)

    x = x[..., :cout]                                              # drop padded C
    return jnp.transpose(x, (0, 3, 1, 2))                          # NHWC -> NCHW


# ---------------------------------------------------------------------------
# Pure-JAX reference (same bf16-operand / f32-accumulate numerics).
# ---------------------------------------------------------------------------
def _ref_conv(x_nhwc, w_oihw, b, stride, pad, dil, relu):
    w = jnp.transpose(w_oihw, (2, 3, 1, 0)).astype(jnp.bfloat16)
    y = jax.lax.conv_general_dilated(
        x_nhwc.astype(jnp.bfloat16), w, (stride, stride),
        [(pad, pad), (pad, pad)], rhs_dilation=(dil, dil),
        dimension_numbers=("NHWC", "HWIO", "NHWC"),
        preferred_element_type=jnp.float32)
    y = y + b.astype(jnp.float32)
    return jnp.maximum(y, 0.0) if relu else y


def _ref_forward(x_nchw, params, kernel_size=3, dilation=1):
    pad_bn = get_same_padding(kernel_size, dilation)
    x = jnp.transpose(x_nchw, (0, 2, 3, 1)).astype(jnp.float32)
    x = _ref_conv(x, params["w_down"], params["b_down"], 2, 1, 1, False)
    x = _ref_conv(x, params["w1"], params["b1"], 1, pad_bn, dilation, True)
    x = _ref_conv(x, params["w2"], params["b2"], 1, pad_bn, dilation, True)
    return jnp.transpose(x, (0, 3, 1, 2))


if __name__ == "__main__":
    N, Cin, H, W = 2, 4, 16, 16
    Cout = 8
    ksize, dil = 3, 1

    key = jax.random.PRNGKey(0)
    ks = jax.random.split(key, 7)
    params = {
        # PyTorch conv weight layout: (out_ch, in_ch, KH, KW)
        "w_down": jax.random.normal(ks[0], (Cin, Cin, 3, 3), jnp.float32) * 0.1,
        "b_down": jax.random.normal(ks[1], (Cin,), jnp.float32) * 0.1,
        "w1": jax.random.normal(ks[2], (Cout, Cin, ksize, ksize), jnp.float32) * 0.1,
        "b1": jax.random.normal(ks[3], (Cout,), jnp.float32) * 0.1,
        "w2": jax.random.normal(ks[4], (Cout, Cout, ksize, ksize), jnp.float32) * 0.1,
        "b2": jax.random.normal(ks[5], (Cout,), jnp.float32) * 0.1,
    }
    x = jax.random.normal(ks[6], (N, Cin, H, W), jnp.float32)

    fwd = jax.jit(functools.partial(unet_down_block_forward,
                                    kernel_size=ksize, dilation=dil))
    out = jax.block_until_ready(fwd(x, params))
    ref = jax.block_until_ready(_ref_forward(x, params, ksize, dil))

    assert out.shape == (N, Cout, H // 2, W // 2), out.shape
    max_err = float(jnp.max(jnp.abs(out - ref)))
    assert max_err < 2e-3, max_err

    print("KERNEL_OK")
</pallas_src>

<mosaic_0001>
module attributes {stable_mosaic.version = 11 : i64} {
  func.func @_fused_conv_kernel(%arg0: i32, %arg1: i32, %arg2: memref<1x10x10x128xf32, #tpu.memory_space<vmem>>, %arg3: memref<3x3x128x128xbf16, #tpu.memory_space<vmem>>, %arg4: memref<1x128xf32, #tpu.memory_space<vmem>>, %arg5: memref<1x64x128xf32, #tpu.memory_space<vmem>>) attributes {dimension_semantics = [#tpu.dimension_semantics<parallel>, #tpu.dimension_semantics<parallel>], iteration_bounds = array<i64: 2, 1>, scalar_prefetch = 0 : i64, scratch_operands = 0 : i64, tpu.core_type = #tpu.core_type<tc>, window_params = [{transform_indices = @transform_0, window_bounds = array<i64: 1, 10, 10, 128>}, {transform_indices = @transform_1, window_bounds = array<i64: 3, 3, 128, 128>}, {transform_indices = @transform_2, window_bounds = array<i64: 1, 128>}, {transform_indices = @transform_3, window_bounds = array<i64: 1, 64, 128>}]} {
    %cst = arith.constant 0.000000e+00 : f32
    %0 = vector.broadcast %cst : f32 to vector<64x128xf32>
    %c0 = arith.constant 0 : index
    %c0_0 = arith.constant 0 : index
    %c0_1 = arith.constant 0 : index
    %c0_2 = arith.constant 0 : index
    %1 = vector.load %arg2[%c0, %c0_0, %c0_1, %c0_2] : memref<1x10x10x128xf32, #tpu.memory_space<vmem>>, vector<1x8x8x128xf32>
    %2 = vector.shape_cast %1 : vector<1x8x8x128xf32> to vector<8x8x128xf32>
    %3 = arith.truncf %2 : vector<8x8x128xf32> to vector<8x8x128xbf16>
    %4 = vector.shape_cast %3 : vector<8x8x128xbf16> to vector<64x128xbf16>
    %c0_3 = arith.constant 0 : index
    %c0_4 = arith.constant 0 : index
    %c0_5 = arith.constant 0 : index
    %c0_6 = arith.constant 0 : index
    %5 = vector.load %arg3[%c0_3, %c0_4, %c0_5, %c0_6] : memref<3x3x128x128xbf16, #tpu.memory_space<vmem>>, vector<1x1x128x128xbf16>
    %6 = vector.shape_cast %5 : vector<1x1x128x128xbf16> to vector<128x128xbf16>
    %cst_7 = arith.constant dense<0.000000e+00> : vector<64x128xf32>
    %7 = tpu.matmul %4, %6, %cst_7 {dimension_numbers = #tpu.dot_dimension_numbers<[1], [0], [0], [1], [0, 0, 1, 1], [], []>} : vector<64x128xbf16>, vector<128x128xbf16>, vector<64x128xf32> -> vector<64x128xf32>
    %8 = arith.addf %0, %7 : vector<64x128xf32>
    %c0_8 = arith.constant 0 : index
    %c0_9 = arith.constant 0 : index
    %c1 = arith.constant 1 : index
    %c0_10 = arith.constant 0 : index
    %9 = vector.load %arg2[%c0_8, %c0_9, %c1, %c0_10] : memref<1x10x10x128xf32, #tpu.memory_space<vmem>>, vector<1x8x8x128xf32>
    %10 = vector.shape_cast %9 : vector<1x8x8x128xf32> to vector<8x8x128xf32>
    %11 = arith.truncf %10 : vector<8x8x128xf32> to vector<8x8x128xbf16>
    %12 = vector.shape_cast %11 : vector<8x8x128xbf16> to vector<64x128xbf16>
    %c0_11 = arith.constant 0 : index
    %c1_12 = arith.constant 1 : index
    %c0_13 = arith.constant 0 : index
    %c0_14 = arith.constant 0 : index
    %13 = vector.load %arg3[%c0_11, %c1_12, %c0_13, %c0_14] : memref<3x3x128x128xbf16, #tpu.memory_space<vmem>>, vector<1x1x128x128xbf16>
    %14 = vector.shape_cast %13 : vector<1x1x128x128xbf16> to vector<128x128xbf16>
    %cst_15 = arith.constant dense<0.000000e+00> : vector<64x128xf32>
    %15 = tpu.matmul %12, %14, %cst_15 {dimension_numbers = #tpu.dot_dimension_numbers<[1], [0], [0], [1], [0, 0, 1, 1], [], []>} : vector<64x128xbf16>, vector<128x128xbf16>, vector<64x128xf32> -> vector<64x128xf32>
    %16 = arith.addf %8, %15 : vector<64x128xf32>
    %c0_16 = arith.constant 0 : index
    %c0_17 = arith.constant 0 : index
    %c2 = arith.constant 2 : index
    %c0_18 = arith.constant 0 : index
    %17 = vector.load %arg2[%c0_16, %c0_17, %c2, %c0_18] : memref<1x10x10x128xf32, #tpu.memory_space<vmem>>, vector<1x8x8x128xf32>
    %18 = vector.shape_cast %17 : vector<1x8x8x128xf32> to vector<8x8x128xf32>
    %19 = arith.truncf %18 : vector<8x8x128xf32> to vector<8x8x128xbf16>
    %20 = vector.shape_cast %19 : vector<8x8x128xbf16> to vector<64x128xbf16>
    %c0_19 = arith.constant 0 : index
    %c2_20 = arith.constant 2 : index
    %c0_21 = arith.constant 0 : index
    %c0_22 = arith.constant 0 : index
    %21 = vector.load %arg3[%c0_19, %c2_20, %c0_21, %c0_22] : memref<3x3x128x128xbf16, #tpu.memory_space<vmem>>, vector<1x1x128x128xbf16>
    %22 = vector.shape_cast %21 : vector<1x1x128x128xbf16> to vector<128x128xbf16>
    %cst_23 = arith.constant dense<0.000000e+00> : vector<64x128xf32>
    %23 = tpu.matmul %20, %22, %cst_23 {dimension_numbers = #tpu.dot_dimension_numbers<[1], [0], [0], [1], [0, 0, 1, 1], [], []>} : vector<64x128xbf16>, vector<128x128xbf16>, vector<64x128xf32> -> vector<64x128xf32>
    %24 = arith.addf %16, %23 : vector<64x128xf32>
    %c0_24 = arith.constant 0 : index
    %c1_25 = arith.constant 1 : index
    %c0_26 = arith.constant 0 : index
    %c0_27 = arith.constant 0 : index
    %25 = vector.load %arg2[%c0_24, %c1_25, %c0_26, %c0_27] : memref<1x10x10x128xf32, #tpu.memory_space<vmem>>, vector<1x8x8x128xf32>
    %26 = vector.shape_cast %25 : vector<1x8x8x128xf32> to vector<8x8x128xf32>
    %27 = arith.truncf %26 : vector<8x8x128xf32> to vector<8x8x128xbf16>
    %28 = vector.shape_cast %27 : vector<8x8x128xbf16> to vector<64x128xbf16>
    %c1_28 = arith.constant 1 : index
    %c0_29 = arith.constant 0 : index
    %c0_30 = arith.constant 0 : index
    %c0_31 = arith.constant 0 : index
    %29 = vector.load %arg3[%c1_28, %c0_29, %c0_30, %c0_31] : memref<3x3x128x128xbf16, #tpu.memory_space<vmem>>, vector<1x1x128x128xbf16>
    %30 = vector.shape_cast %29 : vector<1x1x128x128xbf16> to vector<128x128xbf16>
    %cst_32 = arith.constant dense<0.000000e+00> : vector<64x128xf32>
    %31 = tpu.matmul %28, %30, %cst_32 {dimension_numbers = #tpu.dot_dimension_numbers<[1], [0], [0], [1], [0, 0, 1, 1], [], []>} : vector<64x128xbf16>, vector<128x128xbf16>, vector<64x128xf32> -> vector<64x128xf32>
    %32 = arith.addf %24, %31 : vector<64x128xf32>
    %c0_33 = arith.constant 0 : index
    %c1_34 = arith.constant 1 : index
    %c1_35 = arith.constant 1 : index
    %c0_36 = arith.constant 0 : index
    %33 = vector.load %arg2[%c0_33, %c1_34, %c1_35, %c0_36] : memref<1x10x10x128xf32, #tpu.memory_space<vmem>>, vector<1x8x8x128xf32>
    %34 = vector.shape_cast %33 : vector<1x8x8x128xf32> to vector<8x8x128xf32>
    %35 = arith.truncf %34 : vector<8x8x128xf32> to vector<8x8x128xbf16>
    %36 = vector.shape_cast %35 : vector<8x8x128xbf16> to vector<64x128xbf16>
    %c1_37 = arith.constant 1 : index
    %c1_38 = arith.constant 1 : index
    %c0_39 = arith.constant 0 : index
    %c0_40 = arith.constant 0 : index
    %37 = vector.load %arg3[%c1_37, %c1_38, %c0_39, %c0_40] : memref<3x3x128x128xbf16, #tpu.memory_space<vmem>>, vector<1x1x128x128xbf16>
    %38 = vector.shape_cast %37 : vector<1x1x128x128xbf16> to vector<128x128xbf16>
    %cst_41 = arith.constant dense<0.000000e+00> : vector<64x128xf32>
    %39 = tpu.matmul %36, %38, %cst_41 {dimension_numbers = #tpu.dot_dimension_numbers<[1], [0], [0], [1], [0, 0, 1, 1], [], []>} : vector<64x128xbf16>, vector<128x128xbf16>, vector<64x128xf32> -> vector<64x128xf32>
    %40 = arith.addf %32, %39 : vector<64x128xf32>
    %c0_42 = arith.constant 0 : index
    %c1_43 = arith.constant 1 : index
    %c2_44 = arith.constant 2 : index
    %c0_45 = arith.constant 0 : index
    %41 = vector.load %arg2[%c0_42, %c1_43, %c2_44, %c0_45] : memref<1x10x10x128xf32, #tpu.memory_space<vmem>>, vector<1x8x8x128xf32>
    %42 = vector.shape_cast %41 : vector<1x8x8x128xf32> to vector<8x8x128xf32>
    %43 = arith.truncf %42 : vector<8x8x128xf32> to vector<8x8x128xbf16>
    %44 = vector.shape_cast %43 : vector<8x8x128xbf16> to vector<64x128xbf16>
    %c1_46 = arith.constant 1 : index
    %c2_47 = arith.constant 2 : index
    %c0_48 = arith.constant 0 : index
    %c0_49 = arith.constant 0 : index
    %45 = vector.load %arg3[%c1_46, %c2_47, %c0_48, %c0_49] : memref<3x3x128x128xbf16, #tpu.memory_space<vmem>>, vector<1x1x128x128xbf16>
    %46 = vector.shape_cast %45 : vector<1x1x128x128xbf16> to vector<128x128xbf16>
    %cst_50 = arith.constant dense<0.000000e+00> : vector<64x128xf32>
    %47 = tpu.matmul %44, %46, %cst_50 {dimension_numbers = #tpu.dot_dimension_numbers<[1], [0], [0], [1], [0, 0, 1, 1], [], []>} : vector<64x128xbf16>, vector<128x128xbf16>, vector<64x128xf32> -> vector<64x128xf32>
    %48 = arith.addf %40, %47 : vector<64x128xf32>
    %c0_51 = arith.constant 0 : index
    %c2_52 = arith.constant 2 : index
    %c0_53 = arith.constant 0 : index
    %c0_54 = arith.constant 0 : index
    %49 = vector.load %arg2[%c0_51, %c2_52, %c0_53, %c0_54] : memref<1x10x10x128xf32, #tpu.memory_space<vmem>>, vector<1x8x8x128xf32>
    %50 = vector.shape_cast %49 : vector<1x8x8x128xf32> to vector<8x8x128xf32>
    %51 = arith.truncf %50 : vector<8x8x128xf32> to vector<8x8x128xbf16>
    %52 = vector.shape_cast %51 : vector<8x8x128xbf16> to vector<64x128xbf16>
    %c2_55 = arith.constant 2 : index
    %c0_56 = arith.constant 0 : index
    %c0_57 = arith.constant 0 : index
    %c0_58 = arith.constant 0 : index
    %53 = vector.load %arg3[%c2_55, %c0_56, %c0_57, %c0_58] : memref<3x3x128x128xbf16, #tpu.memory_space<vmem>>, vector<1x1x128x128xbf16>
    %54 = vector.shape_cast %53 : vector<1x1x128x128xbf16> to vector<128x128xbf16>
    %cst_59 = arith.constant dense<0.000000e+00> : vector<64x128xf32>
    %55 = tpu.matmul %52, %54, %cst_59 {dimension_numbers = #tpu.dot_dimension_numbers<[1], [0], [0], [1], [0, 0, 1, 1], [], []>} : vector<64x128xbf16>, vector<128x128xbf16>, vector<64x128xf32> -> vector<64x128xf32>
    %56 = arith.addf %48, %55 : vector<64x128xf32>
    %c0_60 = arith.constant 0 : index
    %c2_61 = arith.constant 2 : index
    %c1_62 = arith.constant 1 : index
    %c0_63 = arith.constant 0 : index
    %57 = vector.load %arg2[%c0_60, %c2_61, %c1_62, %c0_63] : memref<1x10x10x128xf32, #tpu.memory_space<vmem>>, vector<1x8x8x128xf32>
    %58 = vector.shape_cast %57 : vector<1x8x8x128xf32> to vector<8x8x128xf32>
    %59 = arith.truncf %58 : vector<8x8x128xf32> to vector<8x8x128xbf16>
    %60 = vector.shape_cast %59 : vector<8x8x128xbf16> to vector<64x128xbf16>
    %c2_64 = arith.constant 2 : index
    %c1_65 = arith.constant 1 : index
    %c0_66 = arith.constant 0 : index
    %c0_67 = arith.constant 0 : index
    %61 = vector.load %arg3[%c2_64, %c1_65, %c0_66, %c0_67] : memref<3x3x128x128xbf16, #tpu.memory_space<vmem>>, vector<1x1x128x128xbf16>
    %62 = vector.shape_cast %61 : vector<1x1x128x128xbf16> to vector<128x128xbf16>
    %cst_68 = arith.constant dense<0.000000e+00> : vector<64x128xf32>
    %63 = tpu.matmul %60, %62, %cst_68 {dimension_numbers = #tpu.dot_dimension_numbers<[1], [0], [0], [1], [0, 0, 1, 1], [], []>} : vector<64x128xbf16>, vector<128x128xbf16>, vector<64x128xf32> -> vector<64x128xf32>
    %64 = arith.addf %56, %63 : vector<64x128xf32>
    %c0_69 = arith.constant 0 : index
    %c2_70 = arith.constant 2 : index
    %c2_71 = arith.constant 2 : index
    %c0_72 = arith.constant 0 : index
    %65 = vector.load %arg2[%c0_69, %c2_70, %c2_71, %c0_72] : memref<1x10x10x128xf32, #tpu.memory_space<vmem>>, vector<1x8x8x128xf32>
    %66 = vector.shape_cast %65 : vector<1x8x8x128xf32> to vector<8x8x128xf32>
    %67 = arith.truncf %66 : vector<8x8x128xf32> to vector<8x8x128xbf16>
    %68 = vector.shape_cast %67 : vector<8x8x128xbf16> to vector<64x128xbf16>
    %c2_73 = arith.constant 2 : index
    %c2_74 = arith.constant 2 : index
    %c0_75 = arith.constant 0 : index
    %c0_76 = arith.constant 0 : index
    %69 = vector.load %arg3[%c2_73, %c2_74, %c0_75, %c0_76] : memref<3x3x128x128xbf16, #tpu.memory_space<vmem>>, vector<1x1x128x128xbf16>
    %70 = vector.shape_cast %69 : vector<1x1x128x128xbf16> to vector<128x128xbf16>
    %cst_77 = arith.constant dense<0.000000e+00> : vector<64x128xf32>
    %71 = tpu.matmul %68, %70, %cst_77 {dimension_numbers = #tpu.dot_dimension_numbers<[1], [0], [0], [1], [0, 0, 1, 1], [], []>} : vector<64x128xbf16>, vector<128x128xbf16>, vector<64x128xf32> -> vector<64x128xf32>
    %72 = arith.addf %64, %71 : vector<64x128xf32>
    %c0_78 = arith.constant 0 : index
    %c0_79 = arith.constant 0 : index
    %73 = vector.load %arg4[%c0_78, %c0_79] : memref<1x128xf32, #tpu.memory_space<vmem>>, vector<1x128xf32>
    %74 = vector.broadcast %73 : vector<1x128xf32> to vector<64x128xf32>
    %75 = arith.addf %72, %74 : vector<64x128xf32>
    %cst_80 = arith.constant 0.000000e+00 : f32
    %76 = vector.broadcast %cst_80 : f32 to vector<64x128xf32>
    %77 = arith.maximumf %75, %76 : vector<64x128xf32>
    %c0_81 = arith.constant 0 : index
    %c0_82 = arith.constant 0 : index
    %c0_83 = arith.constant 0 : index
    %78 = vector.load %arg5[%c0_81, %c0_82, %c0_83] : memref<1x64x128xf32, #tpu.memory_space<vmem>>, vector<1x64x128xf32>
    %79 = vector.shape_cast %78 : vector<1x64x128xf32> to vector<64x128xf32>
    %80 = vector.shape_cast %77 : vector<64x128xf32> to vector<1x64x128xf32>
    tpu.vector_store %arg5[%c0_81, %c0_82, %c0_83], %80 {strides = array<i32>} : memref<1x64x128xf32, #tpu.memory_space<vmem>>, vector<1x64x128xf32>,
    return
  }
  func.func @transform_0(%arg0: i32, %arg1: i32) -> (i32, i32, i32, i32) {
    %c0_i32 = arith.constant 0 : i32
    %c0_i32_0 = arith.constant 0 : i32
    %c0_i32_1 = arith.constant 0 : i32
    %c0_i32_2 = arith.constant 0 : i32
    return %arg0, %c0_i32, %c0_i32_0, %c0_i32_1 : i32, i32, i32, i32
  }
  func.func @transform_1(%arg0: i32, %arg1: i32) -> (i32, i32, i32, i32) {
    %c0_i32 = arith.constant 0 : i32
    %c0_i32_0 = arith.constant 0 : i32
    %c0_i32_1 = arith.constant 0 : i32
    %c0_i32_2 = arith.constant 0 : i32
    return %c0_i32, %c0_i32_0, %c0_i32_1, %arg1 : i32, i32, i32, i32
  }
  func.func @transform_2(%arg0: i32, %arg1: i32) -> (i32, i32) {
    %c0_i32 = arith.constant 0 : i32
    %c0_i32_0 = arith.constant 0 : i32
    return %c0_i32, %arg1 : i32, i32
  }
  func.func @transform_3(%arg0: i32, %arg1: i32) -> (i32, i32, i32) {
    %c0_i32 = arith.constant 0 : i32
    %c0_i32_0 = arith.constant 0 : i32
    return %arg0, %c0_i32, %arg1 : i32, i32, i32
  }
}

module attributes {stable_mosaic.version = 11 : i64} {
  func.func @_fused_conv_kernel(%arg0: i32, %arg1: i32, %arg2: memref<1x9x2x9x256xf32, #tpu.memory_space<vmem>>, %arg3: memref<3x3x128x128xbf16, #tpu.memory_space<vmem>>, %arg4: memref<1x128xf32, #tpu.memory_space<vmem>>, %arg5: memref<1x64x128xf32, #tpu.memory_space<vmem>>) attributes {dimension_semantics = [#tpu.dimension_semantics<parallel>, #tpu.dimension_semantics<parallel>], iteration_bounds = array<i64: 2, 1>, scalar_prefetch = 0 : i64, scratch_operands = 0 : i64, tpu.core_type = #tpu.core_type<tc>, window_params = [{transform_indices = @transform_0, window_bounds = array<i64: 1, 9, 2, 9, 256>}, {transform_indices = @transform_1, window_bounds = array<i64: 3, 3, 128, 128>}, {transform_indices = @transform_2, window_bounds = array<i64: 1, 128>}, {transform_indices = @transform_3, window_bounds = array<i64: 1, 64, 128>}]} {
    %cst = arith.constant 0.000000e+00 : f32
    %0 = vector.broadcast %cst : f32 to vector<64x128xf32>
    %c0 = arith.constant 0 : index
    %c0_0 = arith.constant 0 : index
    %c0_1 = arith.constant 0 : index
    %c0_2 = arith.constant 0 : index
    %c0_3 = arith.constant 0 : index
    %1 = vector.load %arg2[%c0, %c0_0, %c0_1, %c0_2, %c0_3] : memref<1x9x2x9x256xf32, #tpu.memory_space<vmem>>, vector<1x8x1x8x128xf32>
    %2 = vector.shape_cast %1 : vector<1x8x1x8x128xf32> to vector<8x1x8x128xf32>
    %3 = arith.truncf %2 : vector<8x1x8x128xf32> to vector<8x1x8x128xbf16>
    %4 = vector.shape_cast %3 : vector<8x1x8x128xbf16> to vector<64x128xbf16>
    %c0_4 = arith.constant 0 : index
    %c0_5 = arith.constant 0 : index
    %c0_6 = arith.constant 0 : index
    %c0_7 = arith.constant 0 : index
    %5 = vector.load %arg3[%c0_4, %c0_5, %c0_6, %c0_7] : memref<3x3x128x128xbf16, #tpu.memory_space<vmem>>, vector<1x1x128x128xbf16>
    %6 = vector.shape_cast %5 : vector<1x1x128x128xbf16> to vector<128x128xbf16>
    %cst_8 = arith.constant dense<0.000000e+00> : vector<64x128xf32>
    %7 = tpu.matmul %4, %6, %cst_8 {dimension_numbers = #tpu.dot_dimension_numbers<[1], [0], [0], [1], [0, 0, 1, 1], [], []>} : vector<64x128xbf16>, vector<128x128xbf16>, vector<64x128xf32> -> vector<64x128xf32>
    %8 = arith.addf %0, %7 : vector<64x128xf32>
    %c0_9 = arith.constant 0 : index
    %c0_10 = arith.constant 0 : index
    %c0_11 = arith.constant 0 : index
    %c0_12 = arith.constant 0 : index
    %c128 = arith.constant 128 : index
    %9 = vector.load %arg2[%c0_9, %c0_10, %c0_11, %c0_12, %c128] : memref<1x9x2x9x256xf32, #tpu.memory_space<vmem>>, vector<1x8x1x8x128xf32>
    %10 = vector.shape_cast %9 : vector<1x8x1x8x128xf32> to vector<8x1x8x128xf32>
    %11 = arith.truncf %10 : vector<8x1x8x128xf32> to vector<8x1x8x128xbf16>
    %12 = vector.shape_cast %11 : vector<8x1x8x128xbf16> to vector<64x128xbf16>
    %c0_13 = arith.constant 0 : index
    %c1 = arith.constant 1 : index
    %c0_14 = arith.constant 0 : index
    %c0_15 = arith.constant 0 : index
    %13 = vector.load %arg3[%c0_13, %c1, %c0_14, %c0_15] : memref<3x3x128x128xbf16, #tpu.memory_space<vmem>>, vector<1x1x128x128xbf16>
    %14 = vector.shape_cast %13 : vector<1x1x128x128xbf16> to vector<128x128xbf16>
    %cst_16 = arith.constant dense<0.000000e+00> : vector<64x128xf32>
    %15 = tpu.matmul %12, %14, %cst_16 {dimension_numbers = #tpu.dot_dimension_numbers<[1], [0], [0], [1], [0, 0, 1, 1], [], []>} : vector<64x128xbf16>, vector<128x128xbf16>, vector<64x128xf32> -> vector<64x128xf32>
    %16 = arith.addf %8, %15 : vector<64x128xf32>
    %c0_17 = arith.constant 0 : index
    %c0_18 = arith.constant 0 : index
    %c0_19 = arith.constant 0 : index
    %c1_20 = arith.constant 1 : index
    %c0_21 = arith.constant 0 : index
    %17 = vector.load %arg2[%c0_17, %c0_18, %c0_19, %c1_20, %c0_21] : memref<1x9x2x9x256xf32, #tpu.memory_space<vmem>>, vector<1x8x1x8x128xf32>
    %18 = vector.shape_cast %17 : vector<1x8x1x8x128xf32> to vector<8x1x8x128xf32>
    %19 = arith.truncf %18 : vector<8x1x8x128xf32> to vector<8x1x8x128xbf16>
    %20 = vector.shape_cast %19 : vector<8x1x8x128xbf16> to vector<64x128xbf16>
    %c0_22 = arith.constant 0 : index
    %c2 = arith.constant 2 : index
    %c0_23 = arith.constant 0 : index
    %c0_24 = arith.constant 0 : index
    %21 = vector.load %arg3[%c0_22, %c2, %c0_23, %c0_24] : memref<3x3x128x128xbf16, #tpu.memory_space<vmem>>, vector<1x1x128x128xbf16>
    %22 = vector.shape_cast %21 : vector<1x1x128x128xbf16> to vector<128x128xbf16>
    %cst_25 = arith.constant dense<0.000000e+00> : vector<64x128xf32>
    %23 = tpu.matmul %20, %22, %cst_25 {dimension_numbers = #tpu.dot_dimension_numbers<[1], [0], [0], [1], [0, 0, 1, 1], [], []>} : vector<64x128xbf16>, vector<128x128xbf16>, vector<64x128xf32> -> vector<64x128xf32>
    %24 = arith.addf %16, %23 : vector<64x128xf32>
    %c0_26 = arith.constant 0 : index
    %c0_27 = arith.constant 0 : index
    %c1_28 = arith.constant 1 : index
    %c0_29 = arith.constant 0 : index
    %c0_30 = arith.constant 0 : index
    %25 = vector.load %arg2[%c0_26, %c0_27, %c1_28, %c0_29, %c0_30] : memref<1x9x2x9x256xf32, #tpu.memory_space<vmem>>, vector<1x8x1x8x128xf32>
    %26 = vector.shape_cast %25 : vector<1x8x1x8x128xf32> to vector<8x1x8x128xf32>
    %27 = arith.truncf %26 : vector<8x1x8x128xf32> to vector<8x1x8x128xbf16>
    %28 = vector.shape_cast %27 : vector<8x1x8x128xbf16> to vector<64x128xbf16>
    %c1_31 = arith.constant 1 : index
    %c0_32 = arith.constant 0 : index
    %c0_33 = arith.constant 0 : index
    %c0_34 = arith.constant 0 : index
    %29 = vector.load %arg3[%c1_31, %c0_32, %c0_33, %c0_34] : memref<3x3x128x128xbf16, #tpu.memory_space<vmem>>, vector<1x1x128x128xbf16>
    %30 = vector.shape_cast %29 : vector<1x1x128x128xbf16> to vector<128x128xbf16>
    %cst_35 = arith.constant dense<0.000000e+00> : vector<64x128xf32>
    %31 = tpu.matmul %28, %30, %cst_35 {dimension_numbers = #tpu.dot_dimension_numbers<[1], [0], [0], [1], [0, 0, 1, 1], [], []>} : vector<64x128xbf16>, vector<128x128xbf16>, vector<64x128xf32> -> vector<64x128xf32>
    %32 = arith.addf %24, %31 : vector<64x128xf32>
    %c0_36 = arith.constant 0 : index
    %c0_37 = arith.constant 0 : index
    %c1_38 = arith.constant 1 : index
    %c0_39 = arith.constant 0 : index
    %c128_40 = arith.constant 128 : index
    %33 = vector.load %arg2[%c0_36, %c0_37, %c1_38, %c0_39, %c128_40] : memref<1x9x2x9x256xf32, #tpu.memory_space<vmem>>, vector<1x8x1x8x128xf32>
    %34 = vector.shape_cast %33 : vector<1x8x1x8x128xf32> to vector<8x1x8x128xf32>
    %35 = arith.truncf %34 : vector<8x1x8x128xf32> to vector<8x1x8x128xbf16>
    %36 = vector.shape_cast %35 : vector<8x1x8x128xbf16> to vector<64x128xbf16>
    %c1_41 = arith.constant 1 : index
    %c1_42 = arith.constant 1 : index
    %c0_43 = arith.constant 0 : index
    %c0_44 = arith.constant 0 : index
    %37 = vector.load %arg3[%c1_41, %c1_42, %c0_43, %c0_44] : memref<3x3x128x128xbf16, #tpu.memory_space<vmem>>, vector<1x1x128x128xbf16>
    %38 = vector.shape_cast %37 : vector<1x1x128x128xbf16> to vector<128x128xbf16>
    %cst_45 = arith.constant dense<0.000000e+00> : vector<64x128xf32>
    %39 = tpu.matmul %36, %38, %cst_45 {dimension_numbers = #tpu.dot_dimension_numbers<[1], [0], [0], [1], [0, 0, 1, 1], [], []>} : vector<64x128xbf16>, vector<128x128xbf16>, vector<64x128xf32> -> vector<64x128xf32>
    %40 = arith.addf %32, %39 : vector<64x128xf32>
    %c0_46 = arith.constant 0 : index
    %c0_47 = arith.constant 0 : index
    %c1_48 = arith.constant 1 : index
    %c1_49 = arith.constant 1 : index
    %c0_50 = arith.constant 0 : index
    %41 = vector.load %arg2[%c0_46, %c0_47, %c1_48, %c1_49, %c0_50] : memref<1x9x2x9x256xf32, #tpu.memory_space<vmem>>, vector<1x8x1x8x128xf32>
    %42 = vector.shape_cast %41 : vector<1x8x1x8x128xf32> to vector<8x1x8x128xf32>
    %43 = arith.truncf %42 : vector<8x1x8x128xf32> to vector<8x1x8x128xbf16>
    %44 = vector.shape_cast %43 : vector<8x1x8x128xbf16> to vector<64x128xbf16>
    %c1_51 = arith.constant 1 : index
    %c2_52 = arith.constant 2 : index
    %c0_53 = arith.constant 0 : index
    %c0_54 = arith.constant 0 : index
    %45 = vector.load %arg3[%c1_51, %c2_52, %c0_53, %c0_54] : memref<3x3x128x128xbf16, #tpu.memory_space<vmem>>, vector<1x1x128x128xbf16>
    %46 = vector.shape_cast %45 : vector<1x1x128x128xbf16> to vector<128x128xbf16>
    %cst_55 = arith.constant dense<0.000000e+00> : vector<64x128xf32>
    %47 = tpu.matmul %44, %46, %cst_55 {dimension_numbers = #tpu.dot_dimension_numbers<[1], [0], [0], [1], [0, 0, 1, 1], [], []>} : vector<64x128xbf16>, vector<128x128xbf16>, vector<64x128xf32> -> vector<64x128xf32>
    %48 = arith.addf %40, %47 : vector<64x128xf32>
    %c0_56 = arith.constant 0 : index
    %c1_57 = arith.constant 1 : index
    %c0_58 = arith.constant 0 : index
    %c0_59 = arith.constant 0 : index
    %c0_60 = arith.constant 0 : index
    %49 = vector.load %arg2[%c0_56, %c1_57, %c0_58, %c0_59, %c0_60] : memref<1x9x2x9x256xf32, #tpu.memory_space<vmem>>, vector<1x8x1x8x128xf32>
    %50 = vector.shape_cast %49 : vector<1x8x1x8x128xf32> to vector<8x1x8x128xf32>
    %51 = arith.truncf %50 : vector<8x1x8x128xf32> to vector<8x1x8x128xbf16>
    %52 = vector.shape_cast %51 : vector<8x1x8x128xbf16> to vector<64x128xbf16>
    %c2_61 = arith.constant 2 : index
    %c0_62 = arith.constant 0 : index
    %c0_63 = arith.constant 0 : index
    %c0_64 = arith.constant 0 : index
    %53 = vector.load %arg3[%c2_61, %c0_62, %c0_63, %c0_64] : memref<3x3x128x128xbf16, #tpu.memory_space<vmem>>, vector<1x1x128x128xbf16>
    %54 = vector.shape_cast %53 : vector<1x1x128x128xbf16> to vector<128x128xbf16>
    %cst_65 = arith.constant dense<0.000000e+00> : vector<64x128xf32>
    %55 = tpu.matmul %52, %54, %cst_65 {dimension_numbers = #tpu.dot_dimension_numbers<[1], [0], [0], [1], [0, 0, 1, 1], [], []>} : vector<64x128xbf16>, vector<128x128xbf16>, vector<64x128xf32> -> vector<64x128xf32>
    %56 = arith.addf %48, %55 : vector<64x128xf32>
    %c0_66 = arith.constant 0 : index
    %c1_67 = arith.constant 1 : index
    %c0_68 = arith.constant 0 : index
    %c0_69 = arith.constant 0 : index
    %c128_70 = arith.constant 128 : index
    %57 = vector.load %arg2[%c0_66, %c1_67, %c0_68, %c0_69, %c128_70] : memref<1x9x2x9x256xf32, #tpu.memory_space<vmem>>, vector<1x8x1x8x128xf32>
    %58 = vector.shape_cast %57 : vector<1x8x1x8x128xf32> to vector<8x1x8x128xf32>
    %59 = arith.truncf %58 : vector<8x1x8x128xf32> to vector<8x1x8x128xbf16>
    %60 = vector.shape_cast %59 : vector<8x1x8x128xbf16> to vector<64x128xbf16>
    %c2_71 = arith.constant 2 : index
    %c1_72 = arith.constant 1 : index
    %c0_73 = arith.constant 0 : index
    %c0_74 = arith.constant 0 : index
    %61 = vector.load %arg3[%c2_71, %c1_72, %c0_73, %c0_74] : memref<3x3x128x128xbf16, #tpu.memory_space<vmem>>, vector<1x1x128x128xbf16>
    %62 = vector.shape_cast %61 : vector<1x1x128x128xbf16> to vector<128x128xbf16>
    %cst_75 = arith.constant dense<0.000000e+00> : vector<64x128xf32>
    %63 = tpu.matmul %60, %62, %cst_75 {dimension_numbers = #tpu.dot_dimension_numbers<[1], [0], [0], [1], [0, 0, 1, 1], [], []>} : vector<64x128xbf16>, vector<128x128xbf16>, vector<64x128xf32> -> vector<64x128xf32>
    %64 = arith.addf %56, %63 : vector<64x128xf32>
    %c0_76 = arith.constant 0 : index
    %c1_77 = arith.constant 1 : index
    %c0_78 = arith.constant 0 : index
    %c1_79 = arith.constant 1 : index
    %c0_80 = arith.constant 0 : index
    %65 = vector.load %arg2[%c0_76, %c1_77, %c0_78, %c1_79, %c0_80] : memref<1x9x2x9x256xf32, #tpu.memory_space<vmem>>, vector<1x8x1x8x128xf32>
    %66 = vector.shape_cast %65 : vector<1x8x1x8x128xf32> to vector<8x1x8x128xf32>
    %67 = arith.truncf %66 : vector<8x1x8x128xf32> to vector<8x1x8x128xbf16>
    %68 = vector.shape_cast %67 : vector<8x1x8x128xbf16> to vector<64x128xbf16>
    %c2_81 = arith.constant 2 : index
    %c2_82 = arith.constant 2 : index
    %c0_83 = arith.constant 0 : index
    %c0_84 = arith.constant 0 : index
    %69 = vector.load %arg3[%c2_81, %c2_82, %c0_83, %c0_84] : memref<3x3x128x128xbf16, #tpu.memory_space<vmem>>, vector<1x1x128x128xbf16>
    %70 = vector.shape_cast %69 : vector<1x1x128x128xbf16> to vector<128x128xbf16>
    %cst_85 = arith.constant dense<0.000000e+00> : vector<64x128xf32>
    %71 = tpu.matmul %68, %70, %cst_85 {dimension_numbers = #tpu.dot_dimension_numbers<[1], [0], [0], [1], [0, 0, 1, 1], [], []>} : vector<64x128xbf16>, vector<128x128xbf16>, vector<64x128xf32> -> vector<64x128xf32>
    %72 = arith.addf %64, %71 : vector<64x128xf32>
    %c0_86 = arith.constant 0 : index
    %c0_87 = arith.constant 0 : index
    %73 = vector.load %arg4[%c0_86, %c0_87] : memref<1x128xf32, #tpu.memory_space<vmem>>, vector<1x128xf32>
    %74 = vector.broadcast %73 : vector<1x128xf32> to vector<64x128xf32>
    %75 = arith.addf %72, %74 : vector<64x128xf32>
    %c0_88 = arith.constant 0 : index
    %c0_89 = arith.constant 0 : index
    %c0_90 = arith.constant 0 : index
    %76 = vector.load %arg5[%c0_88, %c0_89, %c0_90] : memref<1x64x128xf32, #tpu.memory_space<vmem>>, vector<1x64x128xf32>
    %77 = vector.shape_cast %76 : vector<1x64x128xf32> to vector<64x128xf32>
    %78 = vector.shape_cast %75 : vector<64x128xf32> to vector<1x64x128xf32>
    tpu.vector_store %arg5[%c0_88, %c0_89, %c0_90], %78 {strides = array<i32>} : memref<1x64x128xf32, #tpu.memory_space<vmem>>, vector<1x64x128xf32>,
    return
  }
  func.func @transform_0(%arg0: i32, %arg1: i32) -> (i32, i32, i32, i32, i32) {
    %c0_i32 = arith.constant 0 : i32
    %c0_i32_0 = arith.constant 0 : i32
    %c0_i32_1 = arith.constant 0 : i32
    %c0_i32_2 = arith.constant 0 : i32
    %c0_i32_3 = arith.constant 0 : i32
    return %arg0, %c0_i32, %c0_i32_0, %c0_i32_1, %c0_i32_2 : i32, i32, i32, i32, i32
  }
  func.func @transform_1(%arg0: i32, %arg1: i32) -> (i32, i32, i32, i32) {
    %c0_i32 = arith.constant 0 : i32
    %c0_i32_0 = arith.constant 0 : i32
    %c0_i32_1 = arith.constant 0 : i32
    %c0_i32_2 = arith.constant 0 : i32
    return %c0_i32, %c0_i32_0, %c0_i32_1, %arg1 : i32, i32, i32, i32
  }
  func.func @transform_2(%arg0: i32, %arg1: i32) -> (i32, i32) {
    %c0_i32 = arith.constant 0 : i32
    %c0_i32_0 = arith.constant 0 : i32
    return %c0_i32, %arg1 : i32, i32
  }
  func.func @transform_3(%arg0: i32, %arg1: i32) -> (i32, i32, i32) {
    %c0_i32 = arith.constant 0 : i32
    %c0_i32_0 = arith.constant 0 : i32
    return %arg0, %c0_i32, %arg1 : i32, i32, i32
  }
}

</mosaic_0001>

<llo_original>
// kernel: unet_down_block_forward.4
$region0: #{unet_down_block_forward.4}
  #allocation0 [shape = 'u32[]', space=smem, size = 0x4, offset = 0x4, fixed_abs, tag = 'smem constant byte address 0x4 - core index']
  #allocation1 [shape = 'u32[72,128]{1,0:T(1,128)}', space=vmem, size = 0x9000, scoped, tag = 'internal scratch']
  %s0 = inlined_call_operand.vmem [shape: f32[2,10,10,128], index: 0, kind: input, shape index: {}]
  %s1 = inlined_call_operand.vmem [shape: bf16[3,3,128,128], index: 1, kind: input, shape index: {}]
  %s2 = inlined_call_operand.vmem [shape: f32[1,128], index: 2, kind: input, shape index: {}]
  %s3 = inlined_call_operand.vmem [shape: f32[2,64,128], index: 3, kind: output, shape index: {}]
  %s4 = sld [smem:[#allocation0]]
  $region45: #{unet_down_block_forward.4} parent=0
    _
  %s6 = ssub.s32 1, %s4
  %s7 = scalar_select 0, %s6, %s4
  loop: start=0, step=1, limit=4
  $region2: #{unet_down_block_forward.4} parent=0 // loop_pre_header
    _
  $region3: #{unet_down_block_forward.4} parent=0 // loop_header
    %s9 = sphi 0, %s13
    %p10 = scmp.ge.s32.totalorder %s9, 4
    %s16 = sphi 0, %s28
    %s17 = sphi 0, %s24
    %s18 = sphi 0, %s16
    %s19 = sphi 0, %s17
    %s20 = sphi 0, %s18
    %s21 = sphi 0, %s19
    %s31 = sphi 0, %s33
    %s34 = sphi 0, %s31
    %s35 = sphi 0, %s34
    %s51 = sphi 0, %s35
    %s57 = sphi 0, %s59
    %s60 = sphi 0, %s57
    %s61 = sphi 0, %s60
    %s77 = sphi 0, %s61
    %s83 = sphi 0, %s85
    %s86 = sphi 0, %s83
    %s87 = sphi 0, %s86
    %s103 = sphi 0, %s87
    %s111 = sphi 0, %s113
    %s114 = sphi 0, %s111
    %s115 = sphi 0, %s114
    %s131 = sphi 0, %s115
  $region4: #{unet_down_block_forward.4} parent=0 // loop_header_branch
    %12 = sbr.rel (%p10) target = $region8
  $region5: #{unet_down_block_forward.4} parent=0 // loop_body
    %s14 = ssub.s32 %s9, 1
    %s15 = ssub.s32 %s9, 2
    %s22 = sadd.s32 1, %s17
    %p23 = scmp.ge.s32.totalorder %s22, 1
    %s24 = scalar_select %p23, 0, %s22
    %s25 = sadd.s32 1, %s16
    %s26 = scalar_select %p23, %s25, %s16
    %p27 = scmp.ge.s32.totalorder %s26, 2
    %s28 = scalar_select %p27, 0, %s26
    %s29 = ssub.s32 %s16, %s28
    %p30 = scmp.eq.s32.totalorder %s29, 0
    %s32 = sadd.s32 %s31, 1
    %s33 = scalar_select %p30, %s31, %s32
    %p36 = pneg %p30
    %p37 = scmp.eq.s32.totalorder %s9, 1
    %p38 = por %p36, %p37
    %p39 = scmp.ne.s32.totalorder %s31, %s34
    %p40 = scmp.eq.s32.totalorder %s9, 0
    %p41 = por %p39, %p40
    %p42 = scmp.ne.s32.totalorder %s31, %s34
    %p43 = scmp.eq.s32.totalorder %s14, 1
    %p44 = por %p42, %p43
    %p45 = scmp.ne.s32.totalorder %s34, %s35
    %p46 = scmp.eq.s32.totalorder %s14, 0
    %p47 = por %p45, %p46
    %p48 = scmp.ne.s32.totalorder %s34, %s35
    %p49 = scmp.eq.s32.totalorder %s15, 1
    %p50 = por %p48, %p49
    %p52 = scmp.ne.s32.totalorder %s35, %s51
    %p53 = scmp.eq.s32.totalorder %s15, 0
    %p54 = por %p52, %p53
    %s55 = ssub.s32 %s17, %s24
    %p56 = scmp.eq.s32.totalorder %s55, 0
    %s58 = sadd.s32 %s57, 1
    %s59 = scalar_select %p56, %s57, %s58
    %p62 = pneg %p56
    %p63 = scmp.eq.s32.totalorder %s9, 1
    %p64 = por %p62, %p63
    %p65 = scmp.ne.s32.totalorder %s57, %s60
    %p66 = scmp.eq.s32.totalorder %s9, 0
    %p67 = por %p65, %p66
    %p68 = scmp.ne.s32.totalorder %s57, %s60
    %p69 = scmp.eq.s32.totalorder %s14, 1
    %p70 = por %p68, %p69
    %p71 = scmp.ne.s32.totalorder %s60, %s61
    %p72 = scmp.eq.s32.totalorder %s14, 0
    %p73 = por %p71, %p72
    %p74 = scmp.ne.s32.totalorder %s60, %s61
    %p75 = scmp.eq.s32.totalorder %s15, 1
    %p76 = por %p74, %p75
    %p78 = scmp.ne.s32.totalorder %s61, %s77
    %p79 = scmp.eq.s32.totalorder %s15, 0
    %p80 = por %p78, %p79
    %s81 = ssub.s32 %s17, %s24
    %p82 = scmp.eq.s32.totalorder %s81, 0
    %s84 = sadd.s32 %s83, 1
    %s85 = scalar_select %p82, %s83, %s84
    %p88 = pneg %p82
    %p89 = scmp.eq.s32.totalorder %s9, 1
    %p90 = por %p88, %p89
    %p91 = scmp.ne.s32.totalorder %s83, %s86
    %p92 = scmp.eq.s32.totalorder %s9, 0
    %p93 = por %p91, %p92
    %p94 = scmp.ne.s32.totalorder %s83, %s86
    %p95 = scmp.eq.s32.totalorder %s14, 1
    %p96 = por %p94, %p95
    %p97 = scmp.ne.s32.totalorder %s86, %s87
    %p98 = scmp.eq.s32.totalorder %s14, 0
    %p99 = por %p97, %p98
    %p100 = scmp.ne.s32.totalorder %s86, %s87
    %p101 = scmp.eq.s32.totalorder %s15, 1
    %p102 = por %p100, %p101
    %p104 = scmp.ne.s32.totalorder %s87, %s103
    %p105 = scmp.eq.s32.totalorder %s15, 0
    %p106 = por %p104, %p105
    %s107 = ssub.s32 %s16, %s28
    %s108 = ssub.s32 %s17, %s24
    %s109 = sor.u32 %s107, %s108
    %p110 = scmp.eq.s32.totalorder %s109, 0
    %s112 = sadd.s32 %s111, 1
    %s113 = scalar_select %p110, %s111, %s112
    %p116 = pneg %p110
    %p117 = scmp.eq.s32.totalorder %s9, 1
    %p118 = por %p116, %p117
    %p119 = scmp.ne.s32.totalorder %s111, %s114
    %p120 = scmp.eq.s32.totalorder %s9, 0
    %p121 = por %p119, %p120
    %p122 = scmp.ne.s32.totalorder %s111, %s114
    %p123 = scmp.eq.s32.totalorder %s14, 1
    %p124 = por %p122, %p123
    %p125 = scmp.ne.s32.totalorder %s114, %s115
    %p126 = scmp.eq.s32.totalorder %s14, 0
    %p127 = por %p125, %p126
    %p128 = scmp.ne.s32.totalorder %s114, %s115
    %p129 = scmp.eq.s32.totalorder %s15, 1
    %p130 = por %p128, %p129
    %p132 = scmp.ne.s32.totalorder %s115, %s131
    %p133 = scmp.eq.s32.totalorder %s15, 0
    %p134 = por %p132, %p133
    %p135 = scmp.le.s32.totalorder 1, %s9
    %p136 = scmp.lt.s32.totalorder %s9, 3
    %p137 = pnand %p135, %p136
    %p138 = pneg %p137
    // Predicated region
    $region9: #{unet_down_block_forward.4} parent=5 // pred_check
      _
    $region10: #{unet_down_block_forward.4} parent=5 // pred_check_branch
      %140 = sbr.rel (%p137) target = $region12
    $region11: #{unet_down_block_forward.4} parent=5 // pred_region
      %s141 = ssub.s32 %s9, 1
      // Predicated region
      $region13: #{unet_down_block_forward.4} parent=11 // pred_check
        %p142 = pneg %p73
      $region14: #{unet_down_block_forward.4} parent=11 // pred_check_branch
        %144 = sbr.rel (%p142) target = $region16
      $region15: #{unet_down_block_forward.4} parent=11 // pred_region
        %p145 = scmp.lt.s32.totalorder %s19, 0
        %s146 = scalar_select %p145, %s19, 0
        %s147 = smul.addr %s146, 4
        %s148 = scalar_lea.vmem %s1, %s147
      $region16: #{unet_down_block_forward.4} parent=11 // pred_fallthru
        _
      // Predicated region
      $region17: #{unet_down_block_forward.4} parent=11 // pred_check
        %p149 = pneg %p99
      $region18: #{unet_down_block_forward.4} parent=11 // pred_check_branch
        %151 = sbr.rel (%p149) target = $region20
      $region19: #{unet_down_block_forward.4} parent=11 // pred_region
        %p152 = scmp.lt.s32.totalorder %s19, 0
        %s153 = scalar_select %p152, %s19, 0
        %s154 = scalar_lea.vmem %s2, %s153
      $region20: #{unet_down_block_forward.4} parent=11 // pred_fallthru
        _
    $region12: #{unet_down_block_forward.4} parent=5 // pred_fallthru
      _
    %p155 = scmp.lt.s32.totalorder %s9, 2
    // Predicated region
    $region21: #{unet_down_block_forward.4} parent=5 // pred_check
      %p156 = pneg %p155
    $region22: #{unet_down_block_forward.4} parent=5 // pred_check_branch
      %158 = sbr.rel (%p156) target = $region24
    $region23: #{unet_down_block_forward.4} parent=5 // pred_region
      // Predicated region
      $region25: #{unet_down_block_forward.4} parent=23 // pred_check
        %p159 = pneg %p41
      $region26: #{unet_down_block_forward.4} parent=23 // pred_check_branch
        %161 = sbr.rel (%p159) target = $region28
      $region27: #{unet_down_block_forward.4} parent=23 // pred_region
        %p162 = scmp.lt.s32.totalorder %s16, 1
        %s163 = scalar_select %p162, %s16, 1
        %s164 = smul.addr %s163, 20
        %s165 = smul.addr %s164, 8
        %s166 = scalar_lea.vmem %s0, %s165
      $region28: #{unet_down_block_forward.4} parent=23 // pred_fallthru
        _
    $region24: #{unet_down_block_forward.4} parent=5 // pred_fallthru
      _
    %p167 = scmp.le.s32.totalorder 1, %s9
    %p168 = scmp.lt.s32.totalorder %s9, 3
    %p169 = pnand %p167, %p168
    %p170 = pneg %p169
    // Predicated region
    $region29: #{unet_down_block_forward.4} parent=5 // pred_check
      _
    $region30: #{unet_down_block_forward.4} parent=5 // pred_check_branch
      %172 = sbr.rel (%p169) target = $region32
    $region31: #{unet_down_block_forward.4} parent=5 // pred_region
      %s173 = ssub.s32 %s9, 1
      %p174 = scmp.lt.s32.totalorder %s18, 1
      %s175 = scalar_select %p174, %s18, 1
      %s176 = smul.addr %s175, 20
      %s177 = smul.addr %s176, 8
      %s178 = scalar_lea.vmem %s0, %s177
      %p179 = pneg %p47
      %p180 = pneg %p44
      %p181 = scmp.lt.s32.totalorder %s19, 0
      %s182 = scalar_select %p181, %s19, 0
      %s183 = smul.addr %s182, 4
      %s184 = scalar_lea.vmem %s1, %s183
      %p185 = pneg %p73
      %p186 = pneg %p70
      %p187 = scmp.lt.s32.totalorder %s19, 0
      %s188 = scalar_select %p187, %s19, 0
      %s189 = scalar_lea.vmem %s2, %s188
      %p190 = pneg %p99
      %p191 = pneg %p96
      %p192 = pneg %p127
      %p193 = pneg %p124
      %p194 = scmp.lt.s32.totalorder %s18, 1
      %s195 = scalar_select %p194, %s18, 1
      %p196 = scmp.lt.s32.totalorder %s19, 0
      %s197 = scalar_select %p196, %s19, 0
      %s198 = smul.addr %s195, 8
      %s199 = sadd.s32 %s197, %s198
      %s200 = smul.addr %s199, 8
      %s201 = scalar_lea.vmem %s3, %s200
      %p202 = scmp.lt.s32.totalorder %s18, 1
      %s203 = scalar_select %p202, %s18, 1
      %s204 = smul.addr %s203, 20
      %s205 = smul.addr %s204, 8
      %s206 = scalar_lea.vmem %s0, %s205
      %p207 = scmp.lt.s32.totalorder %s19, 0
      %s208 = scalar_select %p207, %s19, 0
      %s209 = smul.addr %s208, 4
      %s210 = scalar_lea.vmem %s1, %s209
      %p211 = scmp.lt.s32.totalorder %s19, 0
      %s212 = scalar_select %p211, %s19, 0
      %s213 = scalar_lea.vmem %s2, %s212
      %p214 = scmp.lt.s32.totalorder %s18, 1
      %s215 = scalar_select %p214, %s18, 1
      %p216 = scmp.lt.s32.totalorder %s19, 0
      %s217 = scalar_select %p216, %s19, 0
      %s218 = smul.addr %s215, 8
      %s219 = sadd.s32 %s217, %s218
      %s220 = smul.addr %s219, 8
      %s221 = scalar_lea.vmem %s3, %s220
      %v222 = vld [vmem:[%s206] sm:$0xff]
      %v223 = vld [vmem:[%s206 + $0x10] sm:$0xff]
      %v224 = vld [vmem:[%s206 + $0x20] sm:$0xff]
      %v225 = vld [vmem:[%s206 + $0x30] sm:$0xff]
      %v226 = vld [vmem:[%s206 + $0x40] sm:$0xff]
      %v227 = vld [vmem:[%s206 + $0x50] sm:$0xff]
      %v228 = vld [vmem:[%s206 + $0x60] sm:$0xff]
      %v229 = vld [vmem:[%s206 + $0x70] sm:$0xff]
      %v230 = vpack.c.bf16 %v222, %v222
      %v231 = vpack.c.bf16 %v223, %v223
      %v232 = vpack.c.bf16 %v224, %v224
      %v233 = vpack.c.bf16 %v225, %v225
      %v234 = vpack.c.bf16 %v226, %v226
      %v235 = vpack.c.bf16 %v227, %v227
      %v236 = vpack.c.bf16 %v228, %v228
      %v237 = vpack.c.bf16 %v229, %v229
      %v238 = vld [vmem:[%s210] sm:$0xf]
      %v239 = vld [vmem:[%s210 + $0x4] sm:$0xf]
      %v240 = vld [vmem:[%s210 + $0x8] sm:$0xf]
      %v241 = vld [vmem:[%s210 + $0xc] sm:$0xf]
      %v242 = vld [vmem:[%s210 + $0x10] sm:$0xf]
      %v243 = vld [vmem:[%s210 + $0x14] sm:$0xf]
      %v244 = vld [vmem:[%s210 + $0x18] sm:$0xf]
      %v245 = vld [vmem:[%s210 + $0x1c] sm:$0xf]
      %v246 = vld [vmem:[%s210 + $0x20] sm:$0xf]
      %v247 = vld [vmem:[%s210 + $0x24] sm:$0xf]
      %v248 = vld [vmem:[%s210 + $0x28] sm:$0xf]
      %v249 = vld [vmem:[%s210 + $0x2c] sm:$0xf]
      %v250 = vld [vmem:[%s210 + $0x30] sm:$0xf]
      %v251 = vld [vmem:[%s210 + $0x34] sm:$0xf]
      %v252 = vld [vmem:[%s210 + $0x38] sm:$0xf]
      %v253 = vld [vmem:[%s210 + $0x3c] sm:$0xf]
      %v254 = vld [vmem:[%s206 + $0x1] sm:$0xff]
      %v255 = vld [vmem:[%s206 + $0x11] sm:$0xff]
      %v256 = vld [vmem:[%s206 + $0x21] sm:$0xff]
      %v257 = vld [vmem:[%s206 + $0x31] sm:$0xff]
      %v258 = vld [vmem:[%s206 + $0x41] sm:$0xff]
      %v259 = vld [vmem:[%s206 + $0x51] sm:$0xff]
      %v260 = vld [vmem:[%s206 + $0x61] sm:$0xff]
      %v261 = vld [vmem:[%s206 + $0x71] sm:$0xff]
      %v262 = vpack.c.bf16 %v254, %v254
      %v263 = vpack.c.bf16 %v255, %v255
      %v264 = vpack.c.bf16 %v256, %v256
      %v265 = vpack.c.bf16 %v257, %v257
      %v266 = vpack.c.bf16 %v258, %v258
      %v267 = vpack.c.bf16 %v259, %v259
      %v268 = vpack.c.bf16 %v260, %v260
      %v269 = vpack.c.bf16 %v261, %v261
      %s270 = scalar_lea.vmem %s210, 64
      %v271 = vld [vmem:[%s270] sm:$0xf]
      %v272 = vld [vmem:[%s270 + $0x4] sm:$0xf]
      %v273 = vld [vmem:[%s270 + $0x8] sm:$0xf]
      %v274 = vld [vmem:[%s270 + $0xc] sm:$0xf]
      %v275 = vld [vmem:[%s270 + $0x10] sm:$0xf]
      %v276 = vld [vmem:[%s270 + $0x14] sm:$0xf]
      %v277 = vld [vmem:[%s270 + $0x18] sm:$0xf]
      %v278 = vld [vmem:[%s270 + $0x1c] sm:$0xf]
      %v279 = vld [vmem:[%s270 + $0x20] sm:$0xf]
      %v280 = vld [vmem:[%s270 + $0x24] sm:$0xf]
      %v281 = vld [vmem:[%s270 + $0x28] sm:$0xf]
      %v282 = vld [vmem:[%s270 + $0x2c] sm:$0xf]
      %v283 = vld [vmem:[%s270 + $0x30] sm:$0xf]
      %v284 = vld [vmem:[%s270 + $0x34] sm:$0xf]
      %v285 = vld [vmem:[%s270 + $0x38] sm:$0xf]
      %v286 = vld [vmem:[%s270 + $0x3c] sm:$0xf]
      %v295 = vunpack.c.l.b16 %v262
      %v296 = vunpack.c.l.b16 %v263
      %v297 = vunpack.c.l.b16 %v264
      %v298 = vunpack.c.l.b16 %v265
      %v299 = vunpack.c.l.b16 %v266
      %v300 = vunpack.c.l.b16 %v267
      %v301 = vunpack.c.l.b16 %v268
      %v302 = vunpack.c.l.b16 %v269
      %v303 = vpack.c.b16 %v296, %v295
      %v304 = vpack.c.b16 %v298, %v297
      %v305 = vpack.c.b16 %v300, %v299
      %v306 = vpack.c.b16 %v302, %v301
      %v327 = vunpack.c.l.b16 %v271
      %v328 = vunpack.c.l.b16 %v272
      %v329 = vunpack.c.l.b16 %v273
      %v330 = vunpack.c.l.b16 %v274
      %v331 = vunpack.c.l.b16 %v275
      %v332 = vunpack.c.l.b16 %v276
      %v333 = vunpack.c.l.b16 %v277
      %v334 = vunpack.c.l.b16 %v278
      %v335 = vunpack.c.l.b16 %v279
      %v336 = vunpack.c.l.b16 %v280
      %v337 = vunpack.c.l.b16 %v281
      %v338 = vunpack.c.l.b16 %v282
      %v339 = vunpack.c.l.b16 %v283
      %v340 = vunpack.c.l.b16 %v284
      %v341 = vunpack.c.l.b16 %v285
      %v342 = vunpack.c.l.b16 %v286
      %v343 = vpack.c.b16 %v328, %v327
      %v344 = vpack.c.b16 %v330, %v329
      %v345 = vpack.c.b16 %v332, %v331
      %v346 = vpack.c.b16 %v334, %v333
      %v347 = vpack.c.b16 %v336, %v335
      %v348 = vpack.c.b16 %v338, %v337
      %v349 = vpack.c.b16 %v340, %v339
      %v350 = vpack.c.b16 %v342, %v341
      %359 = vmatpush.bf16.msra.mxu0 %v350
      %360 = vmatpush.bf16.msra.mxu0 %v349
      %361 = vmatpush.bf16.msra.mxu0 %v348
      %362 = vmatpush.bf16.msra.mxu0 %v347
      %363 = vmatpush.bf16.msra.mxu0 %v346
      %364 = vmatpush.bf16.msra.mxu0 %v345
      %365 = vmatpush.bf16.msra.mxu0 %v344
      %366 = vmatpush.bf16.msra.mxu0 %v343
      %367 = vmatmul.bf16.gmra.mxu0 %v303
      %v368 = vpop.f32.mrf.mxu0
      %v369 = vadd.f32 0.0, %v368
      %v370 = vpop.f32.mrf.mxu0
      %v371 = vadd.f32 0.0, %v370
      %372 = vmatmul.bf16.gmra.mxu0 %v304
      %v373 = vpop.f32.mrf.mxu0
      %v374 = vadd.f32 0.0, %v373
      %v375 = vpop.f32.mrf.mxu0
      %v376 = vadd.f32 0.0, %v375
      %377 = vmatmul.bf16.gmra.mxu0 %v305
      %v378 = vpop.f32.mrf.mxu0
      %v379 = vadd.f32 0.0, %v378
      %v380 = vpop.f32.mrf.mxu0
      %v381 = vadd.f32 0.0, %v380
      %382 = vmatmul.bf16.gmra.mxu0 %v306
      %v383 = vpop.f32.mrf.mxu0
      %v384 = vadd.f32 0.0, %v383
      %v385 = vpop.f32.mrf.mxu0
      %v386 = vadd.f32 0.0, %v385
      %387 = vdwg.mxu0
      %v396 = vunpack.c.l.b16 %v230
      %v397 = vunpack.c.l.b16 %v231
      %v398 = vunpack.c.l.b16 %v232
      %v399 = vunpack.c.l.b16 %v233
      %v400 = vunpack.c.l.b16 %v234
      %v401 = vunpack.c.l.b16 %v235
      %v402 = vunpack.c.l.b16 %v236
      %v403 = vunpack.c.l.b16 %v237
      %v404 = vpack.c.b16 %v397, %v396
      %v405 = vpack.c.b16 %v399, %v398
      %v406 = vpack.c.b16 %v401, %v400
      %v407 = vpack.c.b16 %v403, %v402
      %v428 = vunpack.c.l.b16 %v238
      %v429 = vunpack.c.l.b16 %v239
      %v430 = vunpack.c.l.b16 %v240
      %v431 = vunpack.c.l.b16 %v241
      %v432 = vunpack.c.l.b16 %v242
      %v433 = vunpack.c.l.b16 %v243
      %v434 = vunpack.c.l.b16 %v244
      %v435 = vunpack.c.l.b16 %v245
      %v436 = vunpack.c.l.b16 %v246
      %v437 = vunpack.c.l.b16 %v247
      %v438 = vunpack.c.l.b16 %v248
      %v439 = vunpack.c.l.b16 %v249
      %v440 = vunpack.c.l.b16 %v250
      %v441 = vunpack.c.l.b16 %v251
      %v442 = vunpack.c.l.b16 %v252
      %v443 = vunpack.c.l.b16 %v253
      %v444 = vpack.c.b16 %v429, %v428
      %v445 = vpack.c.b16 %v431, %v430
      %v446 = vpack.c.b16 %v433, %v432
      %v447 = vpack.c.b16 %v435, %v434
      %v448 = vpack.c.b16 %v437, %v436
      %v449 = vpack.c.b16 %v439, %v438
      %v450 = vpack.c.b16 %v441, %v440
      %v451 = vpack.c.b16 %v443, %v442
      %460 = vmatpush.bf16.msra.mxu0 %v451
      %461 = vmatpush.bf16.msra.mxu0 %v450
      %462 = vmatpush.bf16.msra.mxu0 %v449
      %463 = vmatpush.bf16.msra.mxu0 %v448
      %464 = vmatpush.bf16.msra.mxu0 %v447
      %465 = vmatpush.bf16.msra.mxu0 %v446
      %466 = vmatpush.bf16.msra.mxu0 %v445
      %467 = vmatpush.bf16.msra.mxu0 %v444
      %468 = vmatmul.bf16.gmra.mxu0 %v404
      %v469 = vpop.f32.mrf.mxu0
      %v470 = vadd.f32 %v369, %v469
      %v471 = vpop.f32.mrf.mxu0
      %v472 = vadd.f32 %v371, %v471
      %473 = vmatmul.bf16.gmra.mxu0 %v405
      %v474 = vpop.f32.mrf.mxu0
      %v475 = vadd.f32 %v374, %v474
      %v476 = vpop.f32.mrf.mxu0
      %v477 = vadd.f32 %v376, %v476
      %478 = vmatmul.bf16.gmra.mxu0 %v406
      %v479 = vpop.f32.mrf.mxu0
      %v480 = vadd.f32 %v379, %v479
      %v481 = vpop.f32.mrf.mxu0
      %v482 = vadd.f32 %v381, %v481
      %483 = vmatmul.bf16.gmra.mxu0 %v407
      %v484 = vpop.f32.mrf.mxu0
      %v485 = vadd.f32 %v384, %v484
      %v486 = vpop.f32.mrf.mxu0
      %v487 = vadd.f32 %v386, %v486
      %488 = vdwg.mxu0
      %v489 = vld [vmem:[%s206 + $0x2] sm:$0xff]
      %v490 = vld [vmem:[%s206 + $0x12] sm:$0xff]
      %v491 = vld [vmem:[%s206 + $0x22] sm:$0xff]
      %v492 = vld [vmem:[%s206 + $0x32] sm:$0xff]
      %v493 = vld [vmem:[%s206 + $0x42] sm:$0xff]
      %v494 = vld [vmem:[%s206 + $0x52] sm:$0xff]
      %v495 = vld [vmem:[%s206 + $0x62] sm:$0xff]
      %v496 = vld [vmem:[%s206 + $0x72] sm:$0xff]
      %v497 = vpack.c.bf16 %v489, %v489
      %v498 = vpack.c.bf16 %v490, %v490
      %v499 = vpack.c.bf16 %v491, %v491
      %v500 = vpack.c.bf16 %v492, %v492
      %v501 = vpack.c.bf16 %v493, %v493
      %v502 = vpack.c.bf16 %v494, %v494
      %v503 = vpack.c.bf16 %v495, %v495
      %v504 = vpack.c.bf16 %v496, %v496
      %s505 = scalar_lea.vmem %s210, 128
      %v506 = vld [vmem:[%s505] sm:$0xf]
      %v507 = vld [vmem:[%s505 + $0x4] sm:$0xf]
      %v508 = vld [vmem:[%s505 + $0x8] sm:$0xf]
      %v509 = vld [vmem:[%s505 + $0xc] sm:$0xf]
      %v510 = vld [vmem:[%s505 + $0x10] sm:$0xf]
      %v511 = vld [vmem:[%s505 + $0x14] sm:$0xf]
      %v512 = vld [vmem:[%s505 + $0x18] sm:$0xf]
      %v513 = vld [vmem:[%s505 + $0x1c] sm:$0xf]
      %v514 = vld [vmem:[%s505 + $0x20] sm:$0xf]
      %v515 = vld [vmem:[%s505 + $0x24] sm:$0xf]
      %v516 = vld [vmem:[%s505 + $0x28] sm:$0xf]
      %v517 = vld [vmem:[%s505 + $0x2c] sm:$0xf]
      %v518 = vld [vmem:[%s505 + $0x30] sm:$0xf]
      %v519 = vld [vmem:[%s505 + $0x34] sm:$0xf]
      %v520 = vld [vmem:[%s505 + $0x38] sm:$0xf]
      %v521 = vld [vmem:[%s505 + $0x3c] sm:$0xf]
      %v530 = vunpack.c.l.b16 %v497
      %v531 = vunpack.c.l.b16 %v498
      %v532 = vunpack.c.l.b16 %v499
      %v533 = vunpack.c.l.b16 %v500
      %v534 = vunpack.c.l.b16 %v501
      %v535 = vunpack.c.l.b16 %v502
      %v536 = vunpack.c.l.b16 %v503
      %v537 = vunpack.c.l.b16 %v504
      %v538 = vpack.c.b16 %v531, %v530
      %v539 = vpack.c.b16 %v533, %v532
      %v540 = vpack.c.b16 %v535, %v534
      %v541 = vpack.c.b16 %v537, %v536
      %v562 = vunpack.c.l.b16 %v506
      %v563 = vunpack.c.l.b16 %v507
      %v564 = vunpack.c.l.b16 %v508
      %v565 = vunpack.c.l.b16 %v509
      %v566 = vunpack.c.l.b16 %v510
      %v567 = vunpack.c.l.b16 %v511
      %v568 = vunpack.c.l.b16 %v512
      %v569 = vunpack.c.l.b16 %v513
      %v570 = vunpack.c.l.b16 %v514
      %v571 = vunpack.c.l.b16 %v515
      %v572 = vunpack.c.l.b16 %v516
      %v573 = vunpack.c.l.b16 %v517
      %v574 = vunpack.c.l.b16 %v518
      %v575 = vunpack.c.l.b16 %v519
      %v576 = vunpack.c.l.b16 %v520
      %v577 = vunpack.c.l.b16 %v521
      %v578 = vpack.c.b16 %v563, %v562
      %v579 = vpack.c.b16 %v565, %v564
      %v580 = vpack.c.b16 %v567, %v566
      %v581 = vpack.c.b16 %v569, %v568
      %v582 = vpack.c.b16 %v571, %v570
      %v583 = vpack.c.b16 %v573, %v572
      %v584 = vpack.c.b16 %v575, %v574
      %v585 = vpack.c.b16 %v577, %v576
      %594 = vmatpush.bf16.msra.mxu0 %v585
      %595 = vmatpush.bf16.msra.mxu0 %v584
      %596 = vmatpush.bf16.msra.mxu0 %v583
      %597 = vmatpush.bf16.msra.mxu0 %v582
      %598 = vmatpush.bf16.msra.mxu0 %v581
      %599 = vmatpush.bf16.msra.mxu0 %v580
      %600 = vmatpush.bf16.msra.mxu0 %v579
      %601 = vmatpush.bf16.msra.mxu0 %v578
      %602 = vmatmul.bf16.gmra.mxu0 %v538
      %v603 = vpop.f32.mrf.mxu0
      %v604 = vadd.f32 0.0, %v603
      %v605 = vpop.f32.mrf.mxu0
      %v606 = vadd.f32 0.0, %v605
      %607 = vmatmul.bf16.gmra.mxu0 %v539
      %v608 = vpop.f32.mrf.mxu0
      %v609 = vadd.f32 0.0, %v608
      %v610 = vpop.f32.mrf.mxu0
      %v611 = vadd.f32 0.0, %v610
      %612 = vmatmul.bf16.gmra.mxu0 %v540
      %v613 = vpop.f32.mrf.mxu0
      %v614 = vadd.f32 0.0, %v613
      %v615 = vpop.f32.mrf.mxu0
      %v616 = vadd.f32 0.0, %v615
      %617 = vmatmul.bf16.gmra.mxu0 %v541
      %v618 = vpop.f32.mrf.mxu0
      %v619 = vadd.f32 0.0, %v618
      %v620 = vpop.f32.mrf.mxu0
      %v621 = vadd.f32 0.0, %v620
      %622 = vdwg.mxu0
      %v623 = vadd.f32 %v470, %v604
      %v624 = vadd.f32 %v472, %v606
      %v625 = vadd.f32 %v475, %v609
      %v626 = vadd.f32 %v477, %v611
      %v627 = vadd.f32 %v480, %v614
      %v628 = vadd.f32 %v482, %v616
      %v629 = vadd.f32 %v485, %v619
      %v630 = vadd.f32 %v487, %v621
      %s631 = scalar_lea.vmem %s206, 16
      %v632 = vld [vmem:[%s631] sm:$0xff]
      %v633 = vld [vmem:[%s631 + $0x10] sm:$0xff]
      %v634 = vld [vmem:[%s631 + $0x20] sm:$0xff]
      %v635 = vld [vmem:[%s631 + $0x30] sm:$0xff]
      %v636 = vld [vmem:[%s631 + $0x40] sm:$0xff]
      %v637 = vld [vmem:[%s631 + $0x50] sm:$0xff]
      %v638 = vld [vmem:[%s631 + $0x60] sm:$0xff]
      %v639 = vld [vmem:[%s631 + $0x70] sm:$0xff]
      %v640 = vpack.c.bf16 %v632, %v632
      %v641 = vpack.c.bf16 %v633, %v633
      %v642 = vpack.c.bf16 %v634, %v634
      %v643 = vpack.c.bf16 %v635, %v635
      %v644 = vpack.c.bf16 %v636, %v636
      %v645 = vpack.c.bf16 %v637, %v637
      %v646 = vpack.c.bf16 %v638, %v638
      %v647 = vpack.c.bf16 %v639, %v639
      %s648 = scalar_lea.vmem %s210, 192
      %v649 = vld [vmem:[%s648] sm:$0xf]
      %v650 = vld [vmem:[%s648 + $0x4] sm:$0xf]
      %v651 = vld [vmem:[%s648 + $0x8] sm:$0xf]
      %v652 = vld [vmem:[%s648 + $0xc] sm:$0xf]
      %v653 = vld [vmem:[%s648 + $0x10] sm:$0xf]
      %v654 = vld [vmem:[%s648 + $0x14] sm:$0xf]
      %v655 = vld [vmem:[%s648 + $0x18] sm:$0xf]
      %v656 = vld [vmem:[%s648 + $0x1c] sm:$0xf]
      %v657 = vld [vmem:[%s648 + $0x20] sm:$0xf]
      %v658 = vld [vmem:[%s648 + $0x24] sm:$0xf]
      %v659 = vld [vmem:[%s648 + $0x28] sm:$0xf]
      %v660 = vld [vmem:[%s648 + $0x2c] sm:$0xf]
      %v661 = vld [vmem:[%s648 + $0x30] sm:$0xf]
      %v662 = vld [vmem:[%s648 + $0x34] sm:$0xf]
      %v663 = vld [vmem:[%s648 + $0x38] sm:$0xf]
      %v664 = vld [vmem:[%s648 + $0x3c] sm:$0xf]
      %v673 = vunpack.c.l.b16 %v640
      %v674 = vunpack.c.l.b16 %v641
      %v675 = vunpack.c.l.b16 %v642
      %v676 = vunpack.c.l.b16 %v643
      %v677 = vunpack.c.l.b16 %v644
      %v678 = vunpack.c.l.b16 %v645
      %v679 = vunpack.c.l.b16 %v646
      %v680 = vunpack.c.l.b16 %v647
      %v681 = vpack.c.b16 %v674, %v673
      %v682 = vpack.c.b16 %v676, %v675
      %v683 = vpack.c.b16 %v678, %v677
      %v684 = vpack.c.b16 %v680, %v679
      %v705 = vunpack.c.l.b16 %v649
      %v706 = vunpack.c.l.b16 %v650
      %v707 = vunpack.c.l.b16 %v651
      %v708 = vunpack.c.l.b16 %v652
      %v709 = vunpack.c.l.b16 %v653
      %v710 = vunpack.c.l.b16 %v654
      %v711 = vunpack.c.l.b16 %v655
      %v712 = vunpack.c.l.b16 %v656
      %v713 = vunpack.c.l.b16 %v657
      %v714 = vunpack.c.l.b16 %v658
      %v715 = vunpack.c.l.b16 %v659
      %v716 = vunpack.c.l.b16 %v660
      %v717 = vunpack.c.l.b16 %v661
      %v718 = vunpack.c.l.b16 %v662
      %v719 = vunpack.c.l.b16 %v663
      %v720 = vunpack.c.l.b16 %v664
      %v721 = vpack.c.b16 %v706, %v705
      %v722 = vpack.c.b16 %v708, %v707
      %v723 = vpack.c.b16 %v710, %v709
      %v724 = vpack.c.b16 %v712, %v711
      %v725 = vpack.c.b16 %v714, %v713
      %v726 = vpack.c.b16 %v716, %v715
      %v727 = vpack.c.b16 %v718, %v717
      %v728 = vpack.c.b16 %v720, %v719
      %737 = vmatpush.bf16.msra.mxu0 %v728
      %738 = vmatpush.bf16.msra.mxu0 %v727
      %739 = vmatpush.bf16.msra.mxu0 %v726
      %740 = vmatpush.bf16.msra.mxu0 %v725
      %741 = vmatpush.bf16.msra.mxu0 %v724
      %742 = vmatpush.bf16.msra.mxu0 %v723
      %743 = vmatpush.bf16.msra.mxu0 %v722
      %744 = vmatpush.bf16.msra.mxu0 %v721
      %745 = vmatmul.bf16.gmra.mxu0 %v681
      %v746 = vpop.f32.mrf.mxu0
      %v747 = vadd.f32 0.0, %v746
      %v748 = vpop.f32.mrf.mxu0
      %v749 = vadd.f32 0.0, %v748
      %750 = vmatmul.bf16.gmra.mxu0 %v682
      %v751 = vpop.f32.mrf.mxu0
      %v752 = vadd.f32 0.0, %v751
      %v753 = vpop.f32.mrf.mxu0
      %v754 = vadd.f32 0.0, %v753
      %755 = vmatmul.bf16.gmra.mxu0 %v683
      %v756 = vpop.f32.mrf.mxu0
      %v757 = vadd.f32 0.0, %v756
      %v758 = vpop.f32.mrf.mxu0
      %v759 = vadd.f32 0.0, %v758
      %760 = vmatmul.bf16.gmra.mxu0 %v684
      %v761 = vpop.f32.mrf.mxu0
      %v762 = vadd.f32 0.0, %v761
      %v763 = vpop.f32.mrf.mxu0
      %v764 = vadd.f32 0.0, %v763
      %765 = vdwg.mxu0
      %v766 = vadd.f32 %v623, %v747
      %v767 = vadd.f32 %v624, %v749
      %v768 = vadd.f32 %v625, %v752
      %v769 = vadd.f32 %v626, %v754
      %v770 = vadd.f32 %v627, %v757
      %v771 = vadd.f32 %v628, %v759
      %v772 = vadd.f32 %v629, %v762
      %v773 = vadd.f32 %v630, %v764
      %v774 = vld [vmem:[%s631 + $0x1] sm:$0xff]
      %v775 = vld [vmem:[%s631 + $0x11] sm:$0xff]
      %v776 = vld [vmem:[%s631 + $0x21] sm:$0xff]
      %v777 = vld [vmem:[%s631 + $0x31] sm:$0xff]
      %v778 = vld [vmem:[%s631 + $0x41] sm:$0xff]
      %v779 = vld [vmem:[%s631 + $0x51] sm:$0xff]
      %v780 = vld [vmem:[%s631 + $0x61] sm:$0xff]
      %v781 = vld [vmem:[%s631 + $0x71] sm:$0xff]
      %v782 = vpack.c.bf16 %v774, %v774
      %v783 = vpack.c.bf16 %v775, %v775
      %v784 = vpack.c.bf16 %v776, %v776
      %v785 = vpack.c.bf16 %v777, %v777
      %v786 = vpack.c.bf16 %v778, %v778
      %v787 = vpack.c.bf16 %v779, %v779
      %v788 = vpack.c.bf16 %v780, %v780
      %v789 = vpack.c.bf16 %v781, %v781
      %s790 = scalar_lea.vmem %s210, 256
      %v791 = vld [vmem:[%s790] sm:$0xf]
      %v792 = vld [vmem:[%s790 + $0x4] sm:$0xf]
      %v793 = vld [vmem:[%s790 + $0x8] sm:$0xf]
      %v794 = vld [vmem:[%s790 + $0xc] sm:$0xf]
      %v795 = vld [vmem:[%s790 + $0x10] sm:$0xf]
      %v796 = vld [vmem:[%s790 + $0x14] sm:$0xf]
      %v797 = vld [vmem:[%s790 + $0x18] sm:$0xf]
      %v798 = vld [vmem:[%s790 + $0x1c] sm:$0xf]
      %v799 = vld [vmem:[%s790 + $0x20] sm:$0xf]
      %v800 = vld [vmem:[%s790 + $0x24] sm:$0xf]
      %v801 = vld [vmem:[%s790 + $0x28] sm:$0xf]
      %v802 = vld [vmem:[%s790 + $0x2c] sm:$0xf]
      %v803 = vld [vmem:[%s790 + $0x30] sm:$0xf]
      %v804 = vld [vmem:[%s790 + $0x34] sm:$0xf]
      %v805 = vld [vmem:[%s790 + $0x38] sm:$0xf]
      %v806 = vld [vmem:[%s790 + $0x3c] sm:$0xf]
      %v815 = vunpack.c.l.b16 %v782
      %v816 = vunpack.c.l.b16 %v783
      %v817 = vunpack.c.l.b16 %v784
      %v818 = vunpack.c.l.b16 %v785
      %v819 = vunpack.c.l.b16 %v786
      %v820 = vunpack.c.l.b16 %v787
      %v821 = vunpack.c.l.b16 %v788
      %v822 = vunpack.c.l.b16 %v789
      %v823 = vpack.c.b16 %v816, %v815
      %v824 = vpack.c.b16 %v818, %v817
      %v825 = vpack.c.b16 %v820, %v819
      %v826 = vpack.c.b16 %v822, %v821
      %v847 = vunpack.c.l.b16 %v791
      %v848 = vunpack.c.l.b16 %v792
      %v849 = vunpack.c.l.b16 %v793
      %v850 = vunpack.c.l.b16 %v794
      %v851 = vunpack.c.l.b16 %v795
      %v852 = vunpack.c.l.b16 %v796
      %v853 = vunpack.c.l.b16 %v797
      %v854 = vunpack.c.l.b16 %v798
      %v855 = vunpack.c.l.b16 %v799
      %v856 = vunpack.c.l.b16 %v800
      %v857 = vunpack.c.l.b16 %v801
      %v858 = vunpack.c.l.b16 %v802
      %v859 = vunpack.c.l.b16 %v803
      %v860 = vunpack.c.l.b16 %v804
      %v861 = vunpack.c.l.b16 %v805
      %v862 = vunpack.c.l.b16 %v806
      %v863 = vpack.c.b16 %v848, %v847
      %v864 = vpack.c.b16 %v850, %v849
      %v865 = vpack.c.b16 %v852, %v851
      %v866 = vpack.c.b16 %v854, %v853
      %v867 = vpack.c.b16 %v856, %v855
      %v868 = vpack.c.b16 %v858, %v857
      %v869 = vpack.c.b16 %v860, %v859
      %v870 = vpack.c.b16 %v862, %v861
      %879 = vmatpush.bf16.msra.mxu0 %v870
      %880 = vmatpush.bf16.msra.mxu0 %v869
      %881 = vmatpush.bf16.msra.mxu0 %v868
      %882 = vmatpush.bf16.msra.mxu0 %v867
      %883 = vmatpush.bf16.msra.mxu0 %v866
      %884 = vmatpush.bf16.msra.mxu0 %v865
      %885 = vmatpush.bf16.msra.mxu0 %v864
      %886 = vmatpush.bf16.msra.mxu0 %v863
      %887 = vmatmul.bf16.gmra.mxu0 %v823
      %v888 = vpop.f32.mrf.mxu0
      %v889 = vadd.f32 0.0, %v888
      %v890 = vpop.f32.mrf.mxu0
      %v891 = vadd.f32 0.0, %v890
      %892 = vmatmul.bf16.gmra.mxu0 %v824
      %v893 = vpop.f32.mrf.mxu0
      %v894 = vadd.f32 0.0, %v893
      %v895 = vpop.f32.mrf.mxu0
      %v896 = vadd.f32 0.0, %v895
      %897 = vmatmul.bf16.gmra.mxu0 %v825
      %v898 = vpop.f32.mrf.mxu0
      %v899 = vadd.f32 0.0, %v898
      %v900 = vpop.f32.mrf.mxu0
      %v901 = vadd.f32 0.0, %v900
      %902 = vmatmul.bf16.gmra.mxu0 %v826
      %v903 = vpop.f32.mrf.mxu0
      %v904 = vadd.f32 0.0, %v903
      %v905 = vpop.f32.mrf.mxu0
      %v906 = vadd.f32 0.0, %v905
      %907 = vdwg.mxu0
      %v908 = vadd.f32 %v766, %v889
      %v909 = vadd.f32 %v767, %v891
      %v910 = vadd.f32 %v768, %v894
      %v911 = vadd.f32 %v769, %v896
      %v912 = vadd.f32 %v770, %v899
      %v913 = vadd.f32 %v771, %v901
      %v914 = vadd.f32 %v772, %v904
      %v915 = vadd.f32 %v773, %v906
      %v916 = vld [vmem:[%s631 + $0x2] sm:$0xff]
      %v917 = vld [vmem:[%s631 + $0x12] sm:$0xff]
      %v918 = vld [vmem:[%s631 + $0x22] sm:$0xff]
      %v919 = vld [vmem:[%s631 + $0x32] sm:$0xff]
      %v920 = vld [vmem:[%s631 + $0x42] sm:$0xff]
      %v921 = vld [vmem:[%s631 + $0x52] sm:$0xff]
      %v922 = vld [vmem:[%s631 + $0x62] sm:$0xff]
      %v923 = vld [vmem:[%s631 + $0x72] sm:$0xff]
      %v924 = vpack.c.bf16 %v916, %v916
      %v925 = vpack.c.bf16 %v917, %v917
      %v926 = vpack.c.bf16 %v918, %v918
      %v927 = vpack.c.bf16 %v919, %v919
      %v928 = vpack.c.bf16 %v920, %v920
      %v929 = vpack.c.bf16 %v921, %v921
      %v930 = vpack.c.bf16 %v922, %v922
      %v931 = vpack.c.bf16 %v923, %v923
      %s932 = scalar_lea.vmem %s210, 320
      %v933 = vld [vmem:[%s932] sm:$0xf]
      %v934 = vld [vmem:[%s932 + $0x4] sm:$0xf]
      %v935 = vld [vmem:[%s932 + $0x8] sm:$0xf]
      %v936 = vld [vmem:[%s932 + $0xc] sm:$0xf]
      %v937 = vld [vmem:[%s932 + $0x10] sm:$0xf]
      %v938 = vld [vmem:[%s932 + $0x14] sm:$0xf]
      %v939 = vld [vmem:[%s932 + $0x18] sm:$0xf]
      %v940 = vld [vmem:[%s932 + $0x1c] sm:$0xf]
      %v941 = vld [vmem:[%s932 + $0x20] sm:$0xf]
      %v942 = vld [vmem:[%s932 + $0x24] sm:$0xf]
      %v943 = vld [vmem:[%s932 + $0x28] sm:$0xf]
      %v944 = vld [vmem:[%s932 + $0x2c] sm:$0xf]
      %v945 = vld [vmem:[%s932 + $0x30] sm:$0xf]
      %v946 = vld [vmem:[%s932 + $0x34] sm:$0xf]
      %v947 = vld [vmem:[%s932 + $0x38] sm:$0xf]
      %v948 = vld [vmem:[%s932 + $0x3c] sm:$0xf]
      %v957 = vunpack.c.l.b16 %v924
      %v958 = vunpack.c.l.b16 %v925
      %v959 = vunpack.c.l.b16 %v926
      %v960 = vunpack.c.l.b16 %v927
      %v961 = vunpack.c.l.b16 %v928
      %v962 = vunpack.c.l.b16 %v929
      %v963 = vunpack.c.l.b16 %v930
      %v964 = vunpack.c.l.b16 %v931
      %v965 = vpack.c.b16 %v958, %v957
      %v966 = vpack.c.b16 %v960, %v959
      %v967 = vpack.c.b16 %v962, %v961
      %v968 = vpack.c.b16 %v964, %v963
      %v989 = vunpack.c.l.b16 %v933
      %v990 = vunpack.c.l.b16 %v934
      %v991 = vunpack.c.l.b16 %v935
      %v992 = vunpack.c.l.b16 %v936
      %v993 = vunpack.c.l.b16 %v937
      %v994 = vunpack.c.l.b16 %v938
      %v995 = vunpack.c.l.b16 %v939
      %v996 = vunpack.c.l.b16 %v940
      %v997 = vunpack.c.l.b16 %v941
      %v998 = vunpack.c.l.b16 %v942
      %v999 = vunpack.c.l.b16 %v943
      %v1000 = vunpack.c.l.b16 %v944
      %v1001 = vunpack.c.l.b16 %v945
      %v1002 = vunpack.c.l.b16 %v946
      %v1003 = vunpack.c.l.b16 %v947
      %v1004 = vunpack.c.l.b16 %v948
      %v1005 = vpack.c.b16 %v990, %v989
      %v1006 = vpack.c.b16 %v992, %v991
      %v1007 = vpack.c.b16 %v994, %v993
      %v1008 = vpack.c.b16 %v996, %v995
      %v1009 = vpack.c.b16 %v998, %v997
      %v1010 = vpack.c.b16 %v1000, %v999
      %v1011 = vpack.c.b16 %v1002, %v1001
      %v1012 = vpack.c.b16 %v1004, %v1003
      %1021 = vmatpush.bf16.msra.mxu0 %v1012
      %1022 = vmatpush.bf16.msra.mxu0 %v1011
      %1023 = vmatpush.bf16.msra.mxu0 %v1010
      %1024 = vmatpush.bf16.msra.mxu0 %v1009
      %1025 = vmatpush.bf16.msra.mxu0 %v1008
      %1026 = vmatpush.bf16.msra.mxu0 %v1007
      %1027 = vmatpush.bf16.msra.mxu0 %v1006
      %1028 = vmatpush.bf16.msra.mxu0 %v1005
      %1029 = vmatmul.bf16.gmra.mxu0 %v965
      %v1030 = vpop.f32.mrf.mxu0
      %v1031 = vadd.f32 0.0, %v1030
      %v1032 = vpop.f32.mrf.mxu0
      %v1033 = vadd.f32 0.0, %v1032
      %1034 = vmatmul.bf16.gmra.mxu0 %v966
      %v1035 = vpop.f32.mrf.mxu0
      %v1036 = vadd.f32 0.0, %v1035
      %v1037 = vpop.f32.mrf.mxu0
      %v1038 = vadd.f32 0.0, %v1037
      %1039 = vmatmul.bf16.gmra.mxu0 %v967
      %v1040 = vpop.f32.mrf.mxu0
      %v1041 = vadd.f32 0.0, %v1040
      %v1042 = vpop.f32.mrf.mxu0
      %v1043 = vadd.f32 0.0, %v1042
      %1044 = vmatmul.bf16.gmra.mxu0 %v968
      %v1045 = vpop.f32.mrf.mxu0
      %v1046 = vadd.f32 0.0, %v1045
      %v1047 = vpop.f32.mrf.mxu0
      %v1048 = vadd.f32 0.0, %v1047
      %1049 = vdwg.mxu0
      %v1050 = vadd.f32 %v908, %v1031
      %v1051 = vadd.f32 %v909, %v1033
      %v1052 = vadd.f32 %v910, %v1036
      %v1053 = vadd.f32 %v911, %v1038
      %v1054 = vadd.f32 %v912, %v1041
      %v1055 = vadd.f32 %v913, %v1043
      %v1056 = vadd.f32 %v914, %v1046
      %v1057 = vadd.f32 %v915, %v1048
      %s1058 = scalar_lea.vmem %s206, 32
      %v1059 = vld [vmem:[%s1058] sm:$0xff]
      %v1060 = vld [vmem:[%s1058 + $0x10] sm:$0xff]
      %v1061 = vld [vmem:[%s1058 + $0x20] sm:$0xff]
      %v1062 = vld [vmem:[%s1058 + $0x30] sm:$0xff]
      %v1063 = vld [vmem:[%s1058 + $0x40] sm:$0xff]
      %v1064 = vld [vmem:[%s1058 + $0x50] sm:$0xff]
      %v1065 = vld [vmem:[%s1058 + $0x60] sm:$0xff]
      %v1066 = vld [vmem:[%s1058 + $0x70] sm:$0xff]
      %v1067 = vpack.c.bf16 %v1059, %v1059
      %v1068 = vpack.c.bf16 %v1060, %v1060
      %v1069 = vpack.c.bf16 %v1061, %v1061
      %v1070 = vpack.c.bf16 %v1062, %v1062
      %v1071 = vpack.c.bf16 %v1063, %v1063
      %v1072 = vpack.c.bf16 %v1064, %v1064
      %v1073 = vpack.c.bf16 %v1065, %v1065
      %v1074 = vpack.c.bf16 %v1066, %v1066
      %s1075 = scalar_lea.vmem %s210, 384
      %v1076 = vld [vmem:[%s1075] sm:$0xf]
      %v1077 = vld [vmem:[%s1075 + $0x4] sm:$0xf]
      %v1078 = vld [vmem:[%s1075 + $0x8] sm:$0xf]
      %v1079 = vld [vmem:[%s1075 + $0xc] sm:$0xf]
      %v1080 = vld [vmem:[%s1075 + $0x10] sm:$0xf]
      %v1081 = vld [vmem:[%s1075 + $0x14] sm:$0xf]
      %v1082 = vld [vmem:[%s1075 + $0x18] sm:$0xf]
      %v1083 = vld [vmem:[%s1075 + $0x1c] sm:$0xf]
      %v1084 = vld [vmem:[%s1075 + $0x20] sm:$0xf]
      %v1085 = vld [vmem:[%s1075 + $0x24] sm:$0xf]
      %v1086 = vld [vmem:[%s1075 + $0x28] sm:$0xf]
      %v1087 = vld [vmem:[%s1075 + $0x2c] sm:$0xf]
      %v1088 = vld [vmem:[%s1075 + $0x30] sm:$0xf]
      %v1089 = vld [vmem:[%s1075 + $0x34] sm:$0xf]
      %v1090 = vld [vmem:[%s1075 + $0x38] sm:$0xf]
      %v1091 = vld [vmem:[%s1075 + $0x3c] sm:$0xf]
      %v1100 = vunpack.c.l.b16 %v1067
      %v1101 = vunpack.c.l.b16 %v1068
      %v1102 = vunpack.c.l.b16 %v1069
      %v1103 = vunpack.c.l.b16 %v1070
      %v1104 = vunpack.c.l.b16 %v1071
      %v1105 = vunpack.c.l.b16 %v1072
      %v1106 = vunpack.c.l.b16 %v1073
      %v1107 = vunpack.c.l.b16 %v1074
      %v1108 = vpack.c.b16 %v1101, %v1100
      %v1109 = vpack.c.b16 %v1103, %v1102
      %v1110 = vpack.c.b16 %v1105, %v1104
      %v1111 = vpack.c.b16 %v1107, %v1106
      %v1132 = vunpack.c.l.b16 %v1076
      %v1133 = vunpack.c.l.b16 %v1077
      %v1134 = vunpack.c.l.b16 %v1078
      %v1135 = vunpack.c.l.b16 %v1079
      %v1136 = vunpack.c.l.b16 %v1080
      %v1137 = vunpack.c.l.b16 %v1081
      %v1138 = vunpack.c.l.b16 %v1082
      %v1139 = vunpack.c.l.b16 %v1083
      %v1140 = vunpack.c.l.b16 %v1084
      %v1141 = vunpack.c.l.b16 %v1085
      %v1142 = vunpack.c.l.b16 %v1086
      %v1143 = vunpack.c.l.b16 %v1087
      %v1144 = vunpack.c.l.b16 %v1088
      %v1145 = vunpack.c.l.b16 %v1089
      %v1146 = vunpack.c.l.b16 %v1090
      %v1147 = vunpack.c.l.b16 %v1091
      %v1148 = vpack.c.b16 %v1133, %v1132
      %v1149 = vpack.c.b16 %v1135, %v1134
      %v1150 = vpack.c.b16 %v1137, %v1136
      %v1151 = vpack.c.b16 %v1139, %v1138
      %v1152 = vpack.c.b16 %v1141, %v1140
      %v1153 = vpack.c.b16 %v1143, %v1142
      %v1154 = vpack.c.b16 %v1145, %v1144
      %v1155 = vpack.c.b16 %v1147, %v1146
      %1164 = vmatpush.bf16.msra.mxu0 %v1155
      %1165 = vmatpush.bf16.msra.mxu0 %v1154
      %1166 = vmatpush.bf16.msra.mxu0 %v1153
      %1167 = vmatpush.bf16.msra.mxu0 %v1152
      %1168 = vmatpush.bf16.msra.mxu0 %v1151
      %1169 = vmatpush.bf16.msra.mxu0 %v1150
      %1170 = vmatpush.bf16.msra.mxu0 %v1149
      %1171 = vmatpush.bf16.msra.mxu0 %v1148
      %1172 = vmatmul.bf16.gmra.mxu0 %v1108
      %v1173 = vpop.f32.mrf.mxu0
      %v1174 = vadd.f32 0.0, %v1173
      %v1175 = vpop.f32.mrf.mxu0
      %v1176 = vadd.f32 0.0, %v1175
      %1177 = vmatmul.bf16.gmra.mxu0 %v1109
      %v1178 = vpop.f32.mrf.mxu0
      %v1179 = vadd.f32 0.0, %v1178
      %v1180 = vpop.f32.mrf.mxu0
      %v1181 = vadd.f32 0.0, %v1180
      %1182 = vmatmul.bf16.gmra.mxu0 %v1110
      %v1183 = vpop.f32.mrf.mxu0
      %v1184 = vadd.f32 0.0, %v1183
      %v1185 = vpop.f32.mrf.mxu0
      %v1186 = vadd.f32 0.0, %v1185
      %1187 = vmatmul.bf16.gmra.mxu0 %v1111
      %v1188 = vpop.f32.mrf.mxu0
      %v1189 = vadd.f32 0.0, %v1188
      %v1190 = vpop.f32.mrf.mxu0
      %v1191 = vadd.f32 0.0, %v1190
      %1192 = vdwg.mxu0
      %v1193 = vadd.f32 %v1050, %v1174
      %v1194 = vadd.f32 %v1051, %v1176
      %v1195 = vadd.f32 %v1052, %v1179
      %v1196 = vadd.f32 %v1053, %v1181
      %v1197 = vadd.f32 %v1054, %v1184
      %v1198 = vadd.f32 %v1055, %v1186
      %v1199 = vadd.f32 %v1056, %v1189
      %v1200 = vadd.f32 %v1057, %v1191
      %v1201 = vld [vmem:[%s1058 + $0x1] sm:$0xff]
      %v1202 = vld [vmem:[%s1058 + $0x11] sm:$0xff]
      %v1203 = vld [vmem:[%s1058 + $0x21] sm:$0xff]
      %v1204 = vld [vmem:[%s1058 + $0x31] sm:$0xff]
      %v1205 = vld [vmem:[%s1058 + $0x41] sm:$0xff]
      %v1206 = vld [vmem:[%s1058 + $0x51] sm:$0xff]
      %v1207 = vld [vmem:[%s1058 + $0x61] sm:$0xff]
      %v1208 = vld [vmem:[%s1058 + $0x71] sm:$0xff]
      %v1209 = vpack.c.bf16 %v1201, %v1201
      %v1210 = vpack.c.bf16 %v1202, %v1202
      %v1211 = vpack.c.bf16 %v1203, %v1203
      %v1212 = vpack.c.bf16 %v1204, %v1204
      %v1213 = vpack.c.bf16 %v1205, %v1205
      %v1214 = vpack.c.bf16 %v1206, %v1206
      %v1215 = vpack.c.bf16 %v1207, %v1207
      %v1216 = vpack.c.bf16 %v1208, %v1208
      %s1217 = scalar_lea.vmem %s210, 448
      %v1218 = vld [vmem:[%s1217] sm:$0xf]
      %v1219 = vld [vmem:[%s1217 + $0x4] sm:$0xf]
      %v1220 = vld [vmem:[%s1217 + $0x8] sm:$0xf]
      %v1221 = vld [vmem:[%s1217 + $0xc] sm:$0xf]
      %v1222 = vld [vmem:[%s1217 + $0x10] sm:$0xf]
      %v1223 = vld [vmem:[%s1217 + $0x14] sm:$0xf]
      %v1224 = vld [vmem:[%s1217 + $0x18] sm:$0xf]
      %v1225 = vld [vmem:[%s1217 + $0x1c] sm:$0xf]
      %v1226 = vld [vmem:[%s1217 + $0x20] sm:$0xf]
      %v1227 = vld [vmem:[%s1217 + $0x24] sm:$0xf]
      %v1228 = vld [vmem:[%s1217 + $0x28] sm:$0xf]
      %v1229 = vld [vmem:[%s1217 + $0x2c] sm:$0xf]
      %v1230 = vld [vmem:[%s1217 + $0x30] sm:$0xf]
      %v1231 = vld [vmem:[%s1217 + $0x34] sm:$0xf]
      %v1232 = vld [vmem:[%s1217 + $0x38] sm:$0xf]
      %v1233 = vld [vmem:[%s1217 + $0x3c] sm:$0xf]
      %v1242 = vunpack.c.l.b16 %v1209
      %v1243 = vunpack.c.l.b16 %v1210
      %v1244 = vunpack.c.l.b16 %v1211
      %v1245 = vunpack.c.l.b16 %v1212
      %v1246 = vunpack.c.l.b16 %v1213
      %v1247 = vunpack.c.l.b16 %v1214
      %v1248 = vunpack.c.l.b16 %v1215
      %v1249 = vunpack.c.l.b16 %v1216
      %v1250 = vpack.c.b16 %v1243, %v1242
      %v1251 = vpack.c.b16 %v1245, %v1244
      %v1252 = vpack.c.b16 %v1247, %v1246
      %v1253 = vpack.c.b16 %v1249, %v1248
      %v1274 = vunpack.c.l.b16 %v1218
      %v1275 = vunpack.c.l.b16 %v1219
      %v1276 = vunpack.c.l.b16 %v1220
      %v1277 = vunpack.c.l.b16 %v1221
      %v1278 = vunpack.c.l.b16 %v1222
      %v1279 = vunpack.c.l.b16 %v1223
      %v1280 = vunpack.c.l.b16 %v1224
      %v1281 = vunpack.c.l.b16 %v1225
      %v1282 = vunpack.c.l.b16 %v1226
      %v1283 = vunpack.c.l.b16 %v1227
      %v1284 = vunpack.c.l.b16 %v1228
      %v1285 = vunpack.c.l.b16 %v1229
      %v1286 = vunpack.c.l.b16 %v1230
      %v1287 = vunpack.c.l.b16 %v1231
      %v1288 = vunpack.c.l.b16 %v1232
      %v1289 = vunpack.c.l.b16 %v1233
      %v1290 = vpack.c.b16 %v1275, %v1274
      %v1291 = vpack.c.b16 %v1277, %v1276
      %v1292 = vpack.c.b16 %v1279, %v1278
      %v1293 = vpack.c.b16 %v1281, %v1280
      %v1294 = vpack.c.b16 %v1283, %v1282
      %v1295 = vpack.c.b16 %v1285, %v1284
      %v1296 = vpack.c.b16 %v1287, %v1286
      %v1297 = vpack.c.b16 %v1289, %v1288
      %1306 = vmatpush.bf16.msra.mxu0 %v1297
      %1307 = vmatpush.bf16.msra.mxu0 %v1296
      %1308 = vmatpush.bf16.msra.mxu0 %v1295
      %1309 = vmatpush.bf16.msra.mxu0 %v1294
      %1310 = vmatpush.bf16.msra.mxu0 %v1293
      %1311 = vmatpush.bf16.msra.mxu0 %v1292
      %1312 = vmatpush.bf16.msra.mxu0 %v1291
      %1313 = vmatpush.bf16.msra.mxu0 %v1290
      %1314 = vmatmul.bf16.gmra.mxu0 %v1250
      %v1315 = vpop.f32.mrf.mxu0
      %v1316 = vadd.f32 0.0, %v1315
      %v1317 = vpop.f32.mrf.mxu0
      %v1318 = vadd.f32 0.0, %v1317
      %1319 = vmatmul.bf16.gmra.mxu0 %v1251
      %v1320 = vpop.f32.mrf.mxu0
      %v1321 = vadd.f32 0.0, %v1320
      %v1322 = vpop.f32.mrf.mxu0
      %v1323 = vadd.f32 0.0, %v1322
      %1324 = vmatmul.bf16.gmra.mxu0 %v1252
      %v1325 = vpop.f32.mrf.mxu0
      %v1326 = vadd.f32 0.0, %v1325
      %v1327 = vpop.f32.mrf.mxu0
      %v1328 = vadd.f32 0.0, %v1327
      %1329 = vmatmul.bf16.gmra.mxu0 %v1253
      %v1330 = vpop.f32.mrf.mxu0
      %v1331 = vadd.f32 0.0, %v1330
      %v1332 = vpop.f32.mrf.mxu0
      %v1333 = vadd.f32 0.0, %v1332
      %1334 = vdwg.mxu0
      %v1335 = vadd.f32 %v1193, %v1316
      %v1336 = vadd.f32 %v1194, %v1318
      %v1337 = vadd.f32 %v1195, %v1321
      %v1338 = vadd.f32 %v1196, %v1323
      %v1339 = vadd.f32 %v1197, %v1326
      %v1340 = vadd.f32 %v1198, %v1328
      %v1341 = vadd.f32 %v1199, %v1331
      %v1342 = vadd.f32 %v1200, %v1333
      %v1343 = vld [vmem:[%s1058 + $0x2] sm:$0xff]
      %v1344 = vld [vmem:[%s1058 + $0x12] sm:$0xff]
      %v1345 = vld [vmem:[%s1058 + $0x22] sm:$0xff]
      %v1346 = vld [vmem:[%s1058 + $0x32] sm:$0xff]
      %v1347 = vld [vmem:[%s1058 + $0x42] sm:$0xff]
      %v1348 = vld [vmem:[%s1058 + $0x52] sm:$0xff]
      %v1349 = vld [vmem:[%s1058 + $0x62] sm:$0xff]
      %v1350 = vld [vmem:[%s1058 + $0x72] sm:$0xff]
      %v1351 = vpack.c.bf16 %v1343, %v1343
      %v1352 = vpack.c.bf16 %v1344, %v1344
      %v1353 = vpack.c.bf16 %v1345, %v1345
      %v1354 = vpack.c.bf16 %v1346, %v1346
      %v1355 = vpack.c.bf16 %v1347, %v1347
      %v1356 = vpack.c.bf16 %v1348, %v1348
      %v1357 = vpack.c.bf16 %v1349, %v1349
      %v1358 = vpack.c.bf16 %v1350, %v1350
      %s1359 = scalar_lea.vmem %s210, 512
      %v1360 = vld [vmem:[%s1359] sm:$0xf]
      %v1361 = vld [vmem:[%s1359 + $0x4] sm:$0xf]
      %v1362 = vld [vmem:[%s1359 + $0x8] sm:$0xf]
      %v1363 = vld [vmem:[%s1359 + $0xc] sm:$0xf]
      %v1364 = vld [vmem:[%s1359 + $0x10] sm:$0xf]
      %v1365 = vld [vmem:[%s1359 + $0x14] sm:$0xf]
      %v1366 = vld [vmem:[%s1359 + $0x18] sm:$0xf]
      %v1367 = vld [vmem:[%s1359 + $0x1c] sm:$0xf]
      %v1368 = vld [vmem:[%s1359 + $0x20] sm:$0xf]
      %v1369 = vld [vmem:[%s1359 + $0x24] sm:$0xf]
      %v1370 = vld [vmem:[%s1359 + $0x28] sm:$0xf]
      %v1371 = vld [vmem:[%s1359 + $0x2c] sm:$0xf]
      %v1372 = vld [vmem:[%s1359 + $0x30] sm:$0xf]
      %v1373 = vld [vmem:[%s1359 + $0x34] sm:$0xf]
      %v1374 = vld [vmem:[%s1359 + $0x38] sm:$0xf]
      %v1375 = vld [vmem:[%s1359 + $0x3c] sm:$0xf]
      %v1384 = vunpack.c.l.b16 %v1351
      %v1385 = vunpack.c.l.b16 %v1352
      %v1386 = vunpack.c.l.b16 %v1353
      %v1387 = vunpack.c.l.b16 %v1354
      %v1388 = vunpack.c.l.b16 %v1355
      %v1389 = vunpack.c.l.b16 %v1356
      %v1390 = vunpack.c.l.b16 %v1357
      %v1391 = vunpack.c.l.b16 %v1358
      %v1392 = vpack.c.b16 %v1385, %v1384
      %v1393 = vpack.c.b16 %v1387, %v1386
      %v1394 = vpack.c.b16 %v1389, %v1388
      %v1395 = vpack.c.b16 %v1391, %v1390
      %v1416 = vunpack.c.l.b16 %v1360
      %v1417 = vunpack.c.l.b16 %v1361
      %v1418 = vunpack.c.l.b16 %v1362
      %v1419 = vunpack.c.l.b16 %v1363
      %v1420 = vunpack.c.l.b16 %v1364
      %v1421 = vunpack.c.l.b16 %v1365
      %v1422 = vunpack.c.l.b16 %v1366
      %v1423 = vunpack.c.l.b16 %v1367
      %v1424 = vunpack.c.l.b16 %v1368
      %v1425 = vunpack.c.l.b16 %v1369
      %v1426 = vunpack.c.l.b16 %v1370
      %v1427 = vunpack.c.l.b16 %v1371
      %v1428 = vunpack.c.l.b16 %v1372
      %v1429 = vunpack.c.l.b16 %v1373
      %v1430 = vunpack.c.l.b16 %v1374
      %v1431 = vunpack.c.l.b16 %v1375
      %v1432 = vpack.c.b16 %v1417, %v1416
      %v1433 = vpack.c.b16 %v1419, %v1418
      %v1434 = vpack.c.b16 %v1421, %v1420
      %v1435 = vpack.c.b16 %v1423, %v1422
      %v1436 = vpack.c.b16 %v1425, %v1424
      %v1437 = vpack.c.b16 %v1427, %v1426
      %v1438 = vpack.c.b16 %v1429, %v1428
      %v1439 = vpack.c.b16 %v1431, %v1430
      %1448 = vmatpush.bf16.msra.mxu0 %v1439
      %1449 = vmatpush.bf16.msra.mxu0 %v1438
      %1450 = vmatpush.bf16.msra.mxu0 %v1437
      %1451 = vmatpush.bf16.msra.mxu0 %v1436
      %1452 = vmatpush.bf16.msra.mxu0 %v1435
      %1453 = vmatpush.bf16.msra.mxu0 %v1434
      %1454 = vmatpush.bf16.msra.mxu0 %v1433
      %1455 = vmatpush.bf16.msra.mxu0 %v1432
      %1456 = vmatmul.bf16.gmra.mxu0 %v1392
      %v1457 = vpop.f32.mrf.mxu0
      %v1458 = vadd.f32 0.0, %v1457
      %v1459 = vpop.f32.mrf.mxu0
      %v1460 = vadd.f32 0.0, %v1459
      %1461 = vmatmul.bf16.gmra.mxu0 %v1393
      %v1462 = vpop.f32.mrf.mxu0
      %v1463 = vadd.f32 0.0, %v1462
      %v1464 = vpop.f32.mrf.mxu0
      %v1465 = vadd.f32 0.0, %v1464
      %1466 = vmatmul.bf16.gmra.mxu0 %v1394
      %v1467 = vpop.f32.mrf.mxu0
      %v1468 = vadd.f32 0.0, %v1467
      %v1469 = vpop.f32.mrf.mxu0
      %v1470 = vadd.f32 0.0, %v1469
      %1471 = vmatmul.bf16.gmra.mxu0 %v1395
      %v1472 = vpop.f32.mrf.mxu0
      %v1473 = vadd.f32 0.0, %v1472
      %v1474 = vpop.f32.mrf.mxu0
      %v1475 = vadd.f32 0.0, %v1474
      %1476 = vdwg.mxu0
      %v1477 = vadd.f32 %v1335, %v1458
      %v1478 = vadd.f32 %v1336, %v1460
      %v1479 = vadd.f32 %v1337, %v1463
      %v1480 = vadd.f32 %v1338, %v1465
      %v1481 = vadd.f32 %v1339, %v1468
      %v1482 = vadd.f32 %v1340, %v1470
      %v1483 = vadd.f32 %v1341, %v1473
      %v1484 = vadd.f32 %v1342, %v1475
      %v1485 = vld [vmem:[%s213] sm:$0x1]
      %v1487 = vperm.slane %v1485, 0
      %v1489 = vadd.f32 %v1477, %v1487
      %v1490 = vadd.f32 %v1478, %v1487
      %v1491 = vadd.f32 %v1479, %v1487
      %v1492 = vadd.f32 %v1480, %v1487
      %v1493 = vadd.f32 %v1481, %v1487
      %v1494 = vadd.f32 %v1482, %v1487
      %v1495 = vadd.f32 %v1483, %v1487
      %v1496 = vadd.f32 %v1484, %v1487
      %v1497 = vmax.f32 %v1489, 0.0
      %v1498 = vmax.f32 %v1490, 0.0
      %v1499 = vmax.f32 %v1491, 0.0
      %v1500 = vmax.f32 %v1492, 0.0
      %v1501 = vmax.f32 %v1493, 0.0
      %v1502 = vmax.f32 %v1494, 0.0
      %v1503 = vmax.f32 %v1495, 0.0
      %v1504 = vmax.f32 %v1496, 0.0
      %1505 = vst [vmem:[%s221] sm:$0xff] %v1497
      %1506 = vst [vmem:[%s221 + $0x8] sm:$0xff] %v1498
      %1507 = vst [vmem:[%s221 + $0x10] sm:$0xff] %v1499
      %1508 = vst [vmem:[%s221 + $0x18] sm:$0xff] %v1500
      %1509 = vst [vmem:[%s221 + $0x20] sm:$0xff] %v1501
      %1510 = vst [vmem:[%s221 + $0x28] sm:$0xff] %v1502
      %1511 = vst [vmem:[%s221 + $0x30] sm:$0xff] %v1503
      %1512 = vst [vmem:[%s221 + $0x38] sm:$0xff] %v1504
      %p1513 = scmp.lt.s32.totalorder %s18, 1
      %s1514 = scalar_select %p1513, %s18, 1
      %p1515 = scmp.lt.s32.totalorder %s19, 0
      %s1516 = scalar_select %p1515, %s19, 0
      %s1517 = smul.addr %s1514, 8
      %s1518 = sadd.s32 %s1516, %s1517
      %s1519 = smul.addr %s1518, 8
      %s1520 = scalar_lea.vmem %s3, %s1519
      // Predicated region
      $region33: #{unet_down_block_forward.4} parent=31 // pred_check
        %p1521 = pneg %p124
      $region34: #{unet_down_block_forward.4} parent=31 // pred_check_branch
        %1523 = sbr.rel (%p1521) target = $region36
      $region35: #{unet_down_block_forward.4} parent=31 // pred_region
        _
      $region36: #{unet_down_block_forward.4} parent=31 // pred_fallthru
        _
    $region32: #{unet_down_block_forward.4} parent=5 // pred_fallthru
      _
    %p1524 = scmp.le.s32.totalorder 2, %s9
    // Predicated region
    $region37: #{unet_down_block_forward.4} parent=5 // pred_check
      %p1525 = pneg %p1524
    $region38: #{unet_down_block_forward.4} parent=5 // pred_check_branch
      %1527 = sbr.rel (%p1525) target = $region40
    $region39: #{unet_down_block_forward.4} parent=5 // pred_region
      %s1528 = ssub.s32 %s9, 2
      // Predicated region
      $region41: #{unet_down_block_forward.4} parent=39 // pred_check
        %p1529 = pneg %p130
      $region42: #{unet_down_block_forward.4} parent=39 // pred_check_branch
        %1531 = sbr.rel (%p1529) target = $region44
      $region43: #{unet_down_block_forward.4} parent=39 // pred_region
        %p1532 = scmp.lt.s32.totalorder %s20, 1
        %s1533 = scalar_select %p1532, %s20, 1
        %p1534 = scmp.lt.s32.totalorder %s21, 0
        %s1535 = scalar_select %p1534, %s21, 0
        %s1536 = smul.addr %s1533, 8
        %s1537 = sadd.s32 %s1535, %s1536
        %s1538 = smul.addr %s1537, 8
        %s1539 = scalar_lea.vmem %s3, %s1538
      $region44: #{unet_down_block_forward.4} parent=39 // pred_fallthru
        _
    $region40: #{unet_down_block_forward.4} parent=5 // pred_fallthru
      _
  $region6: #{unet_down_block_forward.4} parent=0 // loop_footer
    %s13 = sadd.s32 1, %s9
  $region7: #{unet_down_block_forward.4} parent=0 // loop_footer_branch
    %8 = sbr.rel target = $region3
  $region8: #{unet_down_block_forward.4} parent=0 // loop_exit
    _

// kernel: unet_down_block_forward.3
$region0: #{unet_down_block_forward.3}
  #allocation0 [shape = 'u32[]', space=smem, size = 0x4, offset = 0x4, fixed_abs, tag = 'smem constant byte address 0x4 - core index']
  #allocation1 [shape = 'u32[72,128]{1,0:T(1,128)}', space=vmem, size = 0x9000, scoped, tag = 'internal scratch']
  %s0 = inlined_call_operand.vmem [shape: f32[2,9,2,9,256], index: 0, kind: input, shape index: {}]
  %s1 = inlined_call_operand.vmem [shape: bf16[3,3,128,128], index: 1, kind: input, shape index: {}]
  %s2 = inlined_call_operand.vmem [shape: f32[1,128], index: 2, kind: input, shape index: {}]
  %s3 = inlined_call_operand.vmem [shape: f32[2,64,128], index: 3, kind: output, shape index: {}]
  %s4 = sld [smem:[#allocation0]]
  $region45: #{unet_down_block_forward.3} parent=0
    _
  %s6 = ssub.s32 1, %s4
  %s7 = scalar_select 0, %s6, %s4
  loop: start=0, step=1, limit=4
  $region2: #{unet_down_block_forward.3} parent=0 // loop_pre_header
    _
  $region3: #{unet_down_block_forward.3} parent=0 // loop_header
    %s9 = sphi 0, %s13
    %p10 = scmp.ge.s32.totalorder %s9, 4
    %s16 = sphi 0, %s28
    %s17 = sphi 0, %s24
    %s18 = sphi 0, %s16
    %s19 = sphi 0, %s17
    %s20 = sphi 0, %s18
    %s21 = sphi 0, %s19
    %s31 = sphi 0, %s33
    %s34 = sphi 0, %s31
    %s35 = sphi 0, %s34
    %s51 = sphi 0, %s35
    %s57 = sphi 0, %s59
    %s60 = sphi 0, %s57
    %s61 = sphi 0, %s60
    %s77 = sphi 0, %s61
    %s83 = sphi 0, %s85
    %s86 = sphi 0, %s83
    %s87 = sphi 0, %s86
    %s103 = sphi 0, %s87
    %s111 = sphi 0, %s113
    %s114 = sphi 0, %s111
    %s115 = sphi 0, %s114
    %s131 = sphi 0, %s115
  $region4: #{unet_down_block_forward.3} parent=0 // loop_header_branch
    %12 = sbr.rel (%p10) target = $region8
  $region5: #{unet_down_block_forward.3} parent=0 // loop_body
    %s14 = ssub.s32 %s9, 1
    %s15 = ssub.s32 %s9, 2
    %s22 = sadd.s32 1, %s17
    %p23 = scmp.ge.s32.totalorder %s22, 1
    %s24 = scalar_select %p23, 0, %s22
    %s25 = sadd.s32 1, %s16
    %s26 = scalar_select %p23, %s25, %s16
    %p27 = scmp.ge.s32.totalorder %s26, 2
    %s28 = scalar_select %p27, 0, %s26
    %s29 = ssub.s32 %s16, %s28
    %p30 = scmp.eq.s32.totalorder %s29, 0
    %s32 = sadd.s32 %s31, 1
    %s33 = scalar_select %p30, %s31, %s32
    %p36 = pneg %p30
    %p37 = scmp.eq.s32.totalorder %s9, 1
    %p38 = por %p36, %p37
    %p39 = scmp.ne.s32.totalorder %s31, %s34
    %p40 = scmp.eq.s32.totalorder %s9, 0
    %p41 = por %p39, %p40
    %p42 = scmp.ne.s32.totalorder %s31, %s34
    %p43 = scmp.eq.s32.totalorder %s14, 1
    %p44 = por %p42, %p43
    %p45 = scmp.ne.s32.totalorder %s34, %s35
    %p46 = scmp.eq.s32.totalorder %s14, 0
    %p47 = por %p45, %p46
    %p48 = scmp.ne.s32.totalorder %s34, %s35
    %p49 = scmp.eq.s32.totalorder %s15, 1
    %p50 = por %p48, %p49
    %p52 = scmp.ne.s32.totalorder %s35, %s51
    %p53 = scmp.eq.s32.totalorder %s15, 0
    %p54 = por %p52, %p53
    %s55 = ssub.s32 %s17, %s24
    %p56 = scmp.eq.s32.totalorder %s55, 0
    %s58 = sadd.s32 %s57, 1
    %s59 = scalar_select %p56, %s57, %s58
    %p62 = pneg %p56
    %p63 = scmp.eq.s32.totalorder %s9, 1
    %p64 = por %p62, %p63
    %p65 = scmp.ne.s32.totalorder %s57, %s60
    %p66 = scmp.eq.s32.totalorder %s9, 0
    %p67 = por %p65, %p66
    %p68 = scmp.ne.s32.totalorder %s57, %s60
    %p69 = scmp.eq.s32.totalorder %s14, 1
    %p70 = por %p68, %p69
    %p71 = scmp.ne.s32.totalorder %s60, %s61
    %p72 = scmp.eq.s32.totalorder %s14, 0
    %p73 = por %p71, %p72
    %p74 = scmp.ne.s32.totalorder %s60, %s61
    %p75 = scmp.eq.s32.totalorder %s15, 1
    %p76 = por %p74, %p75
    %p78 = scmp.ne.s32.totalorder %s61, %s77
    %p79 = scmp.eq.s32.totalorder %s15, 0
    %p80 = por %p78, %p79
    %s81 = ssub.s32 %s17, %s24
    %p82 = scmp.eq.s32.totalorder %s81, 0
    %s84 = sadd.s32 %s83, 1
    %s85 = scalar_select %p82, %s83, %s84
    %p88 = pneg %p82
    %p89 = scmp.eq.s32.totalorder %s9, 1
    %p90 = por %p88, %p89
    %p91 = scmp.ne.s32.totalorder %s83, %s86
    %p92 = scmp.eq.s32.totalorder %s9, 0
    %p93 = por %p91, %p92
    %p94 = scmp.ne.s32.totalorder %s83, %s86
    %p95 = scmp.eq.s32.totalorder %s14, 1
    %p96 = por %p94, %p95
    %p97 = scmp.ne.s32.totalorder %s86, %s87
    %p98 = scmp.eq.s32.totalorder %s14, 0
    %p99 = por %p97, %p98
    %p100 = scmp.ne.s32.totalorder %s86, %s87
    %p101 = scmp.eq.s32.totalorder %s15, 1
    %p102 = por %p100, %p101
    %p104 = scmp.ne.s32.totalorder %s87, %s103
    %p105 = scmp.eq.s32.totalorder %s15, 0
    %p106 = por %p104, %p105
    %s107 = ssub.s32 %s16, %s28
    %s108 = ssub.s32 %s17, %s24
    %s109 = sor.u32 %s107, %s108
    %p110 = scmp.eq.s32.totalorder %s109, 0
    %s112 = sadd.s32 %s111, 1
    %s113 = scalar_select %p110, %s111, %s112
    %p116 = pneg %p110
    %p117 = scmp.eq.s32.totalorder %s9, 1
    %p118 = por %p116, %p117
    %p119 = scmp.ne.s32.totalorder %s111, %s114
    %p120 = scmp.eq.s32.totalorder %s9, 0
    %p121 = por %p119, %p120
    %p122 = scmp.ne.s32.totalorder %s111, %s114
    %p123 = scmp.eq.s32.totalorder %s14, 1
    %p124 = por %p122, %p123
    %p125 = scmp.ne.s32.totalorder %s114, %s115
    %p126 = scmp.eq.s32.totalorder %s14, 0
    %p127 = por %p125, %p126
    %p128 = scmp.ne.s32.totalorder %s114, %s115
    %p129 = scmp.eq.s32.totalorder %s15, 1
    %p130 = por %p128, %p129
    %p132 = scmp.ne.s32.totalorder %s115, %s131
    %p133 = scmp.eq.s32.totalorder %s15, 0
    %p134 = por %p132, %p133
    %p135 = scmp.le.s32.totalorder 1, %s9
    %p136 = scmp.lt.s32.totalorder %s9, 3
    %p137 = pnand %p135, %p136
    %p138 = pneg %p137
    // Predicated region
    $region9: #{unet_down_block_forward.3} parent=5 // pred_check
      _
    $region10: #{unet_down_block_forward.3} parent=5 // pred_check_branch
      %140 = sbr.rel (%p137) target = $region12
    $region11: #{unet_down_block_forward.3} parent=5 // pred_region
      %s141 = ssub.s32 %s9, 1
      // Predicated region
      $region13: #{unet_down_block_forward.3} parent=11 // pred_check
        %p142 = pneg %p73
      $region14: #{unet_down_block_forward.3} parent=11 // pred_check_branch
        %144 = sbr.rel (%p142) target = $region16
      $region15: #{unet_down_block_forward.3} parent=11 // pred_region
        %p145 = scmp.lt.s32.totalorder %s19, 0
        %s146 = scalar_select %p145, %s19, 0
        %s147 = smul.addr %s146, 4
        %s148 = scalar_lea.vmem %s1, %s147
      $region16: #{unet_down_block_forward.3} parent=11 // pred_fallthru
        _
      // Predicated region
      $region17: #{unet_down_block_forward.3} parent=11 // pred_check
        %p149 = pneg %p99
      $region18: #{unet_down_block_forward.3} parent=11 // pred_check_branch
        %151 = sbr.rel (%p149) target = $region20
      $region19: #{unet_down_block_forward.3} parent=11 // pred_region
        %p152 = scmp.lt.s32.totalorder %s19, 0
        %s153 = scalar_select %p152, %s19, 0
        %s154 = scalar_lea.vmem %s2, %s153
      $region20: #{unet_down_block_forward.3} parent=11 // pred_fallthru
        _
    $region12: #{unet_down_block_forward.3} parent=5 // pred_fallthru
      _
    %p155 = scmp.lt.s32.totalorder %s9, 2
    // Predicated region
    $region21: #{unet_down_block_forward.3} parent=5 // pred_check
      %p156 = pneg %p155
    $region22: #{unet_down_block_forward.3} parent=5 // pred_check_branch
      %158 = sbr.rel (%p156) target = $region24
    $region23: #{unet_down_block_forward.3} parent=5 // pred_region
      // Predicated region
      $region25: #{unet_down_block_forward.3} parent=23 // pred_check
        %p159 = pneg %p41
      $region26: #{unet_down_block_forward.3} parent=23 // pred_check_branch
        %161 = sbr.rel (%p159) target = $region28
      $region27: #{unet_down_block_forward.3} parent=23 // pred_region
        %p162 = scmp.lt.s32.totalorder %s16, 1
        %s163 = scalar_select %p162, %s16, 1
        %s164 = smul.addr %s163, 72
        %s165 = smul.addr %s164, 8
        %s166 = scalar_lea.vmem %s0, %s165
      $region28: #{unet_down_block_forward.3} parent=23 // pred_fallthru
        _
    $region24: #{unet_down_block_forward.3} parent=5 // pred_fallthru
      _
    %p167 = scmp.le.s32.totalorder 1, %s9
    %p168 = scmp.lt.s32.totalorder %s9, 3
    %p169 = pnand %p167, %p168
    %p170 = pneg %p169
    // Predicated region
    $region29: #{unet_down_block_forward.3} parent=5 // pred_check
      _
    $region30: #{unet_down_block_forward.3} parent=5 // pred_check_branch
      %172 = sbr.rel (%p169) target = $region32
    $region31: #{unet_down_block_forward.3} parent=5 // pred_region
      %s173 = ssub.s32 %s9, 1
      %p174 = scmp.lt.s32.totalorder %s18, 1
      %s175 = scalar_select %p174, %s18, 1
      %s176 = smul.addr %s175, 72
      %s177 = smul.addr %s176, 8
      %s178 = scalar_lea.vmem %s0, %s177
      %p179 = pneg %p47
      %p180 = pneg %p44
      %p181 = scmp.lt.s32.totalorder %s19, 0
      %s182 = scalar_select %p181, %s19, 0
      %s183 = smul.addr %s182, 4
      %s184 = scalar_lea.vmem %s1, %s183
      %p185 = pneg %p73
      %p186 = pneg %p70
      %p187 = scmp.lt.s32.totalorder %s19, 0
      %s188 = scalar_select %p187, %s19, 0
      %s189 = scalar_lea.vmem %s2, %s188
      %p190 = pneg %p99
      %p191 = pneg %p96
      %p192 = pneg %p127
      %p193 = pneg %p124
      %p194 = scmp.lt.s32.totalorder %s18, 1
      %s195 = scalar_select %p194, %s18, 1
      %p196 = scmp.lt.s32.totalorder %s19, 0
      %s197 = scalar_select %p196, %s19, 0
      %s198 = smul.addr %s195, 8
      %s199 = sadd.s32 %s197, %s198
      %s200 = smul.addr %s199, 8
      %s201 = scalar_lea.vmem %s3, %s200
      %p202 = scmp.lt.s32.totalorder %s18, 1
      %s203 = scalar_select %p202, %s18, 1
      %s204 = smul.addr %s203, 72
      %s205 = smul.addr %s204, 8
      %s206 = scalar_lea.vmem %s0, %s205
      %p207 = scmp.lt.s32.totalorder %s19, 0
      %s208 = scalar_select %p207, %s19, 0
      %s209 = smul.addr %s208, 4
      %s210 = scalar_lea.vmem %s1, %s209
      %p211 = scmp.lt.s32.totalorder %s19, 0
      %s212 = scalar_select %p211, %s19, 0
      %s213 = scalar_lea.vmem %s2, %s212
      %p214 = scmp.lt.s32.totalorder %s18, 1
      %s215 = scalar_select %p214, %s18, 1
      %p216 = scmp.lt.s32.totalorder %s19, 0
      %s217 = scalar_select %p216, %s19, 0
      %s218 = smul.addr %s215, 8
      %s219 = sadd.s32 %s217, %s218
      %s220 = smul.addr %s219, 8
      %s221 = scalar_lea.vmem %s3, %s220
      %v222 = vld [vmem:[%s206] sm:$0xff]
      %v223 = vld [vmem:[%s206 + $0x40] sm:$0xff]
      %v224 = vld [vmem:[%s206 + $0x80] sm:$0xff]
      %v225 = vld [vmem:[%s206 + $0xc0] sm:$0xff]
      %v226 = vld [vmem:[%s206 + $0x100] sm:$0xff]
      %v227 = vld [vmem:[%s206 + $0x140] sm:$0xff]
      %v228 = vld [vmem:[%s206 + $0x180] sm:$0xff]
      %v229 = vld [vmem:[%s206 + $0x1c0] sm:$0xff]
      %v230 = vpack.c.bf16 %v222, %v222
      %v231 = vpack.c.bf16 %v223, %v223
      %v232 = vpack.c.bf16 %v224, %v224
      %v233 = vpack.c.bf16 %v225, %v225
      %v234 = vpack.c.bf16 %v226, %v226
      %v235 = vpack.c.bf16 %v227, %v227
      %v236 = vpack.c.bf16 %v228, %v228
      %v237 = vpack.c.bf16 %v229, %v229
      %v238 = vld [vmem:[%s210] sm:$0xf]
      %v239 = vld [vmem:[%s210 + $0x4] sm:$0xf]
      %v240 = vld [vmem:[%s210 + $0x8] sm:$0xf]
      %v241 = vld [vmem:[%s210 + $0xc] sm:$0xf]
      %v242 = vld [vmem:[%s210 + $0x10] sm:$0xf]
      %v243 = vld [vmem:[%s210 + $0x14] sm:$0xf]
      %v244 = vld [vmem:[%s210 + $0x18] sm:$0xf]
      %v245 = vld [vmem:[%s210 + $0x1c] sm:$0xf]
      %v246 = vld [vmem:[%s210 + $0x20] sm:$0xf]
      %v247 = vld [vmem:[%s210 + $0x24] sm:$0xf]
      %v248 = vld [vmem:[%s210 + $0x28] sm:$0xf]
      %v249 = vld [vmem:[%s210 + $0x2c] sm:$0xf]
      %v250 = vld [vmem:[%s210 + $0x30] sm:$0xf]
      %v251 = vld [vmem:[%s210 + $0x34] sm:$0xf]
      %v252 = vld [vmem:[%s210 + $0x38] sm:$0xf]
      %v253 = vld [vmem:[%s210 + $0x3c] sm:$0xf]
      %v254 = vld [vmem:[%s206 + $0x8] sm:$0xff]
      %v255 = vld [vmem:[%s206 + $0x48] sm:$0xff]
      %v256 = vld [vmem:[%s206 + $0x88] sm:$0xff]
      %v257 = vld [vmem:[%s206 + $0xc8] sm:$0xff]
      %v258 = vld [vmem:[%s206 + $0x108] sm:$0xff]
      %v259 = vld [vmem:[%s206 + $0x148] sm:$0xff]
      %v260 = vld [vmem:[%s206 + $0x188] sm:$0xff]
      %v261 = vld [vmem:[%s206 + $0x1c8] sm:$0xff]
      %v262 = vpack.c.bf16 %v254, %v254
      %v263 = vpack.c.bf16 %v255, %v255
      %v264 = vpack.c.bf16 %v256, %v256
      %v265 = vpack.c.bf16 %v257, %v257
      %v266 = vpack.c.bf16 %v258, %v258
      %v267 = vpack.c.bf16 %v259, %v259
      %v268 = vpack.c.bf16 %v260, %v260
      %v269 = vpack.c.bf16 %v261, %v261
      %s270 = scalar_lea.vmem %s210, 64
      %v271 = vld [vmem:[%s270] sm:$0xf]
      %v272 = vld [vmem:[%s270 + $0x4] sm:$0xf]
      %v273 = vld [vmem:[%s270 + $0x8] sm:$0xf]
      %v274 = vld [vmem:[%s270 + $0xc] sm:$0xf]
      %v275 = vld [vmem:[%s270 + $0x10] sm:$0xf]
      %v276 = vld [vmem:[%s270 + $0x14] sm:$0xf]
      %v277 = vld [vmem:[%s270 + $0x18] sm:$0xf]
      %v278 = vld [vmem:[%s270 + $0x1c] sm:$0xf]
      %v279 = vld [vmem:[%s270 + $0x20] sm:$0xf]
      %v280 = vld [vmem:[%s270 + $0x24] sm:$0xf]
      %v281 = vld [vmem:[%s270 + $0x28] sm:$0xf]
      %v282 = vld [vmem:[%s270 + $0x2c] sm:$0xf]
      %v283 = vld [vmem:[%s270 + $0x30] sm:$0xf]
      %v284 = vld [vmem:[%s270 + $0x34] sm:$0xf]
      %v285 = vld [vmem:[%s270 + $0x38] sm:$0xf]
      %v286 = vld [vmem:[%s270 + $0x3c] sm:$0xf]
      %v295 = vunpack.c.l.b16 %v262
      %v296 = vunpack.c.l.b16 %v263
      %v297 = vunpack.c.l.b16 %v264
      %v298 = vunpack.c.l.b16 %v265
      %v299 = vunpack.c.l.b16 %v266
      %v300 = vunpack.c.l.b16 %v267
      %v301 = vunpack.c.l.b16 %v268
      %v302 = vunpack.c.l.b16 %v269
      %v303 = vpack.c.b16 %v296, %v295
      %v304 = vpack.c.b16 %v298, %v297
      %v305 = vpack.c.b16 %v300, %v299
      %v306 = vpack.c.b16 %v302, %v301
      %v327 = vunpack.c.l.b16 %v271
      %v328 = vunpack.c.l.b16 %v272
      %v329 = vunpack.c.l.b16 %v273
      %v330 = vunpack.c.l.b16 %v274
      %v331 = vunpack.c.l.b16 %v275
      %v332 = vunpack.c.l.b16 %v276
      %v333 = vunpack.c.l.b16 %v277
      %v334 = vunpack.c.l.b16 %v278
      %v335 = vunpack.c.l.b16 %v279
      %v336 = vunpack.c.l.b16 %v280
      %v337 = vunpack.c.l.b16 %v281
      %v338 = vunpack.c.l.b16 %v282
      %v339 = vunpack.c.l.b16 %v283
      %v340 = vunpack.c.l.b16 %v284
      %v341 = vunpack.c.l.b16 %v285
      %v342 = vunpack.c.l.b16 %v286
      %v343 = vpack.c.b16 %v328, %v327
      %v344 = vpack.c.b16 %v330, %v329
      %v345 = vpack.c.b16 %v332, %v331
      %v346 = vpack.c.b16 %v334, %v333
      %v347 = vpack.c.b16 %v336, %v335
      %v348 = vpack.c.b16 %v338, %v337
      %v349 = vpack.c.b16 %v340, %v339
      %v350 = vpack.c.b16 %v342, %v341
      %359 = vmatpush.bf16.msra.mxu0 %v350
      %360 = vmatpush.bf16.msra.mxu0 %v349
      %361 = vmatpush.bf16.msra.mxu0 %v348
      %362 = vmatpush.bf16.msra.mxu0 %v347
      %363 = vmatpush.bf16.msra.mxu0 %v346
      %364 = vmatpush.bf16.msra.mxu0 %v345
      %365 = vmatpush.bf16.msra.mxu0 %v344
      %366 = vmatpush.bf16.msra.mxu0 %v343
      %367 = vmatmul.bf16.gmra.mxu0 %v303
      %v368 = vpop.f32.mrf.mxu0
      %v369 = vadd.f32 0.0, %v368
      %v370 = vpop.f32.mrf.mxu0
      %v371 = vadd.f32 0.0, %v370
      %372 = vmatmul.bf16.gmra.mxu0 %v304
      %v373 = vpop.f32.mrf.mxu0
      %v374 = vadd.f32 0.0, %v373
      %v375 = vpop.f32.mrf.mxu0
      %v376 = vadd.f32 0.0, %v375
      %377 = vmatmul.bf16.gmra.mxu0 %v305
      %v378 = vpop.f32.mrf.mxu0
      %v379 = vadd.f32 0.0, %v378
      %v380 = vpop.f32.mrf.mxu0
      %v381 = vadd.f32 0.0, %v380
      %382 = vmatmul.bf16.gmra.mxu0 %v306
      %v383 = vpop.f32.mrf.mxu0
      %v384 = vadd.f32 0.0, %v383
      %v385 = vpop.f32.mrf.mxu0
      %v386 = vadd.f32 0.0, %v385
      %387 = vdwg.mxu0
      %v396 = vunpack.c.l.b16 %v230
      %v397 = vunpack.c.l.b16 %v231
      %v398 = vunpack.c.l.b16 %v232
      %v399 = vunpack.c.l.b16 %v233
      %v400 = vunpack.c.l.b16 %v234
      %v401 = vunpack.c.l.b16 %v235
      %v402 = vunpack.c.l.b16 %v236
      %v403 = vunpack.c.l.b16 %v237
      %v404 = vpack.c.b16 %v397, %v396
      %v405 = vpack.c.b16 %v399, %v398
      %v406 = vpack.c.b16 %v401, %v400
      %v407 = vpack.c.b16 %v403, %v402
      %v428 = vunpack.c.l.b16 %v238
      %v429 = vunpack.c.l.b16 %v239
      %v430 = vunpack.c.l.b16 %v240
      %v431 = vunpack.c.l.b16 %v241
      %v432 = vunpack.c.l.b16 %v242
      %v433 = vunpack.c.l.b16 %v243
      %v434 = vunpack.c.l.b16 %v244
      %v435 = vunpack.c.l.b16 %v245
      %v436 = vunpack.c.l.b16 %v246
      %v437 = vunpack.c.l.b16 %v247
      %v438 = vunpack.c.l.b16 %v248
      %v439 = vunpack.c.l.b16 %v249
      %v440 = vunpack.c.l.b16 %v250
      %v441 = vunpack.c.l.b16 %v251
      %v442 = vunpack.c.l.b16 %v252
      %v443 = vunpack.c.l.b16 %v253
      %v444 = vpack.c.b16 %v429, %v428
      %v445 = vpack.c.b16 %v431, %v430
      %v446 = vpack.c.b16 %v433, %v432
      %v447 = vpack.c.b16 %v435, %v434
      %v448 = vpack.c.b16 %v437, %v436
      %v449 = vpack.c.b16 %v439, %v438
      %v450 = vpack.c.b16 %v441, %v440
      %v451 = vpack.c.b16 %v443, %v442
      %460 = vmatpush.bf16.msra.mxu0 %v451
      %461 = vmatpush.bf16.msra.mxu0 %v450
      %462 = vmatpush.bf16.msra.mxu0 %v449
      %463 = vmatpush.bf16.msra.mxu0 %v448
      %464 = vmatpush.bf16.msra.mxu0 %v447
      %465 = vmatpush.bf16.msra.mxu0 %v446
      %466 = vmatpush.bf16.msra.mxu0 %v445
      %467 = vmatpush.bf16.msra.mxu0 %v444
      %468 = vmatmul.bf16.gmra.mxu0 %v404
      %v469 = vpop.f32.mrf.mxu0
      %v470 = vadd.f32 %v369, %v469
      %v471 = vpop.f32.mrf.mxu0
      %v472 = vadd.f32 %v371, %v471
      %473 = vmatmul.bf16.gmra.mxu0 %v405
      %v474 = vpop.f32.mrf.mxu0
      %v475 = vadd.f32 %v374, %v474
      %v476 = vpop.f32.mrf.mxu0
      %v477 = vadd.f32 %v376, %v476
      %478 = vmatmul.bf16.gmra.mxu0 %v406
      %v479 = vpop.f32.mrf.mxu0
      %v480 = vadd.f32 %v379, %v479
      %v481 = vpop.f32.mrf.mxu0
      %v482 = vadd.f32 %v381, %v481
      %483 = vmatmul.bf16.gmra.mxu0 %v407
      %v484 = vpop.f32.mrf.mxu0
      %v485 = vadd.f32 %v384, %v484
      %v486 = vpop.f32.mrf.mxu0
      %v487 = vadd.f32 %v386, %v486
      %488 = vdwg.mxu0
      %v489 = vld [vmem:[%s206] sm:$0xfe]
      %v490 = vld [vmem:[%s206 + $0x10] sm:$0x1]
      %v491 = vld [vmem:[%s206 + $0x40] sm:$0xfe]
      %v492 = vld [vmem:[%s206 + $0x50] sm:$0x1]
      %v493 = vld [vmem:[%s206 + $0x80] sm:$0xfe]
      %v494 = vld [vmem:[%s206 + $0x90] sm:$0x1]
      %v495 = vld [vmem:[%s206 + $0xc0] sm:$0xfe]
      %v496 = vld [vmem:[%s206 + $0xd0] sm:$0x1]
      %v497 = vld [vmem:[%s206 + $0x100] sm:$0xfe]
      %v498 = vld [vmem:[%s206 + $0x110] sm:$0x1]
      %v499 = vld [vmem:[%s206 + $0x140] sm:$0xfe]
      %v500 = vld [vmem:[%s206 + $0x150] sm:$0x1]
      %v501 = vld [vmem:[%s206 + $0x180] sm:$0xfe]
      %v502 = vld [vmem:[%s206 + $0x190] sm:$0x1]
      %v503 = vld [vmem:[%s206 + $0x1c0] sm:$0xfe]
      %v504 = vld [vmem:[%s206 + $0x1d0] sm:$0x1]
      %v505 = vpack.c.bf16 %v489, %v489
      %v506 = vpack.c.bf16 %v490, %v490
      %v507 = vpack.c.bf16 %v491, %v491
      %v508 = vpack.c.bf16 %v492, %v492
      %v509 = vpack.c.bf16 %v493, %v493
      %v510 = vpack.c.bf16 %v494, %v494
      %v511 = vpack.c.bf16 %v495, %v495
      %v512 = vpack.c.bf16 %v496, %v496
      %v513 = vpack.c.bf16 %v497, %v497
      %v514 = vpack.c.bf16 %v498, %v498
      %v515 = vpack.c.bf16 %v499, %v499
      %v516 = vpack.c.bf16 %v500, %v500
      %v517 = vpack.c.bf16 %v501, %v501
      %v518 = vpack.c.bf16 %v502, %v502
      %v519 = vpack.c.bf16 %v503, %v503
      %v520 = vpack.c.bf16 %v504, %v504
      %vm521 = vsmask.f32 3328
      %vm522 = vsmask.f32 7440
      %vm523 = vmor %vm521, %vm522
      %v525 = vshrl.u32 %v505, 16
      %v527 = vrot.slane %v525, 4
      %v528 = vshll.u32 %v505, 16
      %v530 = vrot.slane %v528, 5
      %v531 = vor.u32 %v527, %v530
      %v532 = vrot.slane %v531, 4
      %v534 = vshll.u32 %v506, 16
      %v536 = vrot.slane %v534, 5
      %v537 = vsel %vm523, %v532, %v536
      %v539 = vshrl.u32 %v507, 16
      %v541 = vrot.slane %v539, 4
      %v542 = vshll.u32 %v507, 16
      %v544 = vrot.slane %v542, 5
      %v545 = vor.u32 %v541, %v544
      %v546 = vrot.slane %v545, 4
      %v548 = vshll.u32 %v508, 16
      %v550 = vrot.slane %v548, 5
      %v551 = vsel %vm523, %v546, %v550
      %v553 = vshrl.u32 %v509, 16
      %v555 = vrot.slane %v553, 4
      %v556 = vshll.u32 %v509, 16
      %v558 = vrot.slane %v556, 5
      %v559 = vor.u32 %v555, %v558
      %v560 = vrot.slane %v559, 4
      %v562 = vshll.u32 %v510, 16
      %v564 = vrot.slane %v562, 5
      %v565 = vsel %vm523, %v560, %v564
      %v567 = vshrl.u32 %v511, 16
      %v569 = vrot.slane %v567, 4
      %v570 = vshll.u32 %v511, 16
      %v572 = vrot.slane %v570, 5
      %v573 = vor.u32 %v569, %v572
      %v574 = vrot.slane %v573, 4
      %v576 = vshll.u32 %v512, 16
      %v578 = vrot.slane %v576, 5
      %v579 = vsel %vm523, %v574, %v578
      %v581 = vshrl.u32 %v513, 16
      %v583 = vrot.slane %v581, 4
      %v584 = vshll.u32 %v513, 16
      %v586 = vrot.slane %v584, 5
      %v587 = vor.u32 %v583, %v586
      %v588 = vrot.slane %v587, 4
      %v590 = vshll.u32 %v514, 16
      %v592 = vrot.slane %v590, 5
      %v593 = vsel %vm523, %v588, %v592
      %v595 = vshrl.u32 %v515, 16
      %v597 = vrot.slane %v595, 4
      %v598 = vshll.u32 %v515, 16
      %v600 = vrot.slane %v598, 5
      %v601 = vor.u32 %v597, %v600
      %v602 = vrot.slane %v601, 4
      %v604 = vshll.u32 %v516, 16
      %v606 = vrot.slane %v604, 5
      %v607 = vsel %vm523, %v602, %v606
      %v609 = vshrl.u32 %v517, 16
      %v611 = vrot.slane %v609, 4
      %v612 = vshll.u32 %v517, 16
      %v614 = vrot.slane %v612, 5
      %v615 = vor.u32 %v611, %v614
      %v616 = vrot.slane %v615, 4
      %v618 = vshll.u32 %v518, 16
      %v620 = vrot.slane %v618, 5
      %v621 = vsel %vm523, %v616, %v620
      %v623 = vshrl.u32 %v519, 16
      %v625 = vrot.slane %v623, 4
      %v626 = vshll.u32 %v519, 16
      %v628 = vrot.slane %v626, 5
      %v629 = vor.u32 %v625, %v628
      %v630 = vrot.slane %v629, 4
      %v632 = vshll.u32 %v520, 16
      %v634 = vrot.slane %v632, 5
      %v635 = vsel %vm523, %v630, %v634
      %s636 = scalar_lea.vmem %s210, 128
      %v637 = vld [vmem:[%s636] sm:$0xf]
      %v638 = vld [vmem:[%s636 + $0x4] sm:$0xf]
      %v639 = vld [vmem:[%s636 + $0x8] sm:$0xf]
      %v640 = vld [vmem:[%s636 + $0xc] sm:$0xf]
      %v641 = vld [vmem:[%s636 + $0x10] sm:$0xf]
      %v642 = vld [vmem:[%s636 + $0x14] sm:$0xf]
      %v643 = vld [vmem:[%s636 + $0x18] sm:$0xf]
      %v644 = vld [vmem:[%s636 + $0x1c] sm:$0xf]
      %v645 = vld [vmem:[%s636 + $0x20] sm:$0xf]
      %v646 = vld [vmem:[%s636 + $0x24] sm:$0xf]
      %v647 = vld [vmem:[%s636 + $0x28] sm:$0xf]
      %v648 = vld [vmem:[%s636 + $0x2c] sm:$0xf]
      %v649 = vld [vmem:[%s636 + $0x30] sm:$0xf]
      %v650 = vld [vmem:[%s636 + $0x34] sm:$0xf]
      %v651 = vld [vmem:[%s636 + $0x38] sm:$0xf]
      %v652 = vld [vmem:[%s636 + $0x3c] sm:$0xf]
      %v653 = vunpack.c.l.b16 %v537
      %v654 = vunpack.c.l.b16 %v551
      %v655 = vunpack.c.l.b16 %v565
      %v656 = vunpack.c.l.b16 %v579
      %v657 = vunpack.c.l.b16 %v593
      %v658 = vunpack.c.l.b16 %v607
      %v659 = vunpack.c.l.b16 %v621
      %v660 = vunpack.c.l.b16 %v635
      %v661 = vpack.c.b16 %v654, %v653
      %v662 = vpack.c.b16 %v656, %v655
      %v663 = vpack.c.b16 %v658, %v657
      %v664 = vpack.c.b16 %v660, %v659
      %v685 = vunpack.c.l.b16 %v637
      %v686 = vunpack.c.l.b16 %v638
      %v687 = vunpack.c.l.b16 %v639
      %v688 = vunpack.c.l.b16 %v640
      %v689 = vunpack.c.l.b16 %v641
      %v690 = vunpack.c.l.b16 %v642
      %v691 = vunpack.c.l.b16 %v643
      %v692 = vunpack.c.l.b16 %v644
      %v693 = vunpack.c.l.b16 %v645
      %v694 = vunpack.c.l.b16 %v646
      %v695 = vunpack.c.l.b16 %v647
      %v696 = vunpack.c.l.b16 %v648
      %v697 = vunpack.c.l.b16 %v649
      %v698 = vunpack.c.l.b16 %v650
      %v699 = vunpack.c.l.b16 %v651
      %v700 = vunpack.c.l.b16 %v652
      %v701 = vpack.c.b16 %v686, %v685
      %v702 = vpack.c.b16 %v688, %v687
      %v703 = vpack.c.b16 %v690, %v689
      %v704 = vpack.c.b16 %v692, %v691
      %v705 = vpack.c.b16 %v694, %v693
      %v706 = vpack.c.b16 %v696, %v695
      %v707 = vpack.c.b16 %v698, %v697
      %v708 = vpack.c.b16 %v700, %v699
      %717 = vmatpush.bf16.msra.mxu0 %v708
      %718 = vmatpush.bf16.msra.mxu0 %v707
      %719 = vmatpush.bf16.msra.mxu0 %v706
      %720 = vmatpush.bf16.msra.mxu0 %v705
      %721 = vmatpush.bf16.msra.mxu0 %v704
      %722 = vmatpush.bf16.msra.mxu0 %v703
      %723 = vmatpush.bf16.msra.mxu0 %v702
      %724 = vmatpush.bf16.msra.mxu0 %v701
      %725 = vmatmul.bf16.gmra.mxu0 %v661
      %v726 = vpop.f32.mrf.mxu0
      %v727 = vadd.f32 0.0, %v726
      %v728 = vpop.f32.mrf.mxu0
      %v729 = vadd.f32 0.0, %v728
      %730 = vmatmul.bf16.gmra.mxu0 %v662
      %v731 = vpop.f32.mrf.mxu0
      %v732 = vadd.f32 0.0, %v731
      %v733 = vpop.f32.mrf.mxu0
      %v734 = vadd.f32 0.0, %v733
      %735 = vmatmul.bf16.gmra.mxu0 %v663
      %v736 = vpop.f32.mrf.mxu0
      %v737 = vadd.f32 0.0, %v736
      %v738 = vpop.f32.mrf.mxu0
      %v739 = vadd.f32 0.0, %v738
      %740 = vmatmul.bf16.gmra.mxu0 %v664
      %v741 = vpop.f32.mrf.mxu0
      %v742 = vadd.f32 0.0, %v741
      %v743 = vpop.f32.mrf.mxu0
      %v744 = vadd.f32 0.0, %v743
      %745 = vdwg.mxu0
      %v746 = vadd.f32 %v470, %v727
      %v747 = vadd.f32 %v472, %v729
      %v748 = vadd.f32 %v475, %v732
      %v749 = vadd.f32 %v477, %v734
      %v750 = vadd.f32 %v480, %v737
      %v751 = vadd.f32 %v482, %v739
      %v752 = vadd.f32 %v485, %v742
      %v753 = vadd.f32 %v487, %v744
      %s754 = scalar_lea.vmem %s206, 32
      %v755 = vld [vmem:[%s754] sm:$0xff]
      %v756 = vld [vmem:[%s754 + $0x40] sm:$0xff]
      %v757 = vld [vmem:[%s754 + $0x80] sm:$0xff]
      %v758 = vld [vmem:[%s754 + $0xc0] sm:$0xff]
      %v759 = vld [vmem:[%s754 + $0x100] sm:$0xff]
      %v760 = vld [vmem:[%s754 + $0x140] sm:$0xff]
      %v761 = vld [vmem:[%s754 + $0x180] sm:$0xff]
      %v762 = vld [vmem:[%s754 + $0x1c0] sm:$0xff]
      %v763 = vpack.c.bf16 %v755, %v755
      %v764 = vpack.c.bf16 %v756, %v756
      %v765 = vpack.c.bf16 %v757, %v757
      %v766 = vpack.c.bf16 %v758, %v758
      %v767 = vpack.c.bf16 %v759, %v759
      %v768 = vpack.c.bf16 %v760, %v760
      %v769 = vpack.c.bf16 %v761, %v761
      %v770 = vpack.c.bf16 %v762, %v762
      %s771 = scalar_lea.vmem %s210, 192
      %v772 = vld [vmem:[%s771] sm:$0xf]
      %v773 = vld [vmem:[%s771 + $0x4] sm:$0xf]
      %v774 = vld [vmem:[%s771 + $0x8] sm:$0xf]
      %v775 = vld [vmem:[%s771 + $0xc] sm:$0xf]
      %v776 = vld [vmem:[%s771 + $0x10] sm:$0xf]
      %v777 = vld [vmem:[%s771 + $0x14] sm:$0xf]
      %v778 = vld [vmem:[%s771 + $0x18] sm:$0xf]
      %v779 = vld [vmem:[%s771 + $0x1c] sm:$0xf]
      %v780 = vld [vmem:[%s771 + $0x20] sm:$0xf]
      %v781 = vld [vmem:[%s771 + $0x24] sm:$0xf]
      %v782 = vld [vmem:[%s771 + $0x28] sm:$0xf]
      %v783 = vld [vmem:[%s771 + $0x2c] sm:$0xf]
      %v784 = vld [vmem:[%s771 + $0x30] sm:$0xf]
      %v785 = vld [vmem:[%s771 + $0x34] sm:$0xf]
      %v786 = vld [vmem:[%s771 + $0x38] sm:$0xf]
      %v787 = vld [vmem:[%s771 + $0x3c] sm:$0xf]
      %v796 = vunpack.c.l.b16 %v763
      %v797 = vunpack.c.l.b16 %v764
      %v798 = vunpack.c.l.b16 %v765
      %v799 = vunpack.c.l.b16 %v766
      %v800 = vunpack.c.l.b16 %v767
      %v801 = vunpack.c.l.b16 %v768
      %v802 = vunpack.c.l.b16 %v769
      %v803 = vunpack.c.l.b16 %v770
      %v804 = vpack.c.b16 %v797, %v796
      %v805 = vpack.c.b16 %v799, %v798
      %v806 = vpack.c.b16 %v801, %v800
      %v807 = vpack.c.b16 %v803, %v802
      %v828 = vunpack.c.l.b16 %v772
      %v829 = vunpack.c.l.b16 %v773
      %v830 = vunpack.c.l.b16 %v774
      %v831 = vunpack.c.l.b16 %v775
      %v832 = vunpack.c.l.b16 %v776
      %v833 = vunpack.c.l.b16 %v777
      %v834 = vunpack.c.l.b16 %v778
      %v835 = vunpack.c.l.b16 %v779
      %v836 = vunpack.c.l.b16 %v780
      %v837 = vunpack.c.l.b16 %v781
      %v838 = vunpack.c.l.b16 %v782
      %v839 = vunpack.c.l.b16 %v783
      %v840 = vunpack.c.l.b16 %v784
      %v841 = vunpack.c.l.b16 %v785
      %v842 = vunpack.c.l.b16 %v786
      %v843 = vunpack.c.l.b16 %v787
      %v844 = vpack.c.b16 %v829, %v828
      %v845 = vpack.c.b16 %v831, %v830
      %v846 = vpack.c.b16 %v833, %v832
      %v847 = vpack.c.b16 %v835, %v834
      %v848 = vpack.c.b16 %v837, %v836
      %v849 = vpack.c.b16 %v839, %v838
      %v850 = vpack.c.b16 %v841, %v840
      %v851 = vpack.c.b16 %v843, %v842
      %860 = vmatpush.bf16.msra.mxu0 %v851
      %861 = vmatpush.bf16.msra.mxu0 %v850
      %862 = vmatpush.bf16.msra.mxu0 %v849
      %863 = vmatpush.bf16.msra.mxu0 %v848
      %864 = vmatpush.bf16.msra.mxu0 %v847
      %865 = vmatpush.bf16.msra.mxu0 %v846
      %866 = vmatpush.bf16.msra.mxu0 %v845
      %867 = vmatpush.bf16.msra.mxu0 %v844
      %868 = vmatmul.bf16.gmra.mxu0 %v804
      %v869 = vpop.f32.mrf.mxu0
      %v870 = vadd.f32 0.0, %v869
      %v871 = vpop.f32.mrf.mxu0
      %v872 = vadd.f32 0.0, %v871
      %873 = vmatmul.bf16.gmra.mxu0 %v805
      %v874 = vpop.f32.mrf.mxu0
      %v875 = vadd.f32 0.0, %v874
      %v876 = vpop.f32.mrf.mxu0
      %v877 = vadd.f32 0.0, %v876
      %878 = vmatmul.bf16.gmra.mxu0 %v806
      %v879 = vpop.f32.mrf.mxu0
      %v880 = vadd.f32 0.0, %v879
      %v881 = vpop.f32.mrf.mxu0
      %v882 = vadd.f32 0.0, %v881
      %883 = vmatmul.bf16.gmra.mxu0 %v807
      %v884 = vpop.f32.mrf.mxu0
      %v885 = vadd.f32 0.0, %v884
      %v886 = vpop.f32.mrf.mxu0
      %v887 = vadd.f32 0.0, %v886
      %888 = vdwg.mxu0
      %v889 = vadd.f32 %v746, %v870
      %v890 = vadd.f32 %v747, %v872
      %v891 = vadd.f32 %v748, %v875
      %v892 = vadd.f32 %v749, %v877
      %v893 = vadd.f32 %v750, %v880
      %v894 = vadd.f32 %v751, %v882
      %v895 = vadd.f32 %v752, %v885
      %v896 = vadd.f32 %v753, %v887
      %v897 = vld [vmem:[%s754 + $0x8] sm:$0xff]
      %v898 = vld [vmem:[%s754 + $0x48] sm:$0xff]
      %v899 = vld [vmem:[%s754 + $0x88] sm:$0xff]
      %v900 = vld [vmem:[%s754 + $0xc8] sm:$0xff]
      %v901 = vld [vmem:[%s754 + $0x108] sm:$0xff]
      %v902 = vld [vmem:[%s754 + $0x148] sm:$0xff]
      %v903 = vld [vmem:[%s754 + $0x188] sm:$0xff]
      %v904 = vld [vmem:[%s754 + $0x1c8] sm:$0xff]
      %v905 = vpack.c.bf16 %v897, %v897
      %v906 = vpack.c.bf16 %v898, %v898
      %v907 = vpack.c.bf16 %v899, %v899
      %v908 = vpack.c.bf16 %v900, %v900
      %v909 = vpack.c.bf16 %v901, %v901
      %v910 = vpack.c.bf16 %v902, %v902
      %v911 = vpack.c.bf16 %v903, %v903
      %v912 = vpack.c.bf16 %v904, %v904
      %s913 = scalar_lea.vmem %s210, 256
      %v914 = vld [vmem:[%s913] sm:$0xf]
      %v915 = vld [vmem:[%s913 + $0x4] sm:$0xf]
      %v916 = vld [vmem:[%s913 + $0x8] sm:$0xf]
      %v917 = vld [vmem:[%s913 + $0xc] sm:$0xf]
      %v918 = vld [vmem:[%s913 + $0x10] sm:$0xf]
      %v919 = vld [vmem:[%s913 + $0x14] sm:$0xf]
      %v920 = vld [vmem:[%s913 + $0x18] sm:$0xf]
      %v921 = vld [vmem:[%s913 + $0x1c] sm:$0xf]
      %v922 = vld [vmem:[%s913 + $0x20] sm:$0xf]
      %v923 = vld [vmem:[%s913 + $0x24] sm:$0xf]
      %v924 = vld [vmem:[%s913 + $0x28] sm:$0xf]
      %v925 = vld [vmem:[%s913 + $0x2c] sm:$0xf]
      %v926 = vld [vmem:[%s913 + $0x30] sm:$0xf]
      %v927 = vld [vmem:[%s913 + $0x34] sm:$0xf]
      %v928 = vld [vmem:[%s913 + $0x38] sm:$0xf]
      %v929 = vld [vmem:[%s913 + $0x3c] sm:$0xf]
      %v938 = vunpack.c.l.b16 %v905
      %v939 = vunpack.c.l.b16 %v906
      %v940 = vunpack.c.l.b16 %v907
      %v941 = vunpack.c.l.b16 %v908
      %v942 = vunpack.c.l.b16 %v909
      %v943 = vunpack.c.l.b16 %v910
      %v944 = vunpack.c.l.b16 %v911
      %v945 = vunpack.c.l.b16 %v912
      %v946 = vpack.c.b16 %v939, %v938
      %v947 = vpack.c.b16 %v941, %v940
      %v948 = vpack.c.b16 %v943, %v942
      %v949 = vpack.c.b16 %v945, %v944
      %v970 = vunpack.c.l.b16 %v914
      %v971 = vunpack.c.l.b16 %v915
      %v972 = vunpack.c.l.b16 %v916
      %v973 = vunpack.c.l.b16 %v917
      %v974 = vunpack.c.l.b16 %v918
      %v975 = vunpack.c.l.b16 %v919
      %v976 = vunpack.c.l.b16 %v920
      %v977 = vunpack.c.l.b16 %v921
      %v978 = vunpack.c.l.b16 %v922
      %v979 = vunpack.c.l.b16 %v923
      %v980 = vunpack.c.l.b16 %v924
      %v981 = vunpack.c.l.b16 %v925
      %v982 = vunpack.c.l.b16 %v926
      %v983 = vunpack.c.l.b16 %v927
      %v984 = vunpack.c.l.b16 %v928
      %v985 = vunpack.c.l.b16 %v929
      %v986 = vpack.c.b16 %v971, %v970
      %v987 = vpack.c.b16 %v973, %v972
      %v988 = vpack.c.b16 %v975, %v974
      %v989 = vpack.c.b16 %v977, %v976
      %v990 = vpack.c.b16 %v979, %v978
      %v991 = vpack.c.b16 %v981, %v980
      %v992 = vpack.c.b16 %v983, %v982
      %v993 = vpack.c.b16 %v985, %v984
      %1002 = vmatpush.bf16.msra.mxu0 %v993
      %1003 = vmatpush.bf16.msra.mxu0 %v992
      %1004 = vmatpush.bf16.msra.mxu0 %v991
      %1005 = vmatpush.bf16.msra.mxu0 %v990
      %1006 = vmatpush.bf16.msra.mxu0 %v989
      %1007 = vmatpush.bf16.msra.mxu0 %v988
      %1008 = vmatpush.bf16.msra.mxu0 %v987
      %1009 = vmatpush.bf16.msra.mxu0 %v986
      %1010 = vmatmul.bf16.gmra.mxu0 %v946
      %v1011 = vpop.f32.mrf.mxu0
      %v1012 = vadd.f32 0.0, %v1011
      %v1013 = vpop.f32.mrf.mxu0
      %v1014 = vadd.f32 0.0, %v1013
      %1015 = vmatmul.bf16.gmra.mxu0 %v947
      %v1016 = vpop.f32.mrf.mxu0
      %v1017 = vadd.f32 0.0, %v1016
      %v1018 = vpop.f32.mrf.mxu0
      %v1019 = vadd.f32 0.0, %v1018
      %1020 = vmatmul.bf16.gmra.mxu0 %v948
      %v1021 = vpop.f32.mrf.mxu0
      %v1022 = vadd.f32 0.0, %v1021
      %v1023 = vpop.f32.mrf.mxu0
      %v1024 = vadd.f32 0.0, %v1023
      %1025 = vmatmul.bf16.gmra.mxu0 %v949
      %v1026 = vpop.f32.mrf.mxu0
      %v1027 = vadd.f32 0.0, %v1026
      %v1028 = vpop.f32.mrf.mxu0
      %v1029 = vadd.f32 0.0, %v1028
      %1030 = vdwg.mxu0
      %v1031 = vadd.f32 %v889, %v1012
      %v1032 = vadd.f32 %v890, %v1014
      %v1033 = vadd.f32 %v891, %v1017
      %v1034 = vadd.f32 %v892, %v1019
      %v1035 = vadd.f32 %v893, %v1022
      %v1036 = vadd.f32 %v894, %v1024
      %v1037 = vadd.f32 %v895, %v1027
      %v1038 = vadd.f32 %v896, %v1029
      %v1039 = vld [vmem:[%s754] sm:$0xfe]
      %v1040 = vld [vmem:[%s754 + $0x10] sm:$0x1]
      %v1041 = vld [vmem:[%s754 + $0x40] sm:$0xfe]
      %v1042 = vld [vmem:[%s754 + $0x50] sm:$0x1]
      %v1043 = vld [vmem:[%s754 + $0x80] sm:$0xfe]
      %v1044 = vld [vmem:[%s754 + $0x90] sm:$0x1]
      %v1045 = vld [vmem:[%s754 + $0xc0] sm:$0xfe]
      %v1046 = vld [vmem:[%s754 + $0xd0] sm:$0x1]
      %v1047 = vld [vmem:[%s754 + $0x100] sm:$0xfe]
      %v1048 = vld [vmem:[%s754 + $0x110] sm:$0x1]
      %v1049 = vld [vmem:[%s754 + $0x140] sm:$0xfe]
      %v1050 = vld [vmem:[%s754 + $0x150] sm:$0x1]
      %v1051 = vld [vmem:[%s754 + $0x180] sm:$0xfe]
      %v1052 = vld [vmem:[%s754 + $0x190] sm:$0x1]
      %v1053 = vld [vmem:[%s754 + $0x1c0] sm:$0xfe]
      %v1054 = vld [vmem:[%s754 + $0x1d0] sm:$0x1]
      %v1055 = vpack.c.bf16 %v1039, %v1039
      %v1056 = vpack.c.bf16 %v1040, %v1040
      %v1057 = vpack.c.bf16 %v1041, %v1041
      %v1058 = vpack.c.bf16 %v1042, %v1042
      %v1059 = vpack.c.bf16 %v1043, %v1043
      %v1060 = vpack.c.bf16 %v1044, %v1044
      %v1061 = vpack.c.bf16 %v1045, %v1045
      %v1062 = vpack.c.bf16 %v1046, %v1046
      %v1063 = vpack.c.bf16 %v1047, %v1047
      %v1064 = vpack.c.bf16 %v1048, %v1048
      %v1065 = vpack.c.bf16 %v1049, %v1049
      %v1066 = vpack.c.bf16 %v1050, %v1050
      %v1067 = vpack.c.bf16 %v1051, %v1051
      %v1068 = vpack.c.bf16 %v1052, %v1052
      %v1069 = vpack.c.bf16 %v1053, %v1053
      %v1070 = vpack.c.bf16 %v1054, %v1054
      %v1072 = vshrl.u32 %v1055, 16
      %v1074 = vrot.slane %v1072, 4
      %v1075 = vshll.u32 %v1055, 16
      %v1077 = vrot.slane %v1075, 5
      %v1078 = vor.u32 %v1074, %v1077
      %v1079 = vrot.slane %v1078, 4
      %v1081 = vshll.u32 %v1056, 16
      %v1083 = vrot.slane %v1081, 5
      %v1084 = vsel %vm523, %v1079, %v1083
      %v1086 = vshrl.u32 %v1057, 16
      %v1088 = vrot.slane %v1086, 4
      %v1089 = vshll.u32 %v1057, 16
      %v1091 = vrot.slane %v1089, 5
      %v1092 = vor.u32 %v1088, %v1091
      %v1093 = vrot.slane %v1092, 4
      %v1095 = vshll.u32 %v1058, 16
      %v1097 = vrot.slane %v1095, 5
      %v1098 = vsel %vm523, %v1093, %v1097
      %v1100 = vshrl.u32 %v1059, 16
      %v1102 = vrot.slane %v1100, 4
      %v1103 = vshll.u32 %v1059, 16
      %v1105 = vrot.slane %v1103, 5
      %v1106 = vor.u32 %v1102, %v1105
      %v1107 = vrot.slane %v1106, 4
      %v1109 = vshll.u32 %v1060, 16
      %v1111 = vrot.slane %v1109, 5
      %v1112 = vsel %vm523, %v1107, %v1111
      %v1114 = vshrl.u32 %v1061, 16
      %v1116 = vrot.slane %v1114, 4
      %v1117 = vshll.u32 %v1061, 16
      %v1119 = vrot.slane %v1117, 5
      %v1120 = vor.u32 %v1116, %v1119
      %v1121 = vrot.slane %v1120, 4
      %v1123 = vshll.u32 %v1062, 16
      %v1125 = vrot.slane %v1123, 5
      %v1126 = vsel %vm523, %v1121, %v1125
      %v1128 = vshrl.u32 %v1063, 16
      %v1130 = vrot.slane %v1128, 4
      %v1131 = vshll.u32 %v1063, 16
      %v1133 = vrot.slane %v1131, 5
      %v1134 = vor.u32 %v1130, %v1133
      %v1135 = vrot.slane %v1134, 4
      %v1137 = vshll.u32 %v1064, 16
      %v1139 = vrot.slane %v1137, 5
      %v1140 = vsel %vm523, %v1135, %v1139
      %v1142 = vshrl.u32 %v1065, 16
      %v1144 = vrot.slane %v1142, 4
      %v1145 = vshll.u32 %v1065, 16
      %v1147 = vrot.slane %v1145, 5
      %v1148 = vor.u32 %v1144, %v1147
      %v1149 = vrot.slane %v1148, 4
      %v1151 = vshll.u32 %v1066, 16
      %v1153 = vrot.slane %v1151, 5
      %v1154 = vsel %vm523, %v1149, %v1153
      %v1156 = vshrl.u32 %v1067, 16
      %v1158 = vrot.slane %v1156, 4
      %v1159 = vshll.u32 %v1067, 16
      %v1161 = vrot.slane %v1159, 5
      %v1162 = vor.u32 %v1158, %v1161
      %v1163 = vrot.slane %v1162, 4
      %v1165 = vshll.u32 %v1068, 16
      %v1167 = vrot.slane %v1165, 5
      %v1168 = vsel %vm523, %v1163, %v1167
      %v1170 = vshrl.u32 %v1069, 16
      %v1172 = vrot.slane %v1170, 4
      %v1173 = vshll.u32 %v1069, 16
      %v1175 = vrot.slane %v1173, 5
      %v1176 = vor.u32 %v1172, %v1175
      %v1177 = vrot.slane %v1176, 4
      %v1179 = vshll.u32 %v1070, 16
      %v1181 = vrot.slane %v1179, 5
      %v1182 = vsel %vm523, %v1177, %v1181
      %s1183 = scalar_lea.vmem %s210, 320
      %v1184 = vld [vmem:[%s1183] sm:$0xf]
      %v1185 = vld [vmem:[%s1183 + $0x4] sm:$0xf]
      %v1186 = vld [vmem:[%s1183 + $0x8] sm:$0xf]
      %v1187 = vld [vmem:[%s1183 + $0xc] sm:$0xf]
      %v1188 = vld [vmem:[%s1183 + $0x10] sm:$0xf]
      %v1189 = vld [vmem:[%s1183 + $0x14] sm:$0xf]
      %v1190 = vld [vmem:[%s1183 + $0x18] sm:$0xf]
      %v1191 = vld [vmem:[%s1183 + $0x1c] sm:$0xf]
      %v1192 = vld [vmem:[%s1183 + $0x20] sm:$0xf]
      %v1193 = vld [vmem:[%s1183 + $0x24] sm:$0xf]
      %v1194 = vld [vmem:[%s1183 + $0x28] sm:$0xf]
      %v1195 = vld [vmem:[%s1183 + $0x2c] sm:$0xf]
      %v1196 = vld [vmem:[%s1183 + $0x30] sm:$0xf]
      %v1197 = vld [vmem:[%s1183 + $0x34] sm:$0xf]
      %v1198 = vld [vmem:[%s1183 + $0x38] sm:$0xf]
      %v1199 = vld [vmem:[%s1183 + $0x3c] sm:$0xf]
      %v1200 = vunpack.c.l.b16 %v1084
      %v1201 = vunpack.c.l.b16 %v1098
      %v1202 = vunpack.c.l.b16 %v1112
      %v1203 = vunpack.c.l.b16 %v1126
      %v1204 = vunpack.c.l.b16 %v1140
      %v1205 = vunpack.c.l.b16 %v1154
      %v1206 = vunpack.c.l.b16 %v1168
      %v1207 = vunpack.c.l.b16 %v1182
      %v1208 = vpack.c.b16 %v1201, %v1200
      %v1209 = vpack.c.b16 %v1203, %v1202
      %v1210 = vpack.c.b16 %v1205, %v1204
      %v1211 = vpack.c.b16 %v1207, %v1206
      %v1232 = vunpack.c.l.b16 %v1184
      %v1233 = vunpack.c.l.b16 %v1185
      %v1234 = vunpack.c.l.b16 %v1186
      %v1235 = vunpack.c.l.b16 %v1187
      %v1236 = vunpack.c.l.b16 %v1188
      %v1237 = vunpack.c.l.b16 %v1189
      %v1238 = vunpack.c.l.b16 %v1190
      %v1239 = vunpack.c.l.b16 %v1191
      %v1240 = vunpack.c.l.b16 %v1192
      %v1241 = vunpack.c.l.b16 %v1193
      %v1242 = vunpack.c.l.b16 %v1194
      %v1243 = vunpack.c.l.b16 %v1195
      %v1244 = vunpack.c.l.b16 %v1196
      %v1245 = vunpack.c.l.b16 %v1197
      %v1246 = vunpack.c.l.b16 %v1198
      %v1247 = vunpack.c.l.b16 %v1199
      %v1248 = vpack.c.b16 %v1233, %v1232
      %v1249 = vpack.c.b16 %v1235, %v1234
      %v1250 = vpack.c.b16 %v1237, %v1236
      %v1251 = vpack.c.b16 %v1239, %v1238
      %v1252 = vpack.c.b16 %v1241, %v1240
      %v1253 = vpack.c.b16 %v1243, %v1242
      %v1254 = vpack.c.b16 %v1245, %v1244
      %v1255 = vpack.c.b16 %v1247, %v1246
      %1264 = vmatpush.bf16.msra.mxu0 %v1255
      %1265 = vmatpush.bf16.msra.mxu0 %v1254
      %1266 = vmatpush.bf16.msra.mxu0 %v1253
      %1267 = vmatpush.bf16.msra.mxu0 %v1252
      %1268 = vmatpush.bf16.msra.mxu0 %v1251
      %1269 = vmatpush.bf16.msra.mxu0 %v1250
      %1270 = vmatpush.bf16.msra.mxu0 %v1249
      %1271 = vmatpush.bf16.msra.mxu0 %v1248
      %1272 = vmatmul.bf16.gmra.mxu0 %v1208
      %v1273 = vpop.f32.mrf.mxu0
      %v1274 = vadd.f32 0.0, %v1273
      %v1275 = vpop.f32.mrf.mxu0
      %v1276 = vadd.f32 0.0, %v1275
      %1277 = vmatmul.bf16.gmra.mxu0 %v1209
      %v1278 = vpop.f32.mrf.mxu0
      %v1279 = vadd.f32 0.0, %v1278
      %v1280 = vpop.f32.mrf.mxu0
      %v1281 = vadd.f32 0.0, %v1280
      %1282 = vmatmul.bf16.gmra.mxu0 %v1210
      %v1283 = vpop.f32.mrf.mxu0
      %v1284 = vadd.f32 0.0, %v1283
      %v1285 = vpop.f32.mrf.mxu0
      %v1286 = vadd.f32 0.0, %v1285
      %1287 = vmatmul.bf16.gmra.mxu0 %v1211
      %v1288 = vpop.f32.mrf.mxu0
      %v1289 = vadd.f32 0.0, %v1288
      %v1290 = vpop.f32.mrf.mxu0
      %v1291 = vadd.f32 0.0, %v1290
      %1292 = vdwg.mxu0
      %v1293 = vadd.f32 %v1031, %v1274
      %v1294 = vadd.f32 %v1032, %v1276
      %v1295 = vadd.f32 %v1033, %v1279
      %v1296 = vadd.f32 %v1034, %v1281
      %v1297 = vadd.f32 %v1035, %v1284
      %v1298 = vadd.f32 %v1036, %v1286
      %v1299 = vadd.f32 %v1037, %v1289
      %v1300 = vadd.f32 %v1038, %v1291
      %s1301 = scalar_lea.vmem %s206, 64
      %v1302 = vld [vmem:[%s1301] sm:$0xff]
      %v1303 = vld [vmem:[%s1301 + $0x40] sm:$0xff]
      %v1304 = vld [vmem:[%s1301 + $0x80] sm:$0xff]
      %v1305 = vld [vmem:[%s1301 + $0xc0] sm:$0xff]
      %v1306 = vld [vmem:[%s1301 + $0x100] sm:$0xff]
      %v1307 = vld [vmem:[%s1301 + $0x140] sm:$0xff]
      %v1308 = vld [vmem:[%s1301 + $0x180] sm:$0xff]
      %v1309 = vld [vmem:[%s1301 + $0x1c0] sm:$0xff]
      %v1310 = vpack.c.bf16 %v1302, %v1302
      %v1311 = vpack.c.bf16 %v1303, %v1303
      %v1312 = vpack.c.bf16 %v1304, %v1304
      %v1313 = vpack.c.bf16 %v1305, %v1305
      %v1314 = vpack.c.bf16 %v1306, %v1306
      %v1315 = vpack.c.bf16 %v1307, %v1307
      %v1316 = vpack.c.bf16 %v1308, %v1308
      %v1317 = vpack.c.bf16 %v1309, %v1309
      %s1318 = scalar_lea.vmem %s210, 384
      %v1319 = vld [vmem:[%s1318] sm:$0xf]
      %v1320 = vld [vmem:[%s1318 + $0x4] sm:$0xf]
      %v1321 = vld [vmem:[%s1318 + $0x8] sm:$0xf]
      %v1322 = vld [vmem:[%s1318 + $0xc] sm:$0xf]
      %v1323 = vld [vmem:[%s1318 + $0x10] sm:$0xf]
      %v1324 = vld [vmem:[%s1318 + $0x14] sm:$0xf]
      %v1325 = vld [vmem:[%s1318 + $0x18] sm:$0xf]
      %v1326 = vld [vmem:[%s1318 + $0x1c] sm:$0xf]
      %v1327 = vld [vmem:[%s1318 + $0x20] sm:$0xf]
      %v1328 = vld [vmem:[%s1318 + $0x24] sm:$0xf]
      %v1329 = vld [vmem:[%s1318 + $0x28] sm:$0xf]
      %v1330 = vld [vmem:[%s1318 + $0x2c] sm:$0xf]
      %v1331 = vld [vmem:[%s1318 + $0x30] sm:$0xf]
      %v1332 = vld [vmem:[%s1318 + $0x34] sm:$0xf]
      %v1333 = vld [vmem:[%s1318 + $0x38] sm:$0xf]
      %v1334 = vld [vmem:[%s1318 + $0x3c] sm:$0xf]
      %v1343 = vunpack.c.l.b16 %v1310
      %v1344 = vunpack.c.l.b16 %v1311
      %v1345 = vunpack.c.l.b16 %v1312
      %v1346 = vunpack.c.l.b16 %v1313
      %v1347 = vunpack.c.l.b16 %v1314
      %v1348 = vunpack.c.l.b16 %v1315
      %v1349 = vunpack.c.l.b16 %v1316
      %v1350 = vunpack.c.l.b16 %v1317
      %v1351 = vpack.c.b16 %v1344, %v1343
      %v1352 = vpack.c.b16 %v1346, %v1345
      %v1353 = vpack.c.b16 %v1348, %v1347
      %v1354 = vpack.c.b16 %v1350, %v1349
      %v1375 = vunpack.c.l.b16 %v1319
      %v1376 = vunpack.c.l.b16 %v1320
      %v1377 = vunpack.c.l.b16 %v1321
      %v1378 = vunpack.c.l.b16 %v1322
      %v1379 = vunpack.c.l.b16 %v1323
      %v1380 = vunpack.c.l.b16 %v1324
      %v1381 = vunpack.c.l.b16 %v1325
      %v1382 = vunpack.c.l.b16 %v1326
      %v1383 = vunpack.c.l.b16 %v1327
      %v1384 = vunpack.c.l.b16 %v1328
      %v1385 = vunpack.c.l.b16 %v1329
      %v1386 = vunpack.c.l.b16 %v1330
      %v1387 = vunpack.c.l.b16 %v1331
      %v1388 = vunpack.c.l.b16 %v1332
      %v1389 = vunpack.c.l.b16 %v1333
      %v1390 = vunpack.c.l.b16 %v1334
      %v1391 = vpack.c.b16 %v1376, %v1375
      %v1392 = vpack.c.b16 %v1378, %v1377
      %v1393 = vpack.c.b16 %v1380, %v1379
      %v1394 = vpack.c.b16 %v1382, %v1381
      %v1395 = vpack.c.b16 %v1384, %v1383
      %v1396 = vpack.c.b16 %v1386, %v1385
      %v1397 = vpack.c.b16 %v1388, %v1387
      %v1398 = vpack.c.b16 %v1390, %v1389
      %1407 = vmatpush.bf16.msra.mxu0 %v1398
      %1408 = vmatpush.bf16.msra.mxu0 %v1397
      %1409 = vmatpush.bf16.msra.mxu0 %v1396
      %1410 = vmatpush.bf16.msra.mxu0 %v1395
      %1411 = vmatpush.bf16.msra.mxu0 %v1394
      %1412 = vmatpush.bf16.msra.mxu0 %v1393
      %1413 = vmatpush.bf16.msra.mxu0 %v1392
      %1414 = vmatpush.bf16.msra.mxu0 %v1391
      %1415 = vmatmul.bf16.gmra.mxu0 %v1351
      %v1416 = vpop.f32.mrf.mxu0
      %v1417 = vadd.f32 0.0, %v1416
      %v1418 = vpop.f32.mrf.mxu0
      %v1419 = vadd.f32 0.0, %v1418
      %1420 = vmatmul.bf16.gmra.mxu0 %v1352
      %v1421 = vpop.f32.mrf.mxu0
      %v1422 = vadd.f32 0.0, %v1421
      %v1423 = vpop.f32.mrf.mxu0
      %v1424 = vadd.f32 0.0, %v1423
      %1425 = vmatmul.bf16.gmra.mxu0 %v1353
      %v1426 = vpop.f32.mrf.mxu0
      %v1427 = vadd.f32 0.0, %v1426
      %v1428 = vpop.f32.mrf.mxu0
      %v1429 = vadd.f32 0.0, %v1428
      %1430 = vmatmul.bf16.gmra.mxu0 %v1354
      %v1431 = vpop.f32.mrf.mxu0
      %v1432 = vadd.f32 0.0, %v1431
      %v1433 = vpop.f32.mrf.mxu0
      %v1434 = vadd.f32 0.0, %v1433
      %1435 = vdwg.mxu0
      %v1436 = vadd.f32 %v1293, %v1417
      %v1437 = vadd.f32 %v1294, %v1419
      %v1438 = vadd.f32 %v1295, %v1422
      %v1439 = vadd.f32 %v1296, %v1424
      %v1440 = vadd.f32 %v1297, %v1427
      %v1441 = vadd.f32 %v1298, %v1429
      %v1442 = vadd.f32 %v1299, %v1432
      %v1443 = vadd.f32 %v1300, %v1434
      %v1444 = vld [vmem:[%s1301 + $0x8] sm:$0xff]
      %v1445 = vld [vmem:[%s1301 + $0x48] sm:$0xff]
      %v1446 = vld [vmem:[%s1301 + $0x88] sm:$0xff]
      %v1447 = vld [vmem:[%s1301 + $0xc8] sm:$0xff]
      %v1448 = vld [vmem:[%s1301 + $0x108] sm:$0xff]
      %v1449 = vld [vmem:[%s1301 + $0x148] sm:$0xff]
      %v1450 = vld [vmem:[%s1301 + $0x188] sm:$0xff]
      %v1451 = vld [vmem:[%s1301 + $0x1c8] sm:$0xff]
      %v1452 = vpack.c.bf16 %v1444, %v1444
      %v1453 = vpack.c.bf16 %v1445, %v1445
      %v1454 = vpack.c.bf16 %v1446, %v1446
      %v1455 = vpack.c.bf16 %v1447, %v1447
      %v1456 = vpack.c.bf16 %v1448, %v1448
      %v1457 = vpack.c.bf16 %v1449, %v1449
      %v1458 = vpack.c.bf16 %v1450, %v1450
      %v1459 = vpack.c.bf16 %v1451, %v1451
      %s1460 = scalar_lea.vmem %s210, 448
      %v1461 = vld [vmem:[%s1460] sm:$0xf]
      %v1462 = vld [vmem:[%s1460 + $0x4] sm:$0xf]
      %v1463 = vld [vmem:[%s1460 + $0x8] sm:$0xf]
      %v1464 = vld [vmem:[%s1460 + $0xc] sm:$0xf]
      %v1465 = vld [vmem:[%s1460 + $0x10] sm:$0xf]
      %v1466 = vld [vmem:[%s1460 + $0x14] sm:$0xf]
      %v1467 = vld [vmem:[%s1460 + $0x18] sm:$0xf]
      %v1468 = vld [vmem:[%s1460 + $0x1c] sm:$0xf]
      %v1469 = vld [vmem:[%s1460 + $0x20] sm:$0xf]
      %v1470 = vld [vmem:[%s1460 + $0x24] sm:$0xf]
      %v1471 = vld [vmem:[%s1460 + $0x28] sm:$0xf]
      %v1472 = vld [vmem:[%s1460 + $0x2c] sm:$0xf]
      %v1473 = vld [vmem:[%s1460 + $0x30] sm:$0xf]
      %v1474 = vld [vmem:[%s1460 + $0x34] sm:$0xf]
      %v1475 = vld [vmem:[%s1460 + $0x38] sm:$0xf]
      %v1476 = vld [vmem:[%s1460 + $0x3c] sm:$0xf]
      %v1485 = vunpack.c.l.b16 %v1452
      %v1486 = vunpack.c.l.b16 %v1453
      %v1487 = vunpack.c.l.b16 %v1454
      %v1488 = vunpack.c.l.b16 %v1455
      %v1489 = vunpack.c.l.b16 %v1456
      %v1490 = vunpack.c.l.b16 %v1457
      %v1491 = vunpack.c.l.b16 %v1458
      %v1492 = vunpack.c.l.b16 %v1459
      %v1493 = vpack.c.b16 %v1486, %v1485
      %v1494 = vpack.c.b16 %v1488, %v1487
      %v1495 = vpack.c.b16 %v1490, %v1489
      %v1496 = vpack.c.b16 %v1492, %v1491
      %v1517 = vunpack.c.l.b16 %v1461
      %v1518 = vunpack.c.l.b16 %v1462
      %v1519 = vunpack.c.l.b16 %v1463
      %v1520 = vunpack.c.l.b16 %v1464
      %v1521 = vunpack.c.l.b16 %v1465
      %v1522 = vunpack.c.l.b16 %v1466
      %v1523 = vunpack.c.l.b16 %v1467
      %v1524 = vunpack.c.l.b16 %v1468
      %v1525 = vunpack.c.l.b16 %v1469
      %v1526 = vunpack.c.l.b16 %v1470
      %v1527 = vunpack.c.l.b16 %v1471
      %v1528 = vunpack.c.l.b16 %v1472
      %v1529 = vunpack.c.l.b16 %v1473
      %v1530 = vunpack.c.l.b16 %v1474
      %v1531 = vunpack.c.l.b16 %v1475
      %v1532 = vunpack.c.l.b16 %v1476
      %v1533 = vpack.c.b16 %v1518, %v1517
      %v1534 = vpack.c.b16 %v1520, %v1519
      %v1535 = vpack.c.b16 %v1522, %v1521
      %v1536 = vpack.c.b16 %v1524, %v1523
      %v1537 = vpack.c.b16 %v1526, %v1525
      %v1538 = vpack.c.b16 %v1528, %v1527
      %v1539 = vpack.c.b16 %v1530, %v1529
      %v1540 = vpack.c.b16 %v1532, %v1531
      %1549 = vmatpush.bf16.msra.mxu0 %v1540
      %1550 = vmatpush.bf16.msra.mxu0 %v1539
      %1551 = vmatpush.bf16.msra.mxu0 %v1538
      %1552 = vmatpush.bf16.msra.mxu0 %v1537
      %1553 = vmatpush.bf16.msra.mxu0 %v1536
      %1554 = vmatpush.bf16.msra.mxu0 %v1535
      %1555 = vmatpush.bf16.msra.mxu0 %v1534
      %1556 = vmatpush.bf16.msra.mxu0 %v1533
      %1557 = vmatmul.bf16.gmra.mxu0 %v1493
      %v1558 = vpop.f32.mrf.mxu0
      %v1559 = vadd.f32 0.0, %v1558
      %v1560 = vpop.f32.mrf.mxu0
      %v1561 = vadd.f32 0.0, %v1560
      %1562 = vmatmul.bf16.gmra.mxu0 %v1494
      %v1563 = vpop.f32.mrf.mxu0
      %v1564 = vadd.f32 0.0, %v1563
      %v1565 = vpop.f32.mrf.mxu0
      %v1566 = vadd.f32 0.0, %v1565
      %1567 = vmatmul.bf16.gmra.mxu0 %v1495
      %v1568 = vpop.f32.mrf.mxu0
      %v1569 = vadd.f32 0.0, %v1568
      %v1570 = vpop.f32.mrf.mxu0
      %v1571 = vadd.f32 0.0, %v1570
      %1572 = vmatmul.bf16.gmra.mxu0 %v1496
      %v1573 = vpop.f32.mrf.mxu0
      %v1574 = vadd.f32 0.0, %v1573
      %v1575 = vpop.f32.mrf.mxu0
      %v1576 = vadd.f32 0.0, %v1575
      %1577 = vdwg.mxu0
      %v1578 = vadd.f32 %v1436, %v1559
      %v1579 = vadd.f32 %v1437, %v1561
      %v1580 = vadd.f32 %v1438, %v1564
      %v1581 = vadd.f32 %v1439, %v1566
      %v1582 = vadd.f32 %v1440, %v1569
      %v1583 = vadd.f32 %v1441, %v1571
      %v1584 = vadd.f32 %v1442, %v1574
      %v1585 = vadd.f32 %v1443, %v1576
      %v1586 = vld [vmem:[%s1301] sm:$0xfe]
      %v1587 = vld [vmem:[%s1301 + $0x10] sm:$0x1]
      %v1588 = vld [vmem:[%s1301 + $0x40] sm:$0xfe]
      %v1589 = vld [vmem:[%s1301 + $0x50] sm:$0x1]
      %v1590 = vld [vmem:[%s1301 + $0x80] sm:$0xfe]
      %v1591 = vld [vmem:[%s1301 + $0x90] sm:$0x1]
      %v1592 = vld [vmem:[%s1301 + $0xc0] sm:$0xfe]
      %v1593 = vld [vmem:[%s1301 + $0xd0] sm:$0x1]
      %v1594 = vld [vmem:[%s1301 + $0x100] sm:$0xfe]
      %v1595 = vld [vmem:[%s1301 + $0x110] sm:$0x1]
      %v1596 = vld [vmem:[%s1301 + $0x140] sm:$0xfe]
      %v1597 = vld [vmem:[%s1301 + $0x150] sm:$0x1]
      %v1598 = vld [vmem:[%s1301 + $0x180] sm:$0xfe]
      %v1599 = vld [vmem:[%s1301 + $0x190] sm:$0x1]
      %v1600 = vld [vmem:[%s1301 + $0x1c0] sm:$0xfe]
      %v1601 = vld [vmem:[%s1301 + $0x1d0] sm:$0x1]
      %v1602 = vpack.c.bf16 %v1586, %v1586
      %v1603 = vpack.c.bf16 %v1587, %v1587
      %v1604 = vpack.c.bf16 %v1588, %v1588
      %v1605 = vpack.c.bf16 %v1589, %v1589
      %v1606 = vpack.c.bf16 %v1590, %v1590
      %v1607 = vpack.c.bf16 %v1591, %v1591
      %v1608 = vpack.c.bf16 %v1592, %v1592
      %v1609 = vpack.c.bf16 %v1593, %v1593
      %v1610 = vpack.c.bf16 %v1594, %v1594
      %v1611 = vpack.c.bf16 %v1595, %v1595
      %v1612 = vpack.c.bf16 %v1596, %v1596
      %v1613 = vpack.c.bf16 %v1597, %v1597
      %v1614 = vpack.c.bf16 %v1598, %v1598
      %v1615 = vpack.c.bf16 %v1599, %v1599
      %v1616 = vpack.c.bf16 %v1600, %v1600
      %v1617 = vpack.c.bf16 %v1601, %v1601
      %v1619 = vshrl.u32 %v1602, 16
      %v1621 = vrot.slane %v1619, 4
      %v1622 = vshll.u32 %v1602, 16
      %v1624 = vrot.slane %v1622, 5
      %v1625 = vor.u32 %v1621, %v1624
      %v1626 = vrot.slane %v1625, 4
      %v1628 = vshll.u32 %v1603, 16
      %v1630 = vrot.slane %v1628, 5
      %v1631 = vsel %vm523, %v1626, %v1630
      %v1633 = vshrl.u32 %v1604, 16
      %v1635 = vrot.slane %v1633, 4
      %v1636 = vshll.u32 %v1604, 16
      %v1638 = vrot.slane %v1636, 5
      %v1639 = vor.u32 %v1635, %v1638
      %v1640 = vrot.slane %v1639, 4
      %v1642 = vshll.u32 %v1605, 16
      %v1644 = vrot.slane %v1642, 5
      %v1645 = vsel %vm523, %v1640, %v1644
      %v1647 = vshrl.u32 %v1606, 16
      %v1649 = vrot.slane %v1647, 4
      %v1650 = vshll.u32 %v1606, 16
      %v1652 = vrot.slane %v1650, 5
      %v1653 = vor.u32 %v1649, %v1652
      %v1654 = vrot.slane %v1653, 4
      %v1656 = vshll.u32 %v1607, 16
      %v1658 = vrot.slane %v1656, 5
      %v1659 = vsel %vm523, %v1654, %v1658
      %v1661 = vshrl.u32 %v1608, 16
      %v1663 = vrot.slane %v1661, 4
      %v1664 = vshll.u32 %v1608, 16
      %v1666 = vrot.slane %v1664, 5
      %v1667 = vor.u32 %v1663, %v1666
      %v1668 = vrot.slane %v1667, 4
      %v1670 = vshll.u32 %v1609, 16
      %v1672 = vrot.slane %v1670, 5
      %v1673 = vsel %vm523, %v1668, %v1672
      %v1675 = vshrl.u32 %v1610, 16
      %v1677 = vrot.slane %v1675, 4
      %v1678 = vshll.u32 %v1610, 16
      %v1680 = vrot.slane %v1678, 5
      %v1681 = vor.u32 %v1677, %v1680
      %v1682 = vrot.slane %v1681, 4
      %v1684 = vshll.u32 %v1611, 16
      %v1686 = vrot.slane %v1684, 5
      %v1687 = vsel %vm523, %v1682, %v1686
      %v1689 = vshrl.u32 %v1612, 16
      %v1691 = vrot.slane %v1689, 4
      %v1692 = vshll.u32 %v1612, 16
      %v1694 = vrot.slane %v1692, 5
      %v1695 = vor.u32 %v1691, %v1694
      %v1696 = vrot.slane %v1695, 4
      %v1698 = vshll.u32 %v1613, 16
      %v1700 = vrot.slane %v1698, 5
      %v1701 = vsel %vm523, %v1696, %v1700
      %v1703 = vshrl.u32 %v1614, 16
      %v1705 = vrot.slane %v1703, 4
      %v1706 = vshll.u32 %v1614, 16
      %v1708 = vrot.slane %v1706, 5
      %v1709 = vor.u32 %v1705, %v1708
      %v1710 = vrot.slane %v1709, 4
      %v1712 = vshll.u32 %v1615, 16
      %v1714 = vrot.slane %v1712, 5
      %v1715 = vsel %vm523, %v1710, %v1714
      %v1717 = vshrl.u32 %v1616, 16
      %v1719 = vrot.slane %v1717, 4
      %v1720 = vshll.u32 %v1616, 16
      %v1722 = vrot.slane %v1720, 5
      %v1723 = vor.u32 %v1719, %v1722
      %v1724 = vrot.slane %v1723, 4
      %v1726 = vshll.u32 %v1617, 16
      %v1728 = vrot.slane %v1726, 5
      %v1729 = vsel %vm523, %v1724, %v1728
      %s1730 = scalar_lea.vmem %s210, 512
      %v1731 = vld [vmem:[%s1730] sm:$0xf]
      %v1732 = vld [vmem:[%s1730 + $0x4] sm:$0xf]
      %v1733 = vld [vmem:[%s1730 + $0x8] sm:$0xf]
      %v1734 = vld [vmem:[%s1730 + $0xc] sm:$0xf]
      %v1735 = vld [vmem:[%s1730 + $0x10] sm:$0xf]
      %v1736 = vld [vmem:[%s1730 + $0x14] sm:$0xf]
      %v1737 = vld [vmem:[%s1730 + $0x18] sm:$0xf]
      %v1738 = vld [vmem:[%s1730 + $0x1c] sm:$0xf]
      %v1739 = vld [vmem:[%s1730 + $0x20] sm:$0xf]
      %v1740 = vld [vmem:[%s1730 + $0x24] sm:$0xf]
      %v1741 = vld [vmem:[%s1730 + $0x28] sm:$0xf]
      %v1742 = vld [vmem:[%s1730 + $0x2c] sm:$0xf]
      %v1743 = vld [vmem:[%s1730 + $0x30] sm:$0xf]
      %v1744 = vld [vmem:[%s1730 + $0x34] sm:$0xf]
      %v1745 = vld [vmem:[%s1730 + $0x38] sm:$0xf]
      %v1746 = vld [vmem:[%s1730 + $0x3c] sm:$0xf]
      %v1747 = vunpack.c.l.b16 %v1631
      %v1748 = vunpack.c.l.b16 %v1645
      %v1749 = vunpack.c.l.b16 %v1659
      %v1750 = vunpack.c.l.b16 %v1673
      %v1751 = vunpack.c.l.b16 %v1687
      %v1752 = vunpack.c.l.b16 %v1701
      %v1753 = vunpack.c.l.b16 %v1715
      %v1754 = vunpack.c.l.b16 %v1729
      %v1755 = vpack.c.b16 %v1748, %v1747
      %v1756 = vpack.c.b16 %v1750, %v1749
      %v1757 = vpack.c.b16 %v1752, %v1751
      %v1758 = vpack.c.b16 %v1754, %v1753
      %v1779 = vunpack.c.l.b16 %v1731
      %v1780 = vunpack.c.l.b16 %v1732
      %v1781 = vunpack.c.l.b16 %v1733
      %v1782 = vunpack.c.l.b16 %v1734
      %v1783 = vunpack.c.l.b16 %v1735
      %v1784 = vunpack.c.l.b16 %v1736
      %v1785 = vunpack.c.l.b16 %v1737
      %v1786 = vunpack.c.l.b16 %v1738
      %v1787 = vunpack.c.l.b16 %v1739
      %v1788 = vunpack.c.l.b16 %v1740
      %v1789 = vunpack.c.l.b16 %v1741
      %v1790 = vunpack.c.l.b16 %v1742
      %v1791 = vunpack.c.l.b16 %v1743
      %v1792 = vunpack.c.l.b16 %v1744
      %v1793 = vunpack.c.l.b16 %v1745
      %v1794 = vunpack.c.l.b16 %v1746
      %v1795 = vpack.c.b16 %v1780, %v1779
      %v1796 = vpack.c.b16 %v1782, %v1781
      %v1797 = vpack.c.b16 %v1784, %v1783
      %v1798 = vpack.c.b16 %v1786, %v1785
      %v1799 = vpack.c.b16 %v1788, %v1787
      %v1800 = vpack.c.b16 %v1790, %v1789
      %v1801 = vpack.c.b16 %v1792, %v1791
      %v1802 = vpack.c.b16 %v1794, %v1793
      %1811 = vmatpush.bf16.msra.mxu0 %v1802
      %1812 = vmatpush.bf16.msra.mxu0 %v1801
      %1813 = vmatpush.bf16.msra.mxu0 %v1800
      %1814 = vmatpush.bf16.msra.mxu0 %v1799
      %1815 = vmatpush.bf16.msra.mxu0 %v1798
      %1816 = vmatpush.bf16.msra.mxu0 %v1797
      %1817 = vmatpush.bf16.msra.mxu0 %v1796
      %1818 = vmatpush.bf16.msra.mxu0 %v1795
      %1819 = vmatmul.bf16.gmra.mxu0 %v1755
      %v1820 = vpop.f32.mrf.mxu0
      %v1821 = vadd.f32 0.0, %v1820
      %v1822 = vpop.f32.mrf.mxu0
      %v1823 = vadd.f32 0.0, %v1822
      %1824 = vmatmul.bf16.gmra.mxu0 %v1756
      %v1825 = vpop.f32.mrf.mxu0
      %v1826 = vadd.f32 0.0, %v1825
      %v1827 = vpop.f32.mrf.mxu0
      %v1828 = vadd.f32 0.0, %v1827
      %1829 = vmatmul.bf16.gmra.mxu0 %v1757
      %v1830 = vpop.f32.mrf.mxu0
      %v1831 = vadd.f32 0.0, %v1830
      %v1832 = vpop.f32.mrf.mxu0
      %v1833 = vadd.f32 0.0, %v1832
      %1834 = vmatmul.bf16.gmra.mxu0 %v1758
      %v1835 = vpop.f32.mrf.mxu0
      %v1836 = vadd.f32 0.0, %v1835
      %v1837 = vpop.f32.mrf.mxu0
      %v1838 = vadd.f32 0.0, %v1837
      %1839 = vdwg.mxu0
      %v1840 = vadd.f32 %v1578, %v1821
      %v1841 = vadd.f32 %v1579, %v1823
      %v1842 = vadd.f32 %v1580, %v1826
      %v1843 = vadd.f32 %v1581, %v1828
      %v1844 = vadd.f32 %v1582, %v1831
      %v1845 = vadd.f32 %v1583, %v1833
      %v1846 = vadd.f32 %v1584, %v1836
      %v1847 = vadd.f32 %v1585, %v1838
      %v1848 = vld [vmem:[%s213] sm:$0x1]
      %v1850 = vperm.slane %v1848, 0
      %v1852 = vadd.f32 %v1840, %v1850
      %v1853 = vadd.f32 %v1841, %v1850
      %v1854 = vadd.f32 %v1842, %v1850
      %v1855 = vadd.f32 %v1843, %v1850
      %v1856 = vadd.f32 %v1844, %v1850
      %v1857 = vadd.f32 %v1845, %v1850
      %v1858 = vadd.f32 %v1846, %v1850
      %v1859 = vadd.f32 %v1847, %v1850
      %1860 = vst [vmem:[%s221] sm:$0xff] %v1852
      %1861 = vst [vmem:[%s221 + $0x8] sm:$0xff] %v1853
      %1862 = vst [vmem:[%s221 + $0x10] sm:$0xff] %v1854
      %1863 = vst [vmem:[%s221 + $0x18] sm:$0xff] %v1855
      %1864 = vst [vmem:[%s221 + $0x20] sm:$0xff] %v1856
      %1865 = vst [vmem:[%s221 + $0x28] sm:$0xff] %v1857
      %1866 = vst [vmem:[%s221 + $0x30] sm:$0xff] %v1858
      %1867 = vst [vmem:[%s221 + $0x38] sm:$0xff] %v1859
      %p1868 = scmp.lt.s32.totalorder %s18, 1
      %s1869 = scalar_select %p1868, %s18, 1
      %p1870 = scmp.lt.s32.totalorder %s19, 0
      %s1871 = scalar_select %p1870, %s19, 0
      %s1872 = smul.addr %s1869, 8
      %s1873 = sadd.s32 %s1871, %s1872
      %s1874 = smul.addr %s1873, 8
      %s1875 = scalar_lea.vmem %s3, %s1874
      // Predicated region
      $region33: #{unet_down_block_forward.3} parent=31 // pred_check
        %p1876 = pneg %p124
      $region34: #{unet_down_block_forward.3} parent=31 // pred_check_branch
        %1878 = sbr.rel (%p1876) target = $region36
      $region35: #{unet_down_block_forward.3} parent=31 // pred_region
        _
      $region36: #{unet_down_block_forward.3} parent=31 // pred_fallthru
        _
    $region32: #{unet_down_block_forward.3} parent=5 // pred_fallthru
      _
    %p1879 = scmp.le.s32.totalorder 2, %s9
    // Predicated region
    $region37: #{unet_down_block_forward.3} parent=5 // pred_check
      %p1880 = pneg %p1879
    $region38: #{unet_down_block_forward.3} parent=5 // pred_check_branch
      %1882 = sbr.rel (%p1880) target = $region40
    $region39: #{unet_down_block_forward.3} parent=5 // pred_region
      %s1883 = ssub.s32 %s9, 2
      // Predicated region
      $region41: #{unet_down_block_forward.3} parent=39 // pred_check
        %p1884 = pneg %p130
      $region42: #{unet_down_block_forward.3} parent=39 // pred_check_branch
        %1886 = sbr.rel (%p1884) target = $region44
      $region43: #{unet_down_block_forward.3} parent=39 // pred_region
        %p1887 = scmp.lt.s32.totalorder %s20, 1
        %s1888 = scalar_select %p1887, %s20, 1
        %p1889 = scmp.lt.s32.totalorder %s21, 0
        %s1890 = scalar_select %p1889, %s21, 0
        %s1891 = smul.addr %s1888, 8
        %s1892 = sadd.s32 %s1890, %s1891
        %s1893 = smul.addr %s1892, 8
        %s1894 = scalar_lea.vmem %s3, %s1893
      $region44: #{unet_down_block_forward.3} parent=39 // pred_fallthru
        _
    $region40: #{unet_down_block_forward.3} parent=5 // pred_fallthru
      _
  $region6: #{unet_down_block_forward.3} parent=0 // loop_footer
    %s13 = sadd.s32 1, %s9
  $region7: #{unet_down_block_forward.3} parent=0 // loop_footer_branch
    %8 = sbr.rel target = $region3
  $region8: #{unet_down_block_forward.3} parent=0 // loop_exit
    _

</llo_original>
